<compile_context>
chip_gen: v5e
topology: v5e:2x2
jax: 0.10.0
libtpu: 0.0.40
codegen_flags: <defaults>
</compile_context>

<pallas_src>
import functools
import math

import jax
import jax.numpy as jnp
from jax.experimental import pallas as pl
from jax.experimental.pallas import tpu as pltpu


def _mhsa_kernel(x_ref, wqkv_ref, bqkv_ref, wo_ref, bo_ref, o_ref, *, heads):
    # x_ref block: (Bt, N, D); wqkv: (D, 3D) bf16; bqkv: (1, 3D) f32;
    # wo: (D, D) bf16; bo: (1, D) f32.
    bt, n, d = x_ref.shape
    hd = d // heads
    bf16 = jnp.bfloat16

    # Fused QKV projection: one wide MXU pass, bf16 inputs, f32 accumulation.
    # The 1/sqrt(head_dim) softmax scale is pre-folded into the Q columns.
    x = x_ref[...].reshape(bt * n, d).astype(bf16)
    qkv = jnp.dot(x, wqkv_ref[...], preferred_element_type=jnp.float32)
    qkv = qkv + bqkv_ref[...]                                   # (Bt*N, 3D) f32

    def split_heads(t):  # (Bt*N, D) f32 -> (Bt*H, N, hd) bf16
        t = t.reshape(bt, n, heads, hd).transpose(0, 2, 1, 3)
        return t.reshape(bt * heads, n, hd).astype(bf16)

    q = split_heads(qkv[:, :d])
    k = split_heads(qkv[:, d:2 * d])
    v = split_heads(qkv[:, 2 * d:])

    # Batched scaled-dot-product attention over all (batch, head) pairs.
    s = jnp.einsum('bqd,bkd->bqk', q, k,
                   preferred_element_type=jnp.float32)          # (Bt*H, N, N) f32
    s = s - jnp.max(s, axis=-1, keepdims=True)                  # stable softmax
    e = jnp.exp(s)
    p = e / jnp.sum(e, axis=-1, keepdims=True)                  # exact normalization

    ctx = jnp.einsum('bqk,bkd->bqd', p.astype(bf16), v,
                     preferred_element_type=jnp.float32)        # (Bt*H, N, hd)
    ctx = (ctx.reshape(bt, heads, n, hd).transpose(0, 2, 1, 3)  # == permute+view
              .reshape(bt * n, d).astype(bf16))

    # TODO(synk): nn.Dropout(0.15) is identity in eval mode; training-mode
    # dropout mask is not implemented.

    out = jnp.dot(ctx, wo_ref[...], preferred_element_type=jnp.float32)
    out = out + bo_ref[...]
    o_ref[...] = out.reshape(bt, n, d).astype(o_ref.dtype)


def prepare_mhsa_params(wq, bq, wk, bk, wv, bv, wo, bo, *, heads):
    """One-time weight prep: transpose, fuse QKV, fold softmax scale, cast bf16."""
    d = wq.shape[0]
    head_dim = d // heads
    scale = 1.0 / math.sqrt(head_dim)
    wqkv = jnp.concatenate([wq.T * scale, wk.T, wv.T], axis=1).astype(jnp.bfloat16)
    bqkv = jnp.concatenate([bq * scale, bk, bv]).reshape(1, 3 * d).astype(jnp.float32)
    wo_t = wo.T.astype(jnp.bfloat16)
    bo_r = bo.reshape(1, d).astype(jnp.float32)
    return wqkv, bqkv, wo_t, bo_r


def manual_mhsa(x, params, *, heads):
    """x: (B, N, D) f32; params: output of prepare_mhsa_params."""
    wqkv, bqkv, wo_t, bo_r = params
    B, N, D = x.shape
    assert D % heads == 0

    # Batch tile: aim for >=256 MXU rows per step, keep >=2 parallel grid
    # steps (v7x has 2 TensorCores), and tile B evenly.
    bt = max(1, min(B, -(-256 // N)))
    bt = min(bt, max(1, B // 2))
    while B % bt:
        bt -= 1

    # VMEM budget: pipelined x/out blocks at buffer count 2, weights once
    # (Buffered(1)), peak in-kernel temporaries.  Cap below v7x's 64 MiB.
    f32b, bf16b = 4, 2
    est = (2 * (bt * N * D * f32b)                 # x blocks (double-buffered)
           + 2 * (bt * N * D * f32b)               # out blocks (double-buffered)
           + (D * 3 * D + D * D) * bf16b           # resident bf16 weights
           + (3 * D + D) * f32b                    # resident f32 biases
           + (3 * bt * N * D) * (f32b + bf16b)     # qkv + bf16 head-split copies
           + 2 * (bt * heads * N * N) * f32b       # scores + probabilities
           + 2 * (bt * N * D) * f32b)              # context + projected output
    vmem_limit = int(min(48 * 2**20, max(32 * 2**20, int(1.3 * est))))

    kernel = functools.partial(_mhsa_kernel, heads=heads)
    io_spec = pl.BlockSpec((bt, N, D), lambda b: (b, 0, 0))

    def weight_spec(shape, resident):
        idx = lambda b: (0,) * len(shape)
        if resident:
            try:
                # Grid-invariant: fetched once, no double-buffer copy.
                return pl.BlockSpec(shape, idx, pipeline_mode=pl.Buffered(1))
            except Exception:
                pass
        return pl.BlockSpec(shape, idx)

    def run(resident):
        return pl.pallas_call(
            kernel,
            out_shape=jax.ShapeDtypeStruct((B, N, D), x.dtype),
            grid=(B // bt,),
            in_specs=[
                io_spec,                                   # x
                weight_spec((D, 3 * D), resident),         # fused QKV weight (bf16)
                weight_spec((1, 3 * D), resident),         # fused QKV bias (f32)
                weight_spec((D, D), resident),             # output weight (bf16)
                weight_spec((1, D), resident),             # output bias (f32)
            ],
            out_specs=io_spec,
            compiler_params=pltpu.CompilerParams(
                dimension_semantics=("parallel",),
                vmem_limit_bytes=vmem_limit),
        )(x, wqkv, bqkv, wo_t, bo_r)

    try:
        return run(True)
    except Exception:
        # pipeline_mode=pl.Buffered(1) not supported on this jax build:
        # fall back to default (double-buffered) weight specs — identical math.
        return run(False)


def _reference_mhsa(x, wq, bq, wk, bk, wv, bv, wo, bo, *, heads):
    """Pure-JAX mirror of the PyTorch forward (dropout = eval-mode identity).

    precision=HIGHEST so the reference itself is not degraded by TPU's default
    bf16-pass matmuls (that was the source of the previous test failure).
    """
    B, N, D = x.shape
    hd = D // heads
    hi = jax.lax.Precision.HIGHEST

    def lin(t, w, b):
        return jnp.einsum('bnd,od->bno', t, w, precision=hi) + b

    def split(t):  # (B, N, D) -> (B, H, N, hd)
        return t.reshape(B, N, heads, hd).transpose(0, 2, 1, 3)

    Q, K, V = split(lin(x, wq, bq)), split(lin(x, wk, bk)), split(lin(x, wv, bv))
    s = jnp.einsum('bhqd,bhkd->bhqk', Q, K, precision=hi) / math.sqrt(hd)
    p = jax.nn.softmax(s, axis=-1)
    ctx = jnp.einsum('bhqk,bhkd->bhqd', p, V, precision=hi)
    ctx = ctx.transpose(0, 2, 1, 3).reshape(B, N, D)
    return jnp.einsum('bnd,od->bno', ctx, wo, precision=hi) + bo


if __name__ == "__main__":
    # Small but lane-dense config: embed_dim=128 (multiple of 128 keeps vector
    # stores unmasked on all generations), heads=4 (head_dim=32), B=2, N=16.
    B, N, D, H = 2, 16, 128, 4

    key = jax.random.PRNGKey(0)
    keys = jax.random.split(key, 9)
    wstd = 1.0 / math.sqrt(D)

    x = jax.random.normal(keys[0], (B, N, D), dtype=jnp.float32)
    wq = jax.random.normal(keys[1], (D, D), dtype=jnp.float32) * wstd
    bq = jax.random.normal(keys[2], (D,), dtype=jnp.float32) * 0.01
    wk = jax.random.normal(keys[3], (D, D), dtype=jnp.float32) * wstd
    bk = jax.random.normal(keys[4], (D,), dtype=jnp.float32) * 0.01
    wv = jax.random.normal(keys[5], (D, D), dtype=jnp.float32) * wstd
    bv = jax.random.normal(keys[6], (D,), dtype=jnp.float32) * 0.01
    wo = jax.random.normal(keys[7], (D, D), dtype=jnp.float32) * wstd
    bo = jax.random.normal(keys[8], (D,), dtype=jnp.float32) * 0.01

    params = prepare_mhsa_params(wq, bq, wk, bk, wv, bv, wo, bo, heads=H)
    out = manual_mhsa(x, params, heads=H)
    out = jax.block_until_ready(out)

    ref = _reference_mhsa(x, wq, bq, wk, bk, wv, bv, wo, bo, heads=H)
    assert out.shape == (B, N, D)
    # The kernel intentionally feeds the MXU bf16 operands (f32 accumulation),
    # per the performance review; worst-case deviation from the exact-f32
    # reference is ~1e-2 on this unit-scale data, so 3e-2 gives ~2x margin.
    assert jnp.allclose(out, ref, atol=3e-2, rtol=3e-2), "mismatch vs reference"

    print("KERNEL_OK")
</pallas_src>

<mosaic_0001>
module attributes {stable_mosaic.version = 11 : i64} {
  func.func @_mhsa_kernel(%arg0: i32, %arg1: memref<1x16x128xf32, #tpu.memory_space<vmem>>, %arg2: memref<128x384xbf16, #tpu.memory_space<vmem>>, %arg3: memref<1x384xf32, #tpu.memory_space<vmem>>, %arg4: memref<128x128xbf16, #tpu.memory_space<vmem>>, %arg5: memref<1x128xf32, #tpu.memory_space<vmem>>, %arg6: memref<1x16x128xf32, #tpu.memory_space<vmem>>) attributes {dimension_semantics = [#tpu.dimension_semantics<parallel>], iteration_bounds = array<i64: 2>, scalar_prefetch = 0 : i64, scratch_operands = 0 : i64, tpu.core_type = #tpu.core_type<tc>, window_params = [{transform_indices = @transform_0, window_bounds = array<i64: 1, 16, 128>}, {pipeline_mode = #tpu.pipeline_mode<synchronous>, transform_indices = @transform_1, window_bounds = array<i64: 128, 384>}, {pipeline_mode = #tpu.pipeline_mode<synchronous>, transform_indices = @transform_2, window_bounds = array<i64: 1, 384>}, {pipeline_mode = #tpu.pipeline_mode<synchronous>, transform_indices = @transform_3, window_bounds = array<i64: 128, 128>}, {pipeline_mode = #tpu.pipeline_mode<synchronous>, transform_indices = @transform_4, window_bounds = array<i64: 1, 128>}, {transform_indices = @transform_5, window_bounds = array<i64: 1, 16, 128>}]} {
    %c0 = arith.constant 0 : index
    %c0_0 = arith.constant 0 : index
    %c0_1 = arith.constant 0 : index
    %0 = vector.load %arg1[%c0, %c0_0, %c0_1] : memref<1x16x128xf32, #tpu.memory_space<vmem>>, vector<1x16x128xf32>
    %1 = vector.shape_cast %0 : vector<1x16x128xf32> to vector<16x128xf32>
    %2 = arith.truncf %1 : vector<16x128xf32> to vector<16x128xbf16>
    %c0_2 = arith.constant 0 : index
    %c0_3 = arith.constant 0 : index
    %3 = vector.load %arg2[%c0_2, %c0_3] : memref<128x384xbf16, #tpu.memory_space<vmem>>, vector<128x384xbf16>
    %cst = arith.constant dense<0.000000e+00> : vector<16x384xf32>
    %4 = tpu.matmul %2, %3, %cst {dimension_numbers = #tpu.dot_dimension_numbers<[1], [0], [0], [1], [0, 0, 1, 1], [], []>} : vector<16x128xbf16>, vector<128x384xbf16>, vector<16x384xf32> -> vector<16x384xf32>
    %c0_4 = arith.constant 0 : index
    %c0_5 = arith.constant 0 : index
    %5 = vector.load %arg3[%c0_4, %c0_5] : memref<1x384xf32, #tpu.memory_space<vmem>>, vector<1x384xf32>
    %6 = vector.broadcast %5 : vector<1x384xf32> to vector<16x384xf32>
    %7 = arith.addf %4, %6 : vector<16x384xf32>
    %8 = vector.extract_strided_slice %7 {offsets = [0, 0], sizes = [16, 128], strides = [1, 1]} : vector<16x384xf32> to vector<16x128xf32>
    %9 = vector.shape_cast %8 : vector<16x128xf32> to vector<1x16x4x32xf32>
    %10 = tpu.transpose %9, [0, 2, 1, 3] : vector<1x16x4x32xf32> -> vector<1x4x16x32xf32>
    %11 = vector.shape_cast %10 : vector<1x4x16x32xf32> to vector<4x16x32xf32>
    %12 = arith.truncf %11 : vector<4x16x32xf32> to vector<4x16x32xbf16>
    %13 = vector.extract_strided_slice %7 {offsets = [0, 128], sizes = [16, 128], strides = [1, 1]} : vector<16x384xf32> to vector<16x128xf32>
    %14 = vector.shape_cast %13 : vector<16x128xf32> to vector<1x16x4x32xf32>
    %15 = tpu.transpose %14, [0, 2, 1, 3] : vector<1x16x4x32xf32> -> vector<1x4x16x32xf32>
    %16 = vector.shape_cast %15 : vector<1x4x16x32xf32> to vector<4x16x32xf32>
    %17 = arith.truncf %16 : vector<4x16x32xf32> to vector<4x16x32xbf16>
    %18 = vector.extract_strided_slice %7 {offsets = [0, 256], sizes = [16, 128], strides = [1, 1]} : vector<16x384xf32> to vector<16x128xf32>
    %19 = vector.shape_cast %18 : vector<16x128xf32> to vector<1x16x4x32xf32>
    %20 = tpu.transpose %19, [0, 2, 1, 3] : vector<1x16x4x32xf32> -> vector<1x4x16x32xf32>
    %21 = vector.shape_cast %20 : vector<1x4x16x32xf32> to vector<4x16x32xf32>
    %22 = arith.truncf %21 : vector<4x16x32xf32> to vector<4x16x32xbf16>
    "tpu.trace_start"() <{level = 10 : i32, message = "bqd,bkd->bqk"}> : () -> ()
    %cst_6 = arith.constant dense<0.000000e+00> : vector<4x16x16xf32>
    %23 = tpu.matmul %12, %17, %cst_6 {dimension_numbers = #tpu.dot_dimension_numbers<[2], [2], [1], [1], [0, 0, 0, 1, 1, 1], [0], [0]>} : vector<4x16x32xbf16>, vector<4x16x32xbf16>, vector<4x16x16xf32> -> vector<4x16x16xf32>
    "tpu.trace_stop"() : () -> ()
    %cst_7 = arith.constant dense<0xFF800000> : vector<4x16xf32>
    %24 = vector.multi_reduction <maximumf>, %23, %cst_7 [2] : vector<4x16x16xf32> to vector<4x16xf32>
    %25 = vector.shape_cast %24 : vector<4x16xf32> to vector<4x16x1xf32>
    %26 = vector.broadcast %25 : vector<4x16x1xf32> to vector<4x16x16xf32>
    %27 = arith.subf %23, %26 : vector<4x16x16xf32>
    %28 = math.exp %27 : vector<4x16x16xf32>
    %cst_8 = arith.constant dense<0.000000e+00> : vector<4x16xf32>
    %29 = vector.multi_reduction <add>, %28, %cst_8 [2] : vector<4x16x16xf32> to vector<4x16xf32>
    %30 = vector.shape_cast %29 : vector<4x16xf32> to vector<4x16x1xf32>
    %31 = vector.broadcast %30 : vector<4x16x1xf32> to vector<4x16x16xf32>
    %32 = arith.divf %28, %31 : vector<4x16x16xf32>
    %33 = arith.truncf %32 : vector<4x16x16xf32> to vector<4x16x16xbf16>
    "tpu.trace_start"() <{level = 10 : i32, message = "bqk,bkd->bqd"}> : () -> ()
    %cst_9 = arith.constant dense<0.000000e+00> : vector<4x16x32xf32>
    %34 = tpu.matmul %33, %22, %cst_9 {dimension_numbers = #tpu.dot_dimension_numbers<[2], [1], [1], [2], [0, 0, 0, 1, 1, 2], [0], [0]>} : vector<4x16x16xbf16>, vector<4x16x32xbf16>, vector<4x16x32xf32> -> vector<4x16x32xf32>
    "tpu.trace_stop"() : () -> ()
    %35 = vector.shape_cast %34 : vector<4x16x32xf32> to vector<1x4x16x32xf32>
    %36 = tpu.transpose %35, [0, 2, 1, 3] : vector<1x4x16x32xf32> -> vector<1x16x4x32xf32>
    %37 = vector.shape_cast %36 : vector<1x16x4x32xf32> to vector<16x128xf32>
    %38 = arith.truncf %37 : vector<16x128xf32> to vector<16x128xbf16>
    %c0_10 = arith.constant 0 : index
    %c0_11 = arith.constant 0 : index
    %39 = vector.load %arg4[%c0_10, %c0_11] : memref<128x128xbf16, #tpu.memory_space<vmem>>, vector<128x128xbf16>
    %cst_12 = arith.constant dense<0.000000e+00> : vector<16x128xf32>
    %40 = tpu.matmul %38, %39, %cst_12 {dimension_numbers = #tpu.dot_dimension_numbers<[1], [0], [0], [1], [0, 0, 1, 1], [], []>} : vector<16x128xbf16>, vector<128x128xbf16>, vector<16x128xf32> -> vector<16x128xf32>
    %c0_13 = arith.constant 0 : index
    %c0_14 = arith.constant 0 : index
    %41 = vector.load %arg5[%c0_13, %c0_14] : memref<1x128xf32, #tpu.memory_space<vmem>>, vector<1x128xf32>
    %42 = vector.broadcast %41 : vector<1x128xf32> to vector<16x128xf32>
    %43 = arith.addf %40, %42 : vector<16x128xf32>
    %44 = vector.shape_cast %43 : vector<16x128xf32> to vector<1x16x128xf32>
    %c0_15 = arith.constant 0 : index
    %c0_16 = arith.constant 0 : index
    %c0_17 = arith.constant 0 : index
    %45 = vector.load %arg6[%c0_15, %c0_16, %c0_17] : memref<1x16x128xf32, #tpu.memory_space<vmem>>, vector<1x16x128xf32>
    tpu.vector_store %arg6[%c0_15, %c0_16, %c0_17], %44 {strides = array<i32>} : memref<1x16x128xf32, #tpu.memory_space<vmem>>, vector<1x16x128xf32>,
    return
  }
  func.func @transform_0(%arg0: i32) -> (i32, i32, i32) {
    %c0_i32 = arith.constant 0 : i32
    %c0_i32_0 = arith.constant 0 : i32
    %c0_i32_1 = arith.constant 0 : i32
    return %arg0, %c0_i32, %c0_i32_0 : i32, i32, i32
  }
  func.func @transform_1(%arg0: i32) -> (i32, i32) {
    %c0_i32 = arith.constant 0 : i32
    %c0_i32_0 = arith.constant 0 : i32
    %c0_i32_1 = arith.constant 0 : i32
    return %c0_i32, %c0_i32_0 : i32, i32
  }
  func.func @transform_2(%arg0: i32) -> (i32, i32) {
    %c0_i32 = arith.constant 0 : i32
    %c0_i32_0 = arith.constant 0 : i32
    %c0_i32_1 = arith.constant 0 : i32
    return %c0_i32, %c0_i32_0 : i32, i32
  }
  func.func @transform_3(%arg0: i32) -> (i32, i32) {
    %c0_i32 = arith.constant 0 : i32
    %c0_i32_0 = arith.constant 0 : i32
    %c0_i32_1 = arith.constant 0 : i32
    return %c0_i32, %c0_i32_0 : i32, i32
  }
  func.func @transform_4(%arg0: i32) -> (i32, i32) {
    %c0_i32 = arith.constant 0 : i32
    %c0_i32_0 = arith.constant 0 : i32
    %c0_i32_1 = arith.constant 0 : i32
    return %c0_i32, %c0_i32_0 : i32, i32
  }
  func.func @transform_5(%arg0: i32) -> (i32, i32, i32) {
    %c0_i32 = arith.constant 0 : i32
    %c0_i32_0 = arith.constant 0 : i32
    %c0_i32_1 = arith.constant 0 : i32
    return %arg0, %c0_i32, %c0_i32_0 : i32, i32, i32
  }
}

module attributes {stable_mosaic.version = 11 : i64} {
  func.func @_mhsa_kernel(%arg0: i32, %arg1: memref<1x16x128xf32, #tpu.memory_space<vmem>>, %arg2: memref<128x384xbf16, #tpu.memory_space<vmem>>, %arg3: memref<1x384xf32, #tpu.memory_space<vmem>>, %arg4: memref<128x128xbf16, #tpu.memory_space<vmem>>, %arg5: memref<1x128xf32, #tpu.memory_space<vmem>>, %arg6: memref<1x16x128xf32, #tpu.memory_space<vmem>>) attributes {dimension_semantics = [#tpu.dimension_semantics<parallel>], iteration_bounds = array<i64: 2>, scalar_prefetch = 0 : i64, scratch_operands = 0 : i64, tpu.core_type = #tpu.core_type<tc>, window_params = [{transform_indices = @transform_0, window_bounds = array<i64: 1, 16, 128>}, {pipeline_mode = #tpu.pipeline_mode<synchronous>, transform_indices = @transform_1, window_bounds = array<i64: 128, 384>}, {pipeline_mode = #tpu.pipeline_mode<synchronous>, transform_indices = @transform_2, window_bounds = array<i64: 1, 384>}, {pipeline_mode = #tpu.pipeline_mode<synchronous>, transform_indices = @transform_3, window_bounds = array<i64: 128, 128>}, {pipeline_mode = #tpu.pipeline_mode<synchronous>, transform_indices = @transform_4, window_bounds = array<i64: 1, 128>}, {transform_indices = @transform_5, window_bounds = array<i64: 1, 16, 128>}]} {
    %c0 = arith.constant 0 : index
    %c0_0 = arith.constant 0 : index
    %c0_1 = arith.constant 0 : index
    %0 = vector.load %arg1[%c0, %c0_0, %c0_1] : memref<1x16x128xf32, #tpu.memory_space<vmem>>, vector<1x16x128xf32>
    %1 = vector.shape_cast %0 : vector<1x16x128xf32> to vector<16x128xf32>
    %2 = arith.truncf %1 : vector<16x128xf32> to vector<16x128xbf16>
    %c0_2 = arith.constant 0 : index
    %c0_3 = arith.constant 0 : index
    %3 = vector.load %arg2[%c0_2, %c0_3] : memref<128x384xbf16, #tpu.memory_space<vmem>>, vector<128x384xbf16>
    %cst = arith.constant dense<0.000000e+00> : vector<16x384xf32>
    %4 = tpu.matmul %2, %3, %cst {dimension_numbers = #tpu.dot_dimension_numbers<[1], [0], [0], [1], [0, 0, 1, 1], [], []>} : vector<16x128xbf16>, vector<128x384xbf16>, vector<16x384xf32> -> vector<16x384xf32>
    %c0_4 = arith.constant 0 : index
    %c0_5 = arith.constant 0 : index
    %5 = vector.load %arg3[%c0_4, %c0_5] : memref<1x384xf32, #tpu.memory_space<vmem>>, vector<1x384xf32>
    %6 = vector.broadcast %5 : vector<1x384xf32> to vector<16x384xf32>
    %7 = arith.addf %4, %6 : vector<16x384xf32>
    %8 = vector.extract_strided_slice %7 {offsets = [0, 0], sizes = [16, 128], strides = [1, 1]} : vector<16x384xf32> to vector<16x128xf32>
    %9 = vector.shape_cast %8 : vector<16x128xf32> to vector<1x16x4x32xf32>
    %10 = tpu.transpose %9, [0, 2, 1, 3] : vector<1x16x4x32xf32> -> vector<1x4x16x32xf32>
    %11 = vector.shape_cast %10 : vector<1x4x16x32xf32> to vector<4x16x32xf32>
    %12 = arith.truncf %11 : vector<4x16x32xf32> to vector<4x16x32xbf16>
    %13 = vector.extract_strided_slice %7 {offsets = [0, 128], sizes = [16, 128], strides = [1, 1]} : vector<16x384xf32> to vector<16x128xf32>
    %14 = vector.shape_cast %13 : vector<16x128xf32> to vector<1x16x4x32xf32>
    %15 = tpu.transpose %14, [0, 2, 1, 3] : vector<1x16x4x32xf32> -> vector<1x4x16x32xf32>
    %16 = vector.shape_cast %15 : vector<1x4x16x32xf32> to vector<4x16x32xf32>
    %17 = arith.truncf %16 : vector<4x16x32xf32> to vector<4x16x32xbf16>
    %18 = vector.extract_strided_slice %7 {offsets = [0, 256], sizes = [16, 128], strides = [1, 1]} : vector<16x384xf32> to vector<16x128xf32>
    %19 = vector.shape_cast %18 : vector<16x128xf32> to vector<1x16x4x32xf32>
    %20 = tpu.transpose %19, [0, 2, 1, 3] : vector<1x16x4x32xf32> -> vector<1x4x16x32xf32>
    %21 = vector.shape_cast %20 : vector<1x4x16x32xf32> to vector<4x16x32xf32>
    %22 = arith.truncf %21 : vector<4x16x32xf32> to vector<4x16x32xbf16>
    "tpu.trace_start"() <{level = 10 : i32, message = "bqd,bkd->bqk"}> : () -> ()
    %cst_6 = arith.constant dense<0.000000e+00> : vector<4x16x16xf32>
    %23 = tpu.matmul %12, %17, %cst_6 {dimension_numbers = #tpu.dot_dimension_numbers<[2], [2], [1], [1], [0, 0, 0, 1, 1, 1], [0], [0]>} : vector<4x16x32xbf16>, vector<4x16x32xbf16>, vector<4x16x16xf32> -> vector<4x16x16xf32>
    "tpu.trace_stop"() : () -> ()
    %cst_7 = arith.constant dense<0xFF800000> : vector<4x16xf32>
    %24 = vector.multi_reduction <maximumf>, %23, %cst_7 [2] : vector<4x16x16xf32> to vector<4x16xf32>
    %25 = vector.shape_cast %24 : vector<4x16xf32> to vector<4x16x1xf32>
    %26 = vector.broadcast %25 : vector<4x16x1xf32> to vector<4x16x16xf32>
    %27 = arith.subf %23, %26 : vector<4x16x16xf32>
    %28 = math.exp %27 : vector<4x16x16xf32>
    %cst_8 = arith.constant dense<0.000000e+00> : vector<4x16xf32>
    %29 = vector.multi_reduction <add>, %28, %cst_8 [2] : vector<4x16x16xf32> to vector<4x16xf32>
    %30 = vector.shape_cast %29 : vector<4x16xf32> to vector<4x16x1xf32>
    %31 = vector.broadcast %30 : vector<4x16x1xf32> to vector<4x16x16xf32>
    %32 = arith.divf %28, %31 : vector<4x16x16xf32>
    %33 = arith.truncf %32 : vector<4x16x16xf32> to vector<4x16x16xbf16>
    "tpu.trace_start"() <{level = 10 : i32, message = "bqk,bkd->bqd"}> : () -> ()
    %cst_9 = arith.constant dense<0.000000e+00> : vector<4x16x32xf32>
    %34 = tpu.matmul %33, %22, %cst_9 {dimension_numbers = #tpu.dot_dimension_numbers<[2], [1], [1], [2], [0, 0, 0, 1, 1, 2], [0], [0]>} : vector<4x16x16xbf16>, vector<4x16x32xbf16>, vector<4x16x32xf32> -> vector<4x16x32xf32>
    "tpu.trace_stop"() : () -> ()
    %35 = vector.shape_cast %34 : vector<4x16x32xf32> to vector<1x4x16x32xf32>
    %36 = tpu.transpose %35, [0, 2, 1, 3] : vector<1x4x16x32xf32> -> vector<1x16x4x32xf32>
    %37 = vector.shape_cast %36 : vector<1x16x4x32xf32> to vector<16x128xf32>
    %38 = arith.truncf %37 : vector<16x128xf32> to vector<16x128xbf16>
    %c0_10 = arith.constant 0 : index
    %c0_11 = arith.constant 0 : index
    %39 = vector.load %arg4[%c0_10, %c0_11] : memref<128x128xbf16, #tpu.memory_space<vmem>>, vector<128x128xbf16>
    %cst_12 = arith.constant dense<0.000000e+00> : vector<16x128xf32>
    %40 = tpu.matmul %38, %39, %cst_12 {dimension_numbers = #tpu.dot_dimension_numbers<[1], [0], [0], [1], [0, 0, 1, 1], [], []>} : vector<16x128xbf16>, vector<128x128xbf16>, vector<16x128xf32> -> vector<16x128xf32>
    %c0_13 = arith.constant 0 : index
    %c0_14 = arith.constant 0 : index
    %41 = vector.load %arg5[%c0_13, %c0_14] : memref<1x128xf32, #tpu.memory_space<vmem>>, vector<1x128xf32>
    %42 = vector.broadcast %41 : vector<1x128xf32> to vector<16x128xf32>
    %43 = arith.addf %40, %42 : vector<16x128xf32>
    %44 = vector.shape_cast %43 : vector<16x128xf32> to vector<1x16x128xf32>
    %c0_15 = arith.constant 0 : index
    %c0_16 = arith.constant 0 : index
    %c0_17 = arith.constant 0 : index
    %45 = vector.load %arg6[%c0_15, %c0_16, %c0_17] : memref<1x16x128xf32, #tpu.memory_space<vmem>>, vector<1x16x128xf32>
    tpu.vector_store %arg6[%c0_15, %c0_16, %c0_17], %44 {strides = array<i32>} : memref<1x16x128xf32, #tpu.memory_space<vmem>>, vector<1x16x128xf32>,
    return
  }
  func.func @transform_0(%arg0: i32) -> (i32, i32, i32) {
    %c0_i32 = arith.constant 0 : i32
    %c0_i32_0 = arith.constant 0 : i32
    %c0_i32_1 = arith.constant 0 : i32
    return %arg0, %c0_i32, %c0_i32_0 : i32, i32, i32
  }
  func.func @transform_1(%arg0: i32) -> (i32, i32) {
    %c0_i32 = arith.constant 0 : i32
    %c0_i32_0 = arith.constant 0 : i32
    %c0_i32_1 = arith.constant 0 : i32
    return %c0_i32, %c0_i32_0 : i32, i32
  }
  func.func @transform_2(%arg0: i32) -> (i32, i32) {
    %c0_i32 = arith.constant 0 : i32
    %c0_i32_0 = arith.constant 0 : i32
    %c0_i32_1 = arith.constant 0 : i32
    return %c0_i32, %c0_i32_0 : i32, i32
  }
  func.func @transform_3(%arg0: i32) -> (i32, i32) {
    %c0_i32 = arith.constant 0 : i32
    %c0_i32_0 = arith.constant 0 : i32
    %c0_i32_1 = arith.constant 0 : i32
    return %c0_i32, %c0_i32_0 : i32, i32
  }
  func.func @transform_4(%arg0: i32) -> (i32, i32) {
    %c0_i32 = arith.constant 0 : i32
    %c0_i32_0 = arith.constant 0 : i32
    %c0_i32_1 = arith.constant 0 : i32
    return %c0_i32, %c0_i32_0 : i32, i32
  }
  func.func @transform_5(%arg0: i32) -> (i32, i32, i32) {
    %c0_i32 = arith.constant 0 : i32
    %c0_i32_0 = arith.constant 0 : i32
    %c0_i32_1 = arith.constant 0 : i32
    return %arg0, %c0_i32, %c0_i32_0 : i32, i32, i32
  }
}

</mosaic_0001>

<llo_original>
// kernel: tpu_custom_call.1
$region0: #{tpu_custom_call.1}
  #allocation0 [shape = 'u32[]', space=smem, size = 0x4, offset = 0x4, fixed_abs, tag = 'smem constant byte address 0x4 - core index']
  #allocation1 [shape = 'u32[72,128]{1,0:T(1,128)}', space=vmem, size = 0x9000, scoped, tag = 'internal scratch']
  %s0 = inlined_call_operand.hbm [shape: f32[2,16,128], index: 0, kind: input, shape index: {}]
  %s1 = inlined_call_operand.hbm [shape: bf16[128,384], index: 1, kind: input, shape index: {}]
  %s2 = inlined_call_operand.hbm [shape: f32[1,384], index: 2, kind: input, shape index: {}]
  %s3 = inlined_call_operand.hbm [shape: bf16[128,128], index: 3, kind: input, shape index: {}]
  %s4 = inlined_call_operand.vmem [shape: f32[1,128], index: 4, kind: input, shape index: {}]
  %s5 = inlined_call_operand.hbm [shape: f32[2,16,128], index: 5, kind: output, shape index: {}]
  %s6 = sld [smem:[#allocation0]]
  $region69: #{tpu_custom_call.1} parent=0
    _
  %s8 = ssub.s32 1, %s6
  %s9 = scalar_select 0, %s8, %s6
  $region1: #{tpu_custom_call.1} parent=0
    #allocation2 [shape = 'u8[16384]{0}', space=vmem, size = 0x4000, scoped, tag = 'input window, operand 0']
    #allocation3 [shape = 's32[2]{0}', space=sflag, size = 0x8, scoped, tag = 'scoped memory for tpu_custom_call.1']
    #allocation4 [shape = 's32[2]{0}', space=sflag, size = 0x8, scoped, tag = 'scoped memory for tpu_custom_call.1']
    #allocation5 [shape = 'u8[98304]{0}', space=vmem, size = 0x18000, scoped, tag = 'input window, operand 1, single buffered']
    #allocation6 [shape = 's32[1]{0}', space=sflag, size = 0x4, scoped, tag = 'scoped memory for tpu_custom_call.1']
    #allocation7 [shape = 'u8[1536]{0}', space=vmem, size = 0x800, scoped, tag = 'input window, operand 2, single buffered']
    #allocation8 [shape = 'u8[32768]{0}', space=vmem, size = 0x8000, scoped, tag = 'input window, operand 3, single buffered']
    #allocation9 [shape = 's32[1]{0}', space=sflag, size = 0x4, scoped, tag = 'scoped memory for tpu_custom_call.1']
    #allocation10 [shape = 'u8[16384]{0}', space=vmem, size = 0x4000, scoped, tag = 'output window, operand 0']
    %10 = vsyncpa [#allocation3], 0
    %s11 = scalar_lea.sflag [#allocation3], 1
    %12 = vsyncpa %s11, 0
    %13 = vsyncpa [#allocation6], 0
    %14 = vsyncpa [#allocation9], 0
    %15 = vsyncpa [#allocation4], 0
    %s16 = scalar_lea.sflag [#allocation4], 1
    %17 = vsyncpa %s16, 0
    loop: start=0, step=1, limit=4
    $region2: #{tpu_custom_call.1} parent=1 // loop_pre_header
      _
    $region3: #{tpu_custom_call.1} parent=1 // loop_header
      %s19 = sphi 0, %s23
      %p20 = scmp.ge.s32.totalorder %s19, 4
      %s29 = sphi 0, %s31
      %s32 = sphi 0, %s29
      %s33 = sphi 0, %s32
      %s49 = sphi 0, %s33
      %s53 = sphi 0, %s53
      %s55 = sphi 0, %s53
      %s56 = sphi 0, %s55
      %s70 = sphi 0, %s56
      %s74 = sphi 0, %s74
      %s76 = sphi 0, %s74
      %s77 = sphi 0, %s76
      %s91 = sphi 0, %s77
      %s95 = sphi 0, %s95
      %s97 = sphi 0, %s95
      %s98 = sphi 0, %s97
      %s112 = sphi 0, %s98
      %s116 = sphi 0, %s116
      %s118 = sphi 0, %s116
      %s119 = sphi 0, %s118
      %s133 = sphi 0, %s119
      %s139 = sphi 0, %s141
      %s142 = sphi 0, %s139
      %s143 = sphi 0, %s142
      %s159 = sphi 0, %s143
    $region4: #{tpu_custom_call.1} parent=1 // loop_header_branch
      %22 = sbr.rel (%p20) target = $region8
    $region5: #{tpu_custom_call.1} parent=1 // loop_body
      %s24 = ssub.s32 %s19, 1
      %s25 = ssub.s32 %s19, 2
      %s26 = sadd.s32 %s19, 1
      %s27 = ssub.s32 %s19, %s26
      %p28 = scmp.eq.s32.totalorder %s27, 0
      %s30 = sadd.s32 %s29, 1
      %s31 = scalar_select %p28, %s29, %s30
      %p34 = pneg %p28
      %p35 = scmp.eq.s32.totalorder %s19, 1
      %p36 = por %p34, %p35
      %p37 = scmp.ne.s32.totalorder %s29, %s32
      %p38 = scmp.eq.s32.totalorder %s19, 0
      %p39 = por %p37, %p38
      %p40 = scmp.ne.s32.totalorder %s29, %s32
      %p41 = scmp.eq.s32.totalorder %s24, 1
      %p42 = por %p40, %p41
      %p43 = scmp.ne.s32.totalorder %s32, %s33
      %p44 = scmp.eq.s32.totalorder %s24, 0
      %p45 = por %p43, %p44
      %p46 = scmp.ne.s32.totalorder %s32, %s33
      %p47 = scmp.eq.s32.totalorder %s25, 1
      %p48 = por %p46, %p47
      %p50 = scmp.ne.s32.totalorder %s33, %s49
      %p51 = scmp.eq.s32.totalorder %s25, 0
      %p52 = por %p50, %p51
      %s54 = sadd.s32 %s53, 1
      %p57 = scmp.eq.s32.totalorder %s19, 1
      %p58 = scmp.ne.s32.totalorder %s53, %s55
      %p59 = scmp.eq.s32.totalorder %s19, 0
      %p60 = por %p58, %p59
      %p61 = scmp.ne.s32.totalorder %s53, %s55
      %p62 = scmp.eq.s32.totalorder %s24, 1
      %p63 = por %p61, %p62
      %p64 = scmp.ne.s32.totalorder %s55, %s56
      %p65 = scmp.eq.s32.totalorder %s24, 0
      %p66 = por %p64, %p65
      %p67 = scmp.ne.s32.totalorder %s55, %s56
      %p68 = scmp.eq.s32.totalorder %s25, 1
      %p69 = por %p67, %p68
      %p71 = scmp.ne.s32.totalorder %s56, %s70
      %p72 = scmp.eq.s32.totalorder %s25, 0
      %p73 = por %p71, %p72
      %s75 = sadd.s32 %s74, 1
      %p78 = scmp.eq.s32.totalorder %s19, 1
      %p79 = scmp.ne.s32.totalorder %s74, %s76
      %p80 = scmp.eq.s32.totalorder %s19, 0
      %p81 = por %p79, %p80
      %p82 = scmp.ne.s32.totalorder %s74, %s76
      %p83 = scmp.eq.s32.totalorder %s24, 1
      %p84 = por %p82, %p83
      %p85 = scmp.ne.s32.totalorder %s76, %s77
      %p86 = scmp.eq.s32.totalorder %s24, 0
      %p87 = por %p85, %p86
      %p88 = scmp.ne.s32.totalorder %s76, %s77
      %p89 = scmp.eq.s32.totalorder %s25, 1
      %p90 = por %p88, %p89
      %p92 = scmp.ne.s32.totalorder %s77, %s91
      %p93 = scmp.eq.s32.totalorder %s25, 0
      %p94 = por %p92, %p93
      %s96 = sadd.s32 %s95, 1
      %p99 = scmp.eq.s32.totalorder %s19, 1
      %p100 = scmp.ne.s32.totalorder %s95, %s97
      %p101 = scmp.eq.s32.totalorder %s19, 0
      %p102 = por %p100, %p101
      %p103 = scmp.ne.s32.totalorder %s95, %s97
      %p104 = scmp.eq.s32.totalorder %s24, 1
      %p105 = por %p103, %p104
      %p106 = scmp.ne.s32.totalorder %s97, %s98
      %p107 = scmp.eq.s32.totalorder %s24, 0
      %p108 = por %p106, %p107
      %p109 = scmp.ne.s32.totalorder %s97, %s98
      %p110 = scmp.eq.s32.totalorder %s25, 1
      %p111 = por %p109, %p110
      %p113 = scmp.ne.s32.totalorder %s98, %s112
      %p114 = scmp.eq.s32.totalorder %s25, 0
      %p115 = por %p113, %p114
      %s117 = sadd.s32 %s116, 1
      %p120 = scmp.eq.s32.totalorder %s19, 1
      %p121 = scmp.ne.s32.totalorder %s116, %s118
      %p122 = scmp.eq.s32.totalorder %s19, 0
      %p123 = por %p121, %p122
      %p124 = scmp.ne.s32.totalorder %s116, %s118
      %p125 = scmp.eq.s32.totalorder %s24, 1
      %p126 = por %p124, %p125
      %p127 = scmp.ne.s32.totalorder %s118, %s119
      %p128 = scmp.eq.s32.totalorder %s24, 0
      %p129 = por %p127, %p128
      %p130 = scmp.ne.s32.totalorder %s118, %s119
      %p131 = scmp.eq.s32.totalorder %s25, 1
      %p132 = por %p130, %p131
      %p134 = scmp.ne.s32.totalorder %s119, %s133
      %p135 = scmp.eq.s32.totalorder %s25, 0
      %p136 = por %p134, %p135
      %s137 = ssub.s32 %s19, %s26
      %p138 = scmp.eq.s32.totalorder %s137, 0
      %s140 = sadd.s32 %s139, 1
      %s141 = scalar_select %p138, %s139, %s140
      %p144 = pneg %p138
      %p145 = scmp.eq.s32.totalorder %s19, 1
      %p146 = por %p144, %p145
      %p147 = scmp.ne.s32.totalorder %s139, %s142
      %p148 = scmp.eq.s32.totalorder %s19, 0
      %p149 = por %p147, %p148
      %p150 = scmp.ne.s32.totalorder %s139, %s142
      %p151 = scmp.eq.s32.totalorder %s24, 1
      %p152 = por %p150, %p151
      %p153 = scmp.ne.s32.totalorder %s142, %s143
      %p154 = scmp.eq.s32.totalorder %s24, 0
      %p155 = por %p153, %p154
      %p156 = scmp.ne.s32.totalorder %s142, %s143
      %p157 = scmp.eq.s32.totalorder %s25, 1
      %p158 = por %p156, %p157
      %p160 = scmp.ne.s32.totalorder %s143, %s159
      %p161 = scmp.eq.s32.totalorder %s25, 0
      %p162 = por %p160, %p161
      %p163 = scmp.le.s32.totalorder 1, %s19
      %p164 = scmp.lt.s32.totalorder %s19, 3
      %p165 = pnand %p163, %p164
      %p166 = pneg %p165
      // Predicated region
      $region9: #{tpu_custom_call.1} parent=5 // pred_check
        _
      $region10: #{tpu_custom_call.1} parent=5 // pred_check_branch
        %168 = sbr.rel (%p165) target = $region12
      $region11: #{tpu_custom_call.1} parent=5 // pred_region
        %s169 = ssub.s32 %s19, 1
        // Predicated region
        $region13: #{tpu_custom_call.1} parent=11 // pred_check
          %p170 = pneg %p66
        $region14: #{tpu_custom_call.1} parent=11 // pred_check_branch
          %172 = sbr.rel (%p170) target = $region16
        $region15: #{tpu_custom_call.1} parent=11 // pred_region
          %174 = vsyncadd [#allocation6], 0
          %s175 = sshll.u32 %s1, 4
          %s176 = int_to_ptr.hbm [resolvable:$true] %s175
          %s177 = sshll.u32 [#allocation5], 4
          %s178 = int_to_ptr.vmem [resolvable:$true] %s177
          %183 = dma.hbm_to_vmem [thread:$0]  %s176, 3072, %s178, [#allocation6], 192, 192, 12
        $region16: #{tpu_custom_call.1} parent=11 // pred_fallthru
          _
        // Predicated region
        $region17: #{tpu_custom_call.1} parent=11 // pred_check
          %p184 = pneg %p87
        $region18: #{tpu_custom_call.1} parent=11 // pred_check_branch
          %186 = sbr.rel (%p184) target = $region20
        $region19: #{tpu_custom_call.1} parent=11 // pred_region
          %188 = vsyncadd [#allocation6], 0
          %s190 = sshll.u32 %s2, 4
          %s191 = int_to_ptr.hbm [resolvable:$true] %s190
          %s192 = sshll.u32 [#allocation7], 4
          %s193 = int_to_ptr.vmem [resolvable:$true] %s192
          %195 = dma.hbm_to_vmem [thread:$0]  %s191, 48, %s193, [#allocation6]
        $region20: #{tpu_custom_call.1} parent=11 // pred_fallthru
          _
        // Predicated region
        $region21: #{tpu_custom_call.1} parent=11 // pred_check
          %p196 = pneg %p108
        $region22: #{tpu_custom_call.1} parent=11 // pred_check_branch
          %198 = sbr.rel (%p196) target = $region24
        $region23: #{tpu_custom_call.1} parent=11 // pred_region
          %200 = vsyncadd [#allocation9], 0
          %s201 = sshll.u32 %s3, 4
          %s202 = int_to_ptr.hbm [resolvable:$true] %s201
          %s203 = sshll.u32 [#allocation8], 4
          %s204 = int_to_ptr.vmem [resolvable:$true] %s203
          %209 = dma.hbm_to_vmem [thread:$0]  %s202, 1024, %s204, [#allocation9], 64, 64, 4
        $region24: #{tpu_custom_call.1} parent=11 // pred_fallthru
          _
        // Predicated region
        $region25: #{tpu_custom_call.1} parent=11 // pred_check
          %p210 = pneg %p129
        $region26: #{tpu_custom_call.1} parent=11 // pred_check_branch
          %212 = sbr.rel (%p210) target = $region28
        $region27: #{tpu_custom_call.1} parent=11 // pred_region
          _
        $region28: #{tpu_custom_call.1} parent=11 // pred_fallthru
          _
      $region12: #{tpu_custom_call.1} parent=5 // pred_fallthru
        _
      %p213 = scmp.lt.s32.totalorder %s19, 2
      // Predicated region
      $region29: #{tpu_custom_call.1} parent=5 // pred_check
        %p214 = pneg %p213
      $region30: #{tpu_custom_call.1} parent=5 // pred_check_branch
        %216 = sbr.rel (%p214) target = $region32
      $region31: #{tpu_custom_call.1} parent=5 // pred_region
        // Predicated region
        $region33: #{tpu_custom_call.1} parent=31 // pred_check
          %p217 = pneg %p39
        $region34: #{tpu_custom_call.1} parent=31 // pred_check_branch
          %219 = sbr.rel (%p217) target = $region36
        $region35: #{tpu_custom_call.1} parent=31 // pred_region
          %s220 = sand.u32 %s29, 1
          %s221 = scalar_lea.sflag [#allocation3], %s220
          %s222 = sand.u32 %s29, 1
          %s223 = smul.addr %s222, 16
          %s224 = scalar_lea.vmem [#allocation2], %s223
          %226 = vsyncadd %s221, 0
          %s227 = smul.addr %s19, 2
          %s228 = smul.addr %s227, 8
          %s229 = scalar_lea.hbm %s0, %s228
          %s230 = sshll.u32 %s229, 4
          %s231 = int_to_ptr.hbm [resolvable:$true] %s230
          %s232 = sshll.u32 %s224, 4
          %s233 = int_to_ptr.vmem [resolvable:$true] %s232
          %238 = dma.hbm_to_vmem [thread:$0]  %s231, 256, %s233, %s221, 128, 128, 8
        $region36: #{tpu_custom_call.1} parent=31 // pred_fallthru
          _
      $region32: #{tpu_custom_call.1} parent=5 // pred_fallthru
        _
      %p239 = scmp.le.s32.totalorder 1, %s19
      %p240 = scmp.lt.s32.totalorder %s19, 3
      %p241 = pnand %p239, %p240
      %p242 = pneg %p241
      // Predicated region
      $region37: #{tpu_custom_call.1} parent=5 // pred_check
        _
      $region38: #{tpu_custom_call.1} parent=5 // pred_check_branch
        %244 = sbr.rel (%p241) target = $region40
      $region39: #{tpu_custom_call.1} parent=5 // pred_region
        %s245 = ssub.s32 %s19, 1
        %s246 = sand.u32 %s32, 1
        %s247 = scalar_lea.sflag [#allocation3], %s246
        %s248 = sand.u32 %s32, 1
        %s249 = smul.addr %s248, 16
        %s250 = scalar_lea.vmem [#allocation2], %s249
        // Predicated region
        $region41: #{tpu_custom_call.1} parent=39 // pred_check
          %p251 = pneg %p45
        $region42: #{tpu_custom_call.1} parent=39 // pred_check_branch
          %253 = sbr.rel (%p251) target = $region44
        $region43: #{tpu_custom_call.1} parent=39 // pred_region
          %255 = dma.done %s247, 256
        $region44: #{tpu_custom_call.1} parent=39 // pred_fallthru
          _
        // Predicated region
        $region45: #{tpu_custom_call.1} parent=39 // pred_check
          %p256 = pneg %p66
        $region46: #{tpu_custom_call.1} parent=39 // pred_check_branch
          %258 = sbr.rel (%p256) target = $region48
        $region47: #{tpu_custom_call.1} parent=39 // pred_region
          %260 = dma.done [#allocation6], 3072
        $region48: #{tpu_custom_call.1} parent=39 // pred_fallthru
          _
        // Predicated region
        $region49: #{tpu_custom_call.1} parent=39 // pred_check
          %p261 = pneg %p87
        $region50: #{tpu_custom_call.1} parent=39 // pred_check_branch
          %263 = sbr.rel (%p261) target = $region52
        $region51: #{tpu_custom_call.1} parent=39 // pred_region
          %265 = dma.done [#allocation6], 48
        $region52: #{tpu_custom_call.1} parent=39 // pred_fallthru
          _
        // Predicated region
        $region53: #{tpu_custom_call.1} parent=39 // pred_check
          %p266 = pneg %p108
        $region54: #{tpu_custom_call.1} parent=39 // pred_check_branch
          %268 = sbr.rel (%p266) target = $region56
        $region55: #{tpu_custom_call.1} parent=39 // pred_region
          %270 = dma.done [#allocation9], 1024
        $region56: #{tpu_custom_call.1} parent=39 // pred_fallthru
          _
        %s271 = sand.u32 %s32, 1
        %s272 = scalar_lea.sflag [#allocation3], %s271
        %s273 = sand.u32 %s32, 1
        %s274 = smul.addr %s273, 16
        %s275 = scalar_lea.vmem [#allocation2], %s274
        %p276 = pneg %p45
        %p277 = pneg %p42
        %p278 = pneg %p66
        %p279 = pneg %p63
        %p280 = pneg %p87
        %p281 = pneg %p84
        %p282 = pneg %p108
        %p283 = pneg %p105
        %p284 = pneg %p129
        %p285 = pneg %p126
        %p286 = pneg %p155
        %p287 = pneg %p152
        %s288 = sand.u32 %s142, 1
        %s289 = scalar_lea.sflag [#allocation4], %s288
        %s290 = sand.u32 %s142, 1
        %s291 = smul.addr %s290, 16
        %s292 = scalar_lea.vmem [#allocation10], %s291
        %v294 = vld [vmem:[%s250] sm:$0xff]
        %v295 = vld [vmem:[%s250 + $0x8] sm:$0xff]
        %v296 = vpack.c.bf16 %v295, %v294
        %v297 = vld [vmem:[#allocation5] sm:$0xff]
        %v298 = vld [vmem:[#allocation5 + $0x8] sm:$0xf]
        %v299 = vld [vmem:[#allocation5 + $0xc] sm:$0xff]
        %v300 = vld [vmem:[#allocation5 + $0x14] sm:$0xf]
        %v301 = vld [vmem:[#allocation5 + $0x18] sm:$0xff]
        %v302 = vld [vmem:[#allocation5 + $0x20] sm:$0xf]
        %v303 = vld [vmem:[#allocation5 + $0x24] sm:$0xff]
        %v304 = vld [vmem:[#allocation5 + $0x2c] sm:$0xf]
        %v305 = vld [vmem:[#allocation5 + $0x30] sm:$0xff]
        %v306 = vld [vmem:[#allocation5 + $0x38] sm:$0xf]
        %v307 = vld [vmem:[#allocation5 + $0x3c] sm:$0xff]
        %v308 = vld [vmem:[#allocation5 + $0x44] sm:$0xf]
        %v309 = vld [vmem:[#allocation5 + $0x48] sm:$0xff]
        %v310 = vld [vmem:[#allocation5 + $0x50] sm:$0xf]
        %v311 = vld [vmem:[#allocation5 + $0x54] sm:$0xff]
        %v312 = vld [vmem:[#allocation5 + $0x5c] sm:$0xf]
        %v313 = vld [vmem:[#allocation5 + $0x60] sm:$0xff]
        %v314 = vld [vmem:[#allocation5 + $0x68] sm:$0xf]
        %v315 = vld [vmem:[#allocation5 + $0x6c] sm:$0xff]
        %v316 = vld [vmem:[#allocation5 + $0x74] sm:$0xf]
        %v317 = vld [vmem:[#allocation5 + $0x78] sm:$0xff]
        %v318 = vld [vmem:[#allocation5 + $0x80] sm:$0xf]
        %v319 = vld [vmem:[#allocation5 + $0x84] sm:$0xff]
        %v320 = vld [vmem:[#allocation5 + $0x8c] sm:$0xf]
        %v321 = vld [vmem:[#allocation5 + $0x90] sm:$0xff]
        %v322 = vld [vmem:[#allocation5 + $0x98] sm:$0xf]
        %v323 = vld [vmem:[#allocation5 + $0x9c] sm:$0xff]
        %v324 = vld [vmem:[#allocation5 + $0xa4] sm:$0xf]
        %v325 = vld [vmem:[#allocation5 + $0xa8] sm:$0xff]
        %v326 = vld [vmem:[#allocation5 + $0xb0] sm:$0xf]
        %v327 = vld [vmem:[#allocation5 + $0xb4] sm:$0xff]
        %v328 = vld [vmem:[#allocation5 + $0xbc] sm:$0xf]
        %v329 = vld [vmem:[#allocation7] sm:$0x7]
        %v331 = vperm.slane %v329, 0
        %v332 = vperm.slane %v329, 1
        %v333 = vperm.slane %v329, 2
        %v369 = vunpack.c.l.b16 %v297
        %v370 = vunpack.c.h.b16 %v297
        %v371 = vunpack.c.l.b16 %v298
        %v372 = vunpack.c.l.b16 %v299
        %v373 = vunpack.c.h.b16 %v299
        %v374 = vunpack.c.l.b16 %v300
        %v375 = vunpack.c.l.b16 %v301
        %v376 = vunpack.c.h.b16 %v301
        %v377 = vunpack.c.l.b16 %v302
        %v378 = vunpack.c.l.b16 %v303
        %v379 = vunpack.c.h.b16 %v303
        %v380 = vunpack.c.l.b16 %v304
        %v381 = vunpack.c.l.b16 %v305
        %v382 = vunpack.c.h.b16 %v305
        %v383 = vunpack.c.l.b16 %v306
        %v384 = vunpack.c.l.b16 %v307
        %v385 = vunpack.c.h.b16 %v307
        %v386 = vunpack.c.l.b16 %v308
        %v387 = vunpack.c.l.b16 %v309
        %v388 = vunpack.c.h.b16 %v309
        %v389 = vunpack.c.l.b16 %v310
        %v390 = vunpack.c.l.b16 %v311
        %v391 = vunpack.c.h.b16 %v311
        %v392 = vunpack.c.l.b16 %v312
        %v393 = vunpack.c.l.b16 %v313
        %v394 = vunpack.c.h.b16 %v313
        %v395 = vunpack.c.l.b16 %v314
        %v396 = vunpack.c.l.b16 %v315
        %v397 = vunpack.c.h.b16 %v315
        %v398 = vunpack.c.l.b16 %v316
        %v399 = vunpack.c.l.b16 %v317
        %v400 = vunpack.c.h.b16 %v317
        %v401 = vunpack.c.l.b16 %v318
        %v402 = vunpack.c.l.b16 %v319
        %v403 = vunpack.c.h.b16 %v319
        %v404 = vunpack.c.l.b16 %v320
        %v405 = vunpack.c.l.b16 %v321
        %v406 = vunpack.c.h.b16 %v321
        %v407 = vunpack.c.l.b16 %v322
        %v408 = vunpack.c.l.b16 %v323
        %v409 = vunpack.c.h.b16 %v323
        %v410 = vunpack.c.l.b16 %v324
        %v411 = vunpack.c.l.b16 %v325
        %v412 = vunpack.c.h.b16 %v325
        %v413 = vunpack.c.l.b16 %v326
        %v414 = vunpack.c.l.b16 %v327
        %v415 = vunpack.c.h.b16 %v327
        %v416 = vunpack.c.l.b16 %v328
        %v417 = vpack.c.b16 %v372, %v369
        %v418 = vpack.c.b16 %v373, %v370
        %v419 = vpack.c.b16 %v374, %v371
        %v420 = vpack.c.b16 %v378, %v375
        %v421 = vpack.c.b16 %v379, %v376
        %v422 = vpack.c.b16 %v380, %v377
        %v423 = vpack.c.b16 %v384, %v381
        %v424 = vpack.c.b16 %v385, %v382
        %v425 = vpack.c.b16 %v386, %v383
        %v426 = vpack.c.b16 %v390, %v387
        %v427 = vpack.c.b16 %v391, %v388
        %v428 = vpack.c.b16 %v392, %v389
        %v429 = vpack.c.b16 %v396, %v393
        %v430 = vpack.c.b16 %v397, %v394
        %v431 = vpack.c.b16 %v398, %v395
        %v432 = vpack.c.b16 %v402, %v399
        %v433 = vpack.c.b16 %v403, %v400
        %v434 = vpack.c.b16 %v404, %v401
        %v435 = vpack.c.b16 %v408, %v405
        %v436 = vpack.c.b16 %v409, %v406
        %v437 = vpack.c.b16 %v410, %v407
        %v438 = vpack.c.b16 %v414, %v411
        %v439 = vpack.c.b16 %v415, %v412
        %v440 = vpack.c.b16 %v416, %v413
        %465 = vmatpush.bf16.msra.mxu0 %v438
        %466 = vmatpush.bf16.msra.mxu0 %v435
        %467 = vmatpush.bf16.msra.mxu0 %v432
        %468 = vmatpush.bf16.msra.mxu0 %v429
        %469 = vmatpush.bf16.msra.mxu0 %v426
        %470 = vmatpush.bf16.msra.mxu0 %v423
        %471 = vmatpush.bf16.msra.mxu0 %v420
        %472 = vmatpush.bf16.msra.mxu0 %v417
        %473 = vmatmul.bf16.gmra.mxu0 %v296
        %v474 = vpop.f32.mrf.mxu0
        %v475 = vadd.f32 %v331, %v474
        %v476 = vpop.f32.mrf.mxu0
        %v477 = vadd.f32 %v331, %v476
        %478 = vdwg.mxu0
        %479 = vmatpush.bf16.msra.mxu0 %v439
        %480 = vmatpush.bf16.msra.mxu0 %v436
        %481 = vmatpush.bf16.msra.mxu0 %v433
        %482 = vmatpush.bf16.msra.mxu0 %v430
        %483 = vmatpush.bf16.msra.mxu0 %v427
        %484 = vmatpush.bf16.msra.mxu0 %v424
        %485 = vmatpush.bf16.msra.mxu0 %v421
        %486 = vmatpush.bf16.msra.mxu0 %v418
        %487 = vmatmul.bf16.gmra.mxu0 %v296
        %v488 = vpop.f32.mrf.mxu0
        %v489 = vadd.f32 %v332, %v488
        %v490 = vpop.f32.mrf.mxu0
        %v491 = vadd.f32 %v332, %v490
        %492 = vdwg.mxu0
        %493 = vmatpush.bf16.msra.mxu0 %v440
        %494 = vmatpush.bf16.msra.mxu0 %v437
        %495 = vmatpush.bf16.msra.mxu0 %v434
        %496 = vmatpush.bf16.msra.mxu0 %v431
        %497 = vmatpush.bf16.msra.mxu0 %v428
        %498 = vmatpush.bf16.msra.mxu0 %v425
        %499 = vmatpush.bf16.msra.mxu0 %v422
        %500 = vmatpush.bf16.msra.mxu0 %v419
        %501 = vmatmul.bf16.gmra.mxu0 %v296
        %v502 = vpop.f32.mrf.mxu0
        %v503 = vadd.f32 %v333, %v502
        %v504 = vpop.f32.mrf.mxu0
        %v505 = vadd.f32 %v333, %v504
        %506 = vdwg.mxu0
        %509 = vrot.lane.b32.xlu0 %v475, 96
        %v510 = vpop.permute.xlu0 %509
        %511 = vrot.lane.b32.xlu0 %v477, 96
        %v512 = vpop.permute.xlu0 %511
        %515 = vrot.lane.b32.xlu0 %v475, 64
        %v516 = vpop.permute.xlu0 %515
        %517 = vrot.lane.b32.xlu0 %v477, 64
        %v518 = vpop.permute.xlu0 %517
        %521 = vrot.lane.b32.xlu0 %v475, 32
        %v522 = vpop.permute.xlu0 %521
        %523 = vrot.lane.b32.xlu0 %v477, 32
        %v524 = vpop.permute.xlu0 %523
        %v527 = vrot.slane %v516, 4
        %vm528 = vcmask 1047556
        %v529 = vsel %vm528, %v527, %v475
        %v530 = vrot.slane %v475, 4
        %v531 = vsel %vm528, %v516, %v530
        %v533 = vunpack.c.l.s4 1983009808
        %v534 = vunpack.c.0.s8 %v533
        %v535 = vperm.slane %v529, %v534
        %v537 = vunpack.c.l.s4 1983009808
        %v538 = vunpack.c.0.s8 %v537
        %v539 = vperm.slane %v531, %v538
        %v540 = vrot.slane %v522, 4
        %v541 = vsel %vm528, %v540, %v510
        %v542 = vrot.slane %v510, 4
        %v543 = vsel %vm528, %v522, %v542
        %v545 = vunpack.c.l.s4 1983009808
        %v546 = vunpack.c.0.s8 %v545
        %v547 = vperm.slane %v541, %v546
        %v549 = vunpack.c.l.s4 1983009808
        %v550 = vunpack.c.0.s8 %v549
        %v551 = vperm.slane %v543, %v550
        %v552 = vrot.slane %v547, 4
        %v553 = vsel %vm528, %v552, %v535
        %v554 = vrot.slane %v535, 4
        %v555 = vsel %vm528, %v547, %v554
        %v557 = vunpack.c.l.s4 1934713408
        %v558 = vunpack.c.0.s8 %v557
        %v559 = vperm.slane %v553, %v558
        %v561 = vunpack.c.l.s4 1934713408
        %v562 = vunpack.c.0.s8 %v561
        %v563 = vperm.slane %v555, %v562
        %v564 = vrot.slane %v551, 4
        %v565 = vsel %vm528, %v564, %v539
        %v566 = vrot.slane %v539, 4
        %v567 = vsel %vm528, %v551, %v566
        %v569 = vunpack.c.l.s4 1934713408
        %v570 = vunpack.c.0.s8 %v569
        %v571 = vperm.slane %v565, %v570
        %v573 = vunpack.c.l.s4 1934713408
        %v574 = vunpack.c.0.s8 %v573
        %v575 = vperm.slane %v567, %v574
        %v576 = vrot.slane %v559, 4
        %v577 = vsel %vm528, 0.0, %v576
        %v578 = vrot.slane %v563, 4
        %v579 = vsel %vm528, 0.0, %v578
        %v580 = vrot.slane %v571, 4
        %v581 = vsel %vm528, 0.0, %v580
        %v582 = vrot.slane %v575, 4
        %v583 = vsel %vm528, 0.0, %v582
        %v584 = vrot.slane %v518, 4
        %v585 = vsel %vm528, %v584, %v477
        %v586 = vrot.slane %v477, 4
        %v587 = vsel %vm528, %v518, %v586
        %v589 = vunpack.c.l.s4 1983009808
        %v590 = vunpack.c.0.s8 %v589
        %v591 = vperm.slane %v585, %v590
        %v593 = vunpack.c.l.s4 1983009808
        %v594 = vunpack.c.0.s8 %v593
        %v595 = vperm.slane %v587, %v594
        %v596 = vrot.slane %v524, 4
        %v597 = vsel %vm528, %v596, %v512
        %v598 = vrot.slane %v512, 4
        %v599 = vsel %vm528, %v524, %v598
        %v601 = vunpack.c.l.s4 1983009808
        %v602 = vunpack.c.0.s8 %v601
        %v603 = vperm.slane %v597, %v602
        %v605 = vunpack.c.l.s4 1983009808
        %v606 = vunpack.c.0.s8 %v605
        %v607 = vperm.slane %v599, %v606
        %v608 = vrot.slane %v603, 4
        %v609 = vsel %vm528, %v608, %v591
        %v610 = vrot.slane %v591, 4
        %v611 = vsel %vm528, %v603, %v610
        %v613 = vunpack.c.l.s4 1934713408
        %v614 = vunpack.c.0.s8 %v613
        %v615 = vperm.slane %v609, %v614
        %v617 = vunpack.c.l.s4 1934713408
        %v618 = vunpack.c.0.s8 %v617
        %v619 = vperm.slane %v611, %v618
        %v620 = vrot.slane %v607, 4
        %v621 = vsel %vm528, %v620, %v595
        %v622 = vrot.slane %v595, 4
        %v623 = vsel %vm528, %v607, %v622
        %v625 = vunpack.c.l.s4 1934713408
        %v626 = vunpack.c.0.s8 %v625
        %v627 = vperm.slane %v621, %v626
        %v629 = vunpack.c.l.s4 1934713408
        %v630 = vunpack.c.0.s8 %v629
        %v631 = vperm.slane %v623, %v630
        %v632 = vrot.slane %v615, 4
        %v633 = vsel %vm528, 0.0, %v632
        %v634 = vrot.slane %v619, 4
        %v635 = vsel %vm528, 0.0, %v634
        %v636 = vrot.slane %v627, 4
        %v637 = vsel %vm528, 0.0, %v636
        %v638 = vrot.slane %v631, 4
        %v639 = vsel %vm528, 0.0, %v638
        %v640 = vsel %vm528, %v578, %v559
        %v642 = vunpack.c.l.s4 1983009808
        %v643 = vunpack.c.0.s8 %v642
        %v644 = vperm.slane %v640, %v643
        %v645 = vrot.slane %v579, 4
        %v646 = vsel %vm528, %v645, %v577
        %v648 = vunpack.c.l.s4 1983009808
        %v649 = vunpack.c.0.s8 %v648
        %v650 = vperm.slane %v646, %v649
        %v651 = vsel %vm528, %v582, %v571
        %v653 = vunpack.c.l.s4 1983009808
        %v654 = vunpack.c.0.s8 %v653
        %v655 = vperm.slane %v651, %v654
        %v656 = vrot.slane %v583, 4
        %v657 = vsel %vm528, %v656, %v581
        %v659 = vunpack.c.l.s4 1983009808
        %v660 = vunpack.c.0.s8 %v659
        %v661 = vperm.slane %v657, %v660
        %v662 = vrot.slane %v650, 4
        %v663 = vsel %vm528, %v662, %v644
        %v664 = vrot.slane %v644, 4
        %v665 = vsel %vm528, %v650, %v664
        %v667 = vunpack.c.l.s4 1934713408
        %v668 = vunpack.c.0.s8 %v667
        %v669 = vperm.slane %v663, %v668
        %v671 = vunpack.c.l.s4 1934713408
        %v672 = vunpack.c.0.s8 %v671
        %v673 = vperm.slane %v665, %v672
        %v674 = vrot.slane %v661, 4
        %v675 = vsel %vm528, %v674, %v655
        %v676 = vrot.slane %v655, 4
        %v677 = vsel %vm528, %v661, %v676
        %v679 = vunpack.c.l.s4 1934713408
        %v680 = vunpack.c.0.s8 %v679
        %v681 = vperm.slane %v675, %v680
        %v683 = vunpack.c.l.s4 1934713408
        %v684 = vunpack.c.0.s8 %v683
        %v685 = vperm.slane %v677, %v684
        %v686 = vrot.slane %v681, 4
        %v687 = vsel %vm528, %v686, %v669
        %v688 = vrot.slane %v669, 4
        %v689 = vsel %vm528, %v681, %v688
        %v690 = vrot.slane %v685, 4
        %v691 = vsel %vm528, %v690, %v673
        %v692 = vrot.slane %v673, 4
        %v693 = vsel %vm528, %v685, %v692
        %v694 = vsel %vm528, %v634, %v615
        %v696 = vunpack.c.l.s4 1983009808
        %v697 = vunpack.c.0.s8 %v696
        %v698 = vperm.slane %v694, %v697
        %v699 = vrot.slane %v635, 4
        %v700 = vsel %vm528, %v699, %v633
        %v702 = vunpack.c.l.s4 1983009808
        %v703 = vunpack.c.0.s8 %v702
        %v704 = vperm.slane %v700, %v703
        %v705 = vsel %vm528, %v638, %v627
        %v707 = vunpack.c.l.s4 1983009808
        %v708 = vunpack.c.0.s8 %v707
        %v709 = vperm.slane %v705, %v708
        %v710 = vrot.slane %v639, 4
        %v711 = vsel %vm528, %v710, %v637
        %v713 = vunpack.c.l.s4 1983009808
        %v714 = vunpack.c.0.s8 %v713
        %v715 = vperm.slane %v711, %v714
        %v716 = vrot.slane %v704, 4
        %v717 = vsel %vm528, %v716, %v698
        %v718 = vrot.slane %v698, 4
        %v719 = vsel %vm528, %v704, %v718
        %v721 = vunpack.c.l.s4 1934713408
        %v722 = vunpack.c.0.s8 %v721
        %v723 = vperm.slane %v717, %v722
        %v725 = vunpack.c.l.s4 1934713408
        %v726 = vunpack.c.0.s8 %v725
        %v727 = vperm.slane %v719, %v726
        %v728 = vrot.slane %v715, 4
        %v729 = vsel %vm528, %v728, %v709
        %v730 = vrot.slane %v709, 4
        %v731 = vsel %vm528, %v715, %v730
        %v733 = vunpack.c.l.s4 1934713408
        %v734 = vunpack.c.0.s8 %v733
        %v735 = vperm.slane %v729, %v734
        %v737 = vunpack.c.l.s4 1934713408
        %v738 = vunpack.c.0.s8 %v737
        %v739 = vperm.slane %v731, %v738
        %v740 = vrot.slane %v735, 4
        %v741 = vsel %vm528, %v740, %v723
        %v742 = vrot.slane %v723, 4
        %v743 = vsel %vm528, %v735, %v742
        %v744 = vrot.slane %v739, 4
        %v745 = vsel %vm528, %v744, %v727
        %v746 = vrot.slane %v727, 4
        %v747 = vsel %vm528, %v739, %v746
        %v748 = vpack.c.bf16 %v687, %v687
        %v749 = vpack.c.bf16 %v741, %v741
        %v750 = vpack.c.bf16 %v689, %v689
        %v751 = vpack.c.bf16 %v743, %v743
        %v752 = vpack.c.bf16 %v691, %v691
        %v753 = vpack.c.bf16 %v745, %v745
        %v754 = vpack.c.bf16 %v693, %v693
        %v755 = vpack.c.bf16 %v747, %v747
        %758 = vrot.lane.b32.xlu0 %v489, 96
        %v759 = vpop.permute.xlu0 %758
        %760 = vrot.lane.b32.xlu0 %v491, 96
        %v761 = vpop.permute.xlu0 %760
        %764 = vrot.lane.b32.xlu0 %v489, 64
        %v765 = vpop.permute.xlu0 %764
        %766 = vrot.lane.b32.xlu0 %v491, 64
        %v767 = vpop.permute.xlu0 %766
        %770 = vrot.lane.b32.xlu0 %v489, 32
        %v771 = vpop.permute.xlu0 %770
        %772 = vrot.lane.b32.xlu0 %v491, 32
        %v773 = vpop.permute.xlu0 %772
        %v776 = vrot.slane %v765, 4
        %v777 = vsel %vm528, %v776, %v489
        %v778 = vrot.slane %v489, 4
        %v779 = vsel %vm528, %v765, %v778
        %v781 = vunpack.c.l.s4 1983009808
        %v782 = vunpack.c.0.s8 %v781
        %v783 = vperm.slane %v777, %v782
        %v785 = vunpack.c.l.s4 1983009808
        %v786 = vunpack.c.0.s8 %v785
        %v787 = vperm.slane %v779, %v786
        %v788 = vrot.slane %v771, 4
        %v789 = vsel %vm528, %v788, %v759
        %v790 = vrot.slane %v759, 4
        %v791 = vsel %vm528, %v771, %v790
        %v793 = vunpack.c.l.s4 1983009808
        %v794 = vunpack.c.0.s8 %v793
        %v795 = vperm.slane %v789, %v794
        %v797 = vunpack.c.l.s4 1983009808
        %v798 = vunpack.c.0.s8 %v797
        %v799 = vperm.slane %v791, %v798
        %v800 = vrot.slane %v795, 4
        %v801 = vsel %vm528, %v800, %v783
        %v802 = vrot.slane %v783, 4
        %v803 = vsel %vm528, %v795, %v802
        %v805 = vunpack.c.l.s4 1934713408
        %v806 = vunpack.c.0.s8 %v805
        %v807 = vperm.slane %v801, %v806
        %v809 = vunpack.c.l.s4 1934713408
        %v810 = vunpack.c.0.s8 %v809
        %v811 = vperm.slane %v803, %v810
        %v812 = vrot.slane %v799, 4
        %v813 = vsel %vm528, %v812, %v787
        %v814 = vrot.slane %v787, 4
        %v815 = vsel %vm528, %v799, %v814
        %v817 = vunpack.c.l.s4 1934713408
        %v818 = vunpack.c.0.s8 %v817
        %v819 = vperm.slane %v813, %v818
        %v821 = vunpack.c.l.s4 1934713408
        %v822 = vunpack.c.0.s8 %v821
        %v823 = vperm.slane %v815, %v822
        %v824 = vrot.slane %v807, 4
        %v825 = vsel %vm528, 0.0, %v824
        %v826 = vrot.slane %v811, 4
        %v827 = vsel %vm528, 0.0, %v826
        %v828 = vrot.slane %v819, 4
        %v829 = vsel %vm528, 0.0, %v828
        %v830 = vrot.slane %v823, 4
        %v831 = vsel %vm528, 0.0, %v830
        %v832 = vrot.slane %v767, 4
        %v833 = vsel %vm528, %v832, %v491
        %v834 = vrot.slane %v491, 4
        %v835 = vsel %vm528, %v767, %v834
        %v837 = vunpack.c.l.s4 1983009808
        %v838 = vunpack.c.0.s8 %v837
        %v839 = vperm.slane %v833, %v838
        %v841 = vunpack.c.l.s4 1983009808
        %v842 = vunpack.c.0.s8 %v841
        %v843 = vperm.slane %v835, %v842
        %v844 = vrot.slane %v773, 4
        %v845 = vsel %vm528, %v844, %v761
        %v846 = vrot.slane %v761, 4
        %v847 = vsel %vm528, %v773, %v846
        %v849 = vunpack.c.l.s4 1983009808
        %v850 = vunpack.c.0.s8 %v849
        %v851 = vperm.slane %v845, %v850
        %v853 = vunpack.c.l.s4 1983009808
        %v854 = vunpack.c.0.s8 %v853
        %v855 = vperm.slane %v847, %v854
        %v856 = vrot.slane %v851, 4
        %v857 = vsel %vm528, %v856, %v839
        %v858 = vrot.slane %v839, 4
        %v859 = vsel %vm528, %v851, %v858
        %v861 = vunpack.c.l.s4 1934713408
        %v862 = vunpack.c.0.s8 %v861
        %v863 = vperm.slane %v857, %v862
        %v865 = vunpack.c.l.s4 1934713408
        %v866 = vunpack.c.0.s8 %v865
        %v867 = vperm.slane %v859, %v866
        %v868 = vrot.slane %v855, 4
        %v869 = vsel %vm528, %v868, %v843
        %v870 = vrot.slane %v843, 4
        %v871 = vsel %vm528, %v855, %v870
        %v873 = vunpack.c.l.s4 1934713408
        %v874 = vunpack.c.0.s8 %v873
        %v875 = vperm.slane %v869, %v874
        %v877 = vunpack.c.l.s4 1934713408
        %v878 = vunpack.c.0.s8 %v877
        %v879 = vperm.slane %v871, %v878
        %v880 = vrot.slane %v863, 4
        %v881 = vsel %vm528, 0.0, %v880
        %v882 = vrot.slane %v867, 4
        %v883 = vsel %vm528, 0.0, %v882
        %v884 = vrot.slane %v875, 4
        %v885 = vsel %vm528, 0.0, %v884
        %v886 = vrot.slane %v879, 4
        %v887 = vsel %vm528, 0.0, %v886
        %v888 = vsel %vm528, %v826, %v807
        %v890 = vunpack.c.l.s4 1983009808
        %v891 = vunpack.c.0.s8 %v890
        %v892 = vperm.slane %v888, %v891
        %v893 = vrot.slane %v827, 4
        %v894 = vsel %vm528, %v893, %v825
        %v896 = vunpack.c.l.s4 1983009808
        %v897 = vunpack.c.0.s8 %v896
        %v898 = vperm.slane %v894, %v897
        %v899 = vsel %vm528, %v830, %v819
        %v901 = vunpack.c.l.s4 1983009808
        %v902 = vunpack.c.0.s8 %v901
        %v903 = vperm.slane %v899, %v902
        %v904 = vrot.slane %v831, 4
        %v905 = vsel %vm528, %v904, %v829
        %v907 = vunpack.c.l.s4 1983009808
        %v908 = vunpack.c.0.s8 %v907
        %v909 = vperm.slane %v905, %v908
        %v910 = vrot.slane %v898, 4
        %v911 = vsel %vm528, %v910, %v892
        %v912 = vrot.slane %v892, 4
        %v913 = vsel %vm528, %v898, %v912
        %v915 = vunpack.c.l.s4 1934713408
        %v916 = vunpack.c.0.s8 %v915
        %v917 = vperm.slane %v911, %v916
        %v919 = vunpack.c.l.s4 1934713408
        %v920 = vunpack.c.0.s8 %v919
        %v921 = vperm.slane %v913, %v920
        %v922 = vrot.slane %v909, 4
        %v923 = vsel %vm528, %v922, %v903
        %v924 = vrot.slane %v903, 4
        %v925 = vsel %vm528, %v909, %v924
        %v927 = vunpack.c.l.s4 1934713408
        %v928 = vunpack.c.0.s8 %v927
        %v929 = vperm.slane %v923, %v928
        %v931 = vunpack.c.l.s4 1934713408
        %v932 = vunpack.c.0.s8 %v931
        %v933 = vperm.slane %v925, %v932
        %v934 = vrot.slane %v929, 4
        %v935 = vsel %vm528, %v934, %v917
        %v936 = vrot.slane %v917, 4
        %v937 = vsel %vm528, %v929, %v936
        %v938 = vrot.slane %v933, 4
        %v939 = vsel %vm528, %v938, %v921
        %v940 = vrot.slane %v921, 4
        %v941 = vsel %vm528, %v933, %v940
        %v942 = vsel %vm528, %v882, %v863
        %v944 = vunpack.c.l.s4 1983009808
        %v945 = vunpack.c.0.s8 %v944
        %v946 = vperm.slane %v942, %v945
        %v947 = vrot.slane %v883, 4
        %v948 = vsel %vm528, %v947, %v881
        %v950 = vunpack.c.l.s4 1983009808
        %v951 = vunpack.c.0.s8 %v950
        %v952 = vperm.slane %v948, %v951
        %v953 = vsel %vm528, %v886, %v875
        %v955 = vunpack.c.l.s4 1983009808
        %v956 = vunpack.c.0.s8 %v955
        %v957 = vperm.slane %v953, %v956
        %v958 = vrot.slane %v887, 4
        %v959 = vsel %vm528, %v958, %v885
        %v961 = vunpack.c.l.s4 1983009808
        %v962 = vunpack.c.0.s8 %v961
        %v963 = vperm.slane %v959, %v962
        %v964 = vrot.slane %v952, 4
        %v965 = vsel %vm528, %v964, %v946
        %v966 = vrot.slane %v946, 4
        %v967 = vsel %vm528, %v952, %v966
        %v969 = vunpack.c.l.s4 1934713408
        %v970 = vunpack.c.0.s8 %v969
        %v971 = vperm.slane %v965, %v970
        %v973 = vunpack.c.l.s4 1934713408
        %v974 = vunpack.c.0.s8 %v973
        %v975 = vperm.slane %v967, %v974
        %v976 = vrot.slane %v963, 4
        %v977 = vsel %vm528, %v976, %v957
        %v978 = vrot.slane %v957, 4
        %v979 = vsel %vm528, %v963, %v978
        %v981 = vunpack.c.l.s4 1934713408
        %v982 = vunpack.c.0.s8 %v981
        %v983 = vperm.slane %v977, %v982
        %v985 = vunpack.c.l.s4 1934713408
        %v986 = vunpack.c.0.s8 %v985
        %v987 = vperm.slane %v979, %v986
        %v988 = vrot.slane %v983, 4
        %v989 = vsel %vm528, %v988, %v971
        %v990 = vrot.slane %v971, 4
        %v991 = vsel %vm528, %v983, %v990
        %v992 = vrot.slane %v987, 4
        %v993 = vsel %vm528, %v992, %v975
        %v994 = vrot.slane %v975, 4
        %v995 = vsel %vm528, %v987, %v994
        %v996 = vpack.c.bf16 %v935, %v935
        %v997 = vpack.c.bf16 %v989, %v989
        %v998 = vpack.c.bf16 %v937, %v937
        %v999 = vpack.c.bf16 %v991, %v991
        %v1000 = vpack.c.bf16 %v939, %v939
        %v1001 = vpack.c.bf16 %v993, %v993
        %v1002 = vpack.c.bf16 %v941, %v941
        %v1003 = vpack.c.bf16 %v995, %v995
        %1006 = vrot.lane.b32.xlu0 %v503, 96
        %v1007 = vpop.permute.xlu0 %1006
        %1008 = vrot.lane.b32.xlu0 %v505, 96
        %v1009 = vpop.permute.xlu0 %1008
        %1012 = vrot.lane.b32.xlu0 %v503, 64
        %v1013 = vpop.permute.xlu0 %1012
        %1014 = vrot.lane.b32.xlu0 %v505, 64
        %v1015 = vpop.permute.xlu0 %1014
        %1018 = vrot.lane.b32.xlu0 %v503, 32
        %v1019 = vpop.permute.xlu0 %1018
        %1020 = vrot.lane.b32.xlu0 %v505, 32
        %v1021 = vpop.permute.xlu0 %1020
        %v1024 = vrot.slane %v1013, 4
        %v1025 = vsel %vm528, %v1024, %v503
        %v1026 = vrot.slane %v503, 4
        %v1027 = vsel %vm528, %v1013, %v1026
        %v1029 = vunpack.c.l.s4 1983009808
        %v1030 = vunpack.c.0.s8 %v1029
        %v1031 = vperm.slane %v1025, %v1030
        %v1033 = vunpack.c.l.s4 1983009808
        %v1034 = vunpack.c.0.s8 %v1033
        %v1035 = vperm.slane %v1027, %v1034
        %v1036 = vrot.slane %v1019, 4
        %v1037 = vsel %vm528, %v1036, %v1007
        %v1038 = vrot.slane %v1007, 4
        %v1039 = vsel %vm528, %v1019, %v1038
        %v1041 = vunpack.c.l.s4 1983009808
        %v1042 = vunpack.c.0.s8 %v1041
        %v1043 = vperm.slane %v1037, %v1042
        %v1045 = vunpack.c.l.s4 1983009808
        %v1046 = vunpack.c.0.s8 %v1045
        %v1047 = vperm.slane %v1039, %v1046
        %v1048 = vrot.slane %v1043, 4
        %v1049 = vsel %vm528, %v1048, %v1031
        %v1050 = vrot.slane %v1031, 4
        %v1051 = vsel %vm528, %v1043, %v1050
        %v1053 = vunpack.c.l.s4 1934713408
        %v1054 = vunpack.c.0.s8 %v1053
        %v1055 = vperm.slane %v1049, %v1054
        %v1057 = vunpack.c.l.s4 1934713408
        %v1058 = vunpack.c.0.s8 %v1057
        %v1059 = vperm.slane %v1051, %v1058
        %v1060 = vrot.slane %v1047, 4
        %v1061 = vsel %vm528, %v1060, %v1035
        %v1062 = vrot.slane %v1035, 4
        %v1063 = vsel %vm528, %v1047, %v1062
        %v1065 = vunpack.c.l.s4 1934713408
        %v1066 = vunpack.c.0.s8 %v1065
        %v1067 = vperm.slane %v1061, %v1066
        %v1069 = vunpack.c.l.s4 1934713408
        %v1070 = vunpack.c.0.s8 %v1069
        %v1071 = vperm.slane %v1063, %v1070
        %v1072 = vrot.slane %v1055, 4
        %v1073 = vsel %vm528, 0.0, %v1072
        %v1074 = vrot.slane %v1059, 4
        %v1075 = vsel %vm528, 0.0, %v1074
        %v1076 = vrot.slane %v1067, 4
        %v1077 = vsel %vm528, 0.0, %v1076
        %v1078 = vrot.slane %v1071, 4
        %v1079 = vsel %vm528, 0.0, %v1078
        %v1080 = vrot.slane %v1015, 4
        %v1081 = vsel %vm528, %v1080, %v505
        %v1082 = vrot.slane %v505, 4
        %v1083 = vsel %vm528, %v1015, %v1082
        %v1085 = vunpack.c.l.s4 1983009808
        %v1086 = vunpack.c.0.s8 %v1085
        %v1087 = vperm.slane %v1081, %v1086
        %v1089 = vunpack.c.l.s4 1983009808
        %v1090 = vunpack.c.0.s8 %v1089
        %v1091 = vperm.slane %v1083, %v1090
        %v1092 = vrot.slane %v1021, 4
        %v1093 = vsel %vm528, %v1092, %v1009
        %v1094 = vrot.slane %v1009, 4
        %v1095 = vsel %vm528, %v1021, %v1094
        %v1097 = vunpack.c.l.s4 1983009808
        %v1098 = vunpack.c.0.s8 %v1097
        %v1099 = vperm.slane %v1093, %v1098
        %v1101 = vunpack.c.l.s4 1983009808
        %v1102 = vunpack.c.0.s8 %v1101
        %v1103 = vperm.slane %v1095, %v1102
        %v1104 = vrot.slane %v1099, 4
        %v1105 = vsel %vm528, %v1104, %v1087
        %v1106 = vrot.slane %v1087, 4
        %v1107 = vsel %vm528, %v1099, %v1106
        %v1109 = vunpack.c.l.s4 1934713408
        %v1110 = vunpack.c.0.s8 %v1109
        %v1111 = vperm.slane %v1105, %v1110
        %v1113 = vunpack.c.l.s4 1934713408
        %v1114 = vunpack.c.0.s8 %v1113
        %v1115 = vperm.slane %v1107, %v1114
        %v1116 = vrot.slane %v1103, 4
        %v1117 = vsel %vm528, %v1116, %v1091
        %v1118 = vrot.slane %v1091, 4
        %v1119 = vsel %vm528, %v1103, %v1118
        %v1121 = vunpack.c.l.s4 1934713408
        %v1122 = vunpack.c.0.s8 %v1121
        %v1123 = vperm.slane %v1117, %v1122
        %v1125 = vunpack.c.l.s4 1934713408
        %v1126 = vunpack.c.0.s8 %v1125
        %v1127 = vperm.slane %v1119, %v1126
        %v1128 = vrot.slane %v1111, 4
        %v1129 = vsel %vm528, 0.0, %v1128
        %v1130 = vrot.slane %v1115, 4
        %v1131 = vsel %vm528, 0.0, %v1130
        %v1132 = vrot.slane %v1123, 4
        %v1133 = vsel %vm528, 0.0, %v1132
        %v1134 = vrot.slane %v1127, 4
        %v1135 = vsel %vm528, 0.0, %v1134
        %v1136 = vsel %vm528, %v1074, %v1055
        %v1138 = vunpack.c.l.s4 1983009808
        %v1139 = vunpack.c.0.s8 %v1138
        %v1140 = vperm.slane %v1136, %v1139
        %v1141 = vrot.slane %v1075, 4
        %v1142 = vsel %vm528, %v1141, %v1073
        %v1144 = vunpack.c.l.s4 1983009808
        %v1145 = vunpack.c.0.s8 %v1144
        %v1146 = vperm.slane %v1142, %v1145
        %v1147 = vsel %vm528, %v1078, %v1067
        %v1149 = vunpack.c.l.s4 1983009808
        %v1150 = vunpack.c.0.s8 %v1149
        %v1151 = vperm.slane %v1147, %v1150
        %v1152 = vrot.slane %v1079, 4
        %v1153 = vsel %vm528, %v1152, %v1077
        %v1155 = vunpack.c.l.s4 1983009808
        %v1156 = vunpack.c.0.s8 %v1155
        %v1157 = vperm.slane %v1153, %v1156
        %v1158 = vrot.slane %v1146, 4
        %v1159 = vsel %vm528, %v1158, %v1140
        %v1160 = vrot.slane %v1140, 4
        %v1161 = vsel %vm528, %v1146, %v1160
        %v1163 = vunpack.c.l.s4 1934713408
        %v1164 = vunpack.c.0.s8 %v1163
        %v1165 = vperm.slane %v1159, %v1164
        %v1167 = vunpack.c.l.s4 1934713408
        %v1168 = vunpack.c.0.s8 %v1167
        %v1169 = vperm.slane %v1161, %v1168
        %v1170 = vrot.slane %v1157, 4
        %v1171 = vsel %vm528, %v1170, %v1151
        %v1172 = vrot.slane %v1151, 4
        %v1173 = vsel %vm528, %v1157, %v1172
        %v1175 = vunpack.c.l.s4 1934713408
        %v1176 = vunpack.c.0.s8 %v1175
        %v1177 = vperm.slane %v1171, %v1176
        %v1179 = vunpack.c.l.s4 1934713408
        %v1180 = vunpack.c.0.s8 %v1179
        %v1181 = vperm.slane %v1173, %v1180
        %v1182 = vrot.slane %v1177, 4
        %v1183 = vsel %vm528, %v1182, %v1165
        %v1184 = vrot.slane %v1165, 4
        %v1185 = vsel %vm528, %v1177, %v1184
        %v1186 = vrot.slane %v1181, 4
        %v1187 = vsel %vm528, %v1186, %v1169
        %v1188 = vrot.slane %v1169, 4
        %v1189 = vsel %vm528, %v1181, %v1188
        %v1190 = vsel %vm528, %v1130, %v1111
        %v1192 = vunpack.c.l.s4 1983009808
        %v1193 = vunpack.c.0.s8 %v1192
        %v1194 = vperm.slane %v1190, %v1193
        %v1195 = vrot.slane %v1131, 4
        %v1196 = vsel %vm528, %v1195, %v1129
        %v1198 = vunpack.c.l.s4 1983009808
        %v1199 = vunpack.c.0.s8 %v1198
        %v1200 = vperm.slane %v1196, %v1199
        %v1201 = vsel %vm528, %v1134, %v1123
        %v1203 = vunpack.c.l.s4 1983009808
        %v1204 = vunpack.c.0.s8 %v1203
        %v1205 = vperm.slane %v1201, %v1204
        %v1206 = vrot.slane %v1135, 4
        %v1207 = vsel %vm528, %v1206, %v1133
        %v1209 = vunpack.c.l.s4 1983009808
        %v1210 = vunpack.c.0.s8 %v1209
        %v1211 = vperm.slane %v1207, %v1210
        %v1212 = vrot.slane %v1200, 4
        %v1213 = vsel %vm528, %v1212, %v1194
        %v1214 = vrot.slane %v1194, 4
        %v1215 = vsel %vm528, %v1200, %v1214
        %v1217 = vunpack.c.l.s4 1934713408
        %v1218 = vunpack.c.0.s8 %v1217
        %v1219 = vperm.slane %v1213, %v1218
        %v1221 = vunpack.c.l.s4 1934713408
        %v1222 = vunpack.c.0.s8 %v1221
        %v1223 = vperm.slane %v1215, %v1222
        %v1224 = vrot.slane %v1211, 4
        %v1225 = vsel %vm528, %v1224, %v1205
        %v1226 = vrot.slane %v1205, 4
        %v1227 = vsel %vm528, %v1211, %v1226
        %v1229 = vunpack.c.l.s4 1934713408
        %v1230 = vunpack.c.0.s8 %v1229
        %v1231 = vperm.slane %v1225, %v1230
        %v1233 = vunpack.c.l.s4 1934713408
        %v1234 = vunpack.c.0.s8 %v1233
        %v1235 = vperm.slane %v1227, %v1234
        %v1236 = vrot.slane %v1231, 4
        %v1237 = vsel %vm528, %v1236, %v1219
        %v1238 = vrot.slane %v1219, 4
        %v1239 = vsel %vm528, %v1231, %v1238
        %v1240 = vrot.slane %v1235, 4
        %v1241 = vsel %vm528, %v1240, %v1223
        %v1242 = vrot.slane %v1223, 4
        %v1243 = vsel %vm528, %v1235, %v1242
        %v1244 = vpack.c.bf16 %v1183, %v1183
        %v1245 = vpack.c.bf16 %v1237, %v1237
        %v1246 = vpack.c.bf16 %v1185, %v1185
        %v1247 = vpack.c.bf16 %v1239, %v1239
        %v1248 = vpack.c.bf16 %v1187, %v1187
        %v1249 = vpack.c.bf16 %v1241, %v1241
        %v1250 = vpack.c.bf16 %v1189, %v1189
        %v1251 = vpack.c.bf16 %v1243, %v1243
        %v1254 = vunpack.c.l.b16 %v748
        %v1255 = vunpack.c.l.b16 %v749
        %v1256 = vpack.c.b16 %v1255, %v1254
        %v1259 = vunpack.c.l.b16 %v996
        %v1260 = vunpack.c.l.b16 %v997
        %v1261 = vpack.c.b16 %v1260, %v1259
        %vm1262 = vcmask 261120
        %v1264 = vsel %vm1262, %v1256, 0
        %v1267 = vsel %vm1262, %v1261, 0
        %1269 = vmatpush.bf16.xpose.msra.mxu0 0
        %1270 = vmatpush.bf16.xpose.msra.mxu0 0
        %1271 = vmatpush.bf16.xpose.msra.mxu0 0
        %1272 = vmatpush.bf16.xpose.msra.mxu0 0
        %1273 = vmatpush.bf16.xpose.msra.mxu0 0
        %1274 = vmatpush.bf16.xpose.msra.mxu0 0
        %1275 = vmatpush.bf16.xpose.msra.mxu0 0
        %1276 = vmatpush.bf16.xpose.msra.mxu0 %v1267
        %1277 = vmatmul.bf16.gmra.mxu0 %v1264
        %v1278 = vpop.f32.mrf.mxu0
        %v1279 = vadd.f32 0.0, %v1278
        %v1280 = vpop.f32.mrf.mxu0
        %v1281 = vadd.f32 0.0, %v1280
        %1282 = vdwg.mxu0
        %v1285 = vunpack.c.l.b16 %v750
        %v1286 = vunpack.c.l.b16 %v751
        %v1287 = vpack.c.b16 %v1286, %v1285
        %v1290 = vunpack.c.l.b16 %v998
        %v1291 = vunpack.c.l.b16 %v999
        %v1292 = vpack.c.b16 %v1291, %v1290
        %v1294 = vsel %vm1262, %v1287, 0
        %v1297 = vsel %vm1262, %v1292, 0
        %1299 = vmatpush.bf16.xpose.msra.mxu0 0
        %1300 = vmatpush.bf16.xpose.msra.mxu0 0
        %1301 = vmatpush.bf16.xpose.msra.mxu0 0
        %1302 = vmatpush.bf16.xpose.msra.mxu0 0
        %1303 = vmatpush.bf16.xpose.msra.mxu0 0
        %1304 = vmatpush.bf16.xpose.msra.mxu0 0
        %1305 = vmatpush.bf16.xpose.msra.mxu0 0
        %1306 = vmatpush.bf16.xpose.msra.mxu0 %v1297
        %1307 = vmatmul.bf16.gmra.mxu0 %v1294
        %v1308 = vpop.f32.mrf.mxu0
        %v1309 = vadd.f32 0.0, %v1308
        %v1310 = vpop.f32.mrf.mxu0
        %v1311 = vadd.f32 0.0, %v1310
        %1312 = vdwg.mxu0
        %v1315 = vunpack.c.l.b16 %v752
        %v1316 = vunpack.c.l.b16 %v753
        %v1317 = vpack.c.b16 %v1316, %v1315
        %v1320 = vunpack.c.l.b16 %v1000
        %v1321 = vunpack.c.l.b16 %v1001
        %v1322 = vpack.c.b16 %v1321, %v1320
        %v1324 = vsel %vm1262, %v1317, 0
        %v1327 = vsel %vm1262, %v1322, 0
        %1329 = vmatpush.bf16.xpose.msra.mxu0 0
        %1330 = vmatpush.bf16.xpose.msra.mxu0 0
        %1331 = vmatpush.bf16.xpose.msra.mxu0 0
        %1332 = vmatpush.bf16.xpose.msra.mxu0 0
        %1333 = vmatpush.bf16.xpose.msra.mxu0 0
        %1334 = vmatpush.bf16.xpose.msra.mxu0 0
        %1335 = vmatpush.bf16.xpose.msra.mxu0 0
        %1336 = vmatpush.bf16.xpose.msra.mxu0 %v1327
        %1337 = vmatmul.bf16.gmra.mxu0 %v1324
        %v1338 = vpop.f32.mrf.mxu0
        %v1339 = vadd.f32 0.0, %v1338
        %v1340 = vpop.f32.mrf.mxu0
        %v1341 = vadd.f32 0.0, %v1340
        %1342 = vdwg.mxu0
        %v1345 = vunpack.c.l.b16 %v754
        %v1346 = vunpack.c.l.b16 %v755
        %v1347 = vpack.c.b16 %v1346, %v1345
        %v1350 = vunpack.c.l.b16 %v1002
        %v1351 = vunpack.c.l.b16 %v1003
        %v1352 = vpack.c.b16 %v1351, %v1350
        %v1354 = vsel %vm1262, %v1347, 0
        %v1357 = vsel %vm1262, %v1352, 0
        %1359 = vmatpush.bf16.xpose.msra.mxu0 0
        %1360 = vmatpush.bf16.xpose.msra.mxu0 0
        %1361 = vmatpush.bf16.xpose.msra.mxu0 0
        %1362 = vmatpush.bf16.xpose.msra.mxu0 0
        %1363 = vmatpush.bf16.xpose.msra.mxu0 0
        %1364 = vmatpush.bf16.xpose.msra.mxu0 0
        %1365 = vmatpush.bf16.xpose.msra.mxu0 0
        %1366 = vmatpush.bf16.xpose.msra.mxu0 %v1357
        %1367 = vmatmul.bf16.gmra.mxu0 %v1354
        %v1368 = vpop.f32.mrf.mxu0
        %v1369 = vadd.f32 0.0, %v1368
        %v1370 = vpop.f32.mrf.mxu0
        %v1371 = vadd.f32 0.0, %v1370
        %1372 = vdwg.mxu0
        %vm1373 = vcmask 130048
        %v1374 = vsel %vm1373, %v1279, -inf
        %1375 = vmax.xlane.f32.xlu0 %v1374
        %v1376 = vpop.xlane.xlu0 %1375
        %v1377 = vsel %vm1373, %v1281, -inf
        %1378 = vmax.xlane.f32.xlu0 %v1377
        %v1379 = vpop.xlane.xlu0 %1378
        %v1380 = vsel %vm1373, %v1309, -inf
        %1381 = vmax.xlane.f32.xlu0 %v1380
        %v1382 = vpop.xlane.xlu0 %1381
        %v1383 = vsel %vm1373, %v1311, -inf
        %1384 = vmax.xlane.f32.xlu0 %v1383
        %v1385 = vpop.xlane.xlu0 %1384
        %v1386 = vsel %vm1373, %v1339, -inf
        %1387 = vmax.xlane.f32.xlu0 %v1386
        %v1388 = vpop.xlane.xlu0 %1387
        %v1389 = vsel %vm1373, %v1341, -inf
        %1390 = vmax.xlane.f32.xlu0 %v1389
        %v1391 = vpop.xlane.xlu0 %1390
        %v1392 = vsel %vm1373, %v1369, -inf
        %1393 = vmax.xlane.f32.xlu0 %v1392
        %v1394 = vpop.xlane.xlu0 %1393
        %v1395 = vsel %vm1373, %v1371, -inf
        %1396 = vmax.xlane.f32.xlu0 %v1395
        %v1397 = vpop.xlane.xlu0 %1396
        %v1398 = vsub.f32 %v1279, %v1376
        %v1399 = vsub.f32 %v1281, %v1379
        %v1400 = vsub.f32 %v1309, %v1382
        %v1401 = vsub.f32 %v1311, %v1385
        %v1402 = vsub.f32 %v1339, %v1388
        %v1403 = vsub.f32 %v1341, %v1391
        %v1404 = vsub.f32 %v1369, %v1394
        %v1405 = vsub.f32 %v1371, %v1397
        %v1406 = vmul.f32 %v1398, 1.442695
        %v1407 = vpow.pop %v1406
        %v1408 = vmul.f32 %v1399, 1.442695
        %v1409 = vpow.pop %v1408
        %v1410 = vmul.f32 %v1400, 1.442695
        %v1411 = vpow.pop %v1410
        %v1412 = vmul.f32 %v1401, 1.442695
        %v1413 = vpow.pop %v1412
        %v1414 = vmul.f32 %v1402, 1.442695
        %v1415 = vpow.pop %v1414
        %v1416 = vmul.f32 %v1403, 1.442695
        %v1417 = vpow.pop %v1416
        %v1418 = vmul.f32 %v1404, 1.442695
        %v1419 = vpow.pop %v1418
        %v1420 = vmul.f32 %v1405, 1.442695
        %v1421 = vpow.pop %v1420
        %v1422 = vsel %vm1373, %v1407, 0.0
        %1423 = vadd.xlane.f32.xlu0 %v1422
        %v1424 = vpop.xlane.xlu0 %1423
        %v1425 = vsel %vm1373, %v1409, 0.0
        %1426 = vadd.xlane.f32.xlu0 %v1425
        %v1427 = vpop.xlane.xlu0 %1426
        %v1428 = vsel %vm1373, %v1411, 0.0
        %1429 = vadd.xlane.f32.xlu0 %v1428
        %v1430 = vpop.xlane.xlu0 %1429
        %v1431 = vsel %vm1373, %v1413, 0.0
        %1432 = vadd.xlane.f32.xlu0 %v1431
        %v1433 = vpop.xlane.xlu0 %1432
        %v1434 = vsel %vm1373, %v1415, 0.0
        %1435 = vadd.xlane.f32.xlu0 %v1434
        %v1436 = vpop.xlane.xlu0 %1435
        %v1437 = vsel %vm1373, %v1417, 0.0
        %1438 = vadd.xlane.f32.xlu0 %v1437
        %v1439 = vpop.xlane.xlu0 %1438
        %v1440 = vsel %vm1373, %v1419, 0.0
        %1441 = vadd.xlane.f32.xlu0 %v1440
        %v1442 = vpop.xlane.xlu0 %1441
        %v1443 = vsel %vm1373, %v1421, 0.0
        %1444 = vadd.xlane.f32.xlu0 %v1443
        %v1445 = vpop.xlane.xlu0 %1444
        %v1446 = vrcp.pop %v1424
        %v1447 = vmul.f32 %v1424, %v1446
        %v1448 = vsub.f32 1.0, %v1447
        %v1449 = vmul.f32 %v1446, %v1448
        %v1450 = vadd.f32 %v1446, %v1449
        %vm1451 = vweird.f32 %v1424
        %vm1452 = vweird.f32 %v1446
        %vm1453 = vmor %vm1451, %vm1452
        %v1454 = vsel %vm1453, %v1446, %v1450
        %v1455 = vand.u32 2147483647, %v1424
        %vm1456 = vcmp.eq.f32.partialorder %v1455, 8.507059e+37
        %v1457 = vand.u32 %v1424, 2147483648
        %v1458 = vor.u32 1.1754944e-38, %v1457
        %v1459 = vsel %vm1456, %v1458, %v1454
        %v1460 = vmul.f32 %v1407, %v1459
        %v1461 = vrcp.pop %v1427
        %v1462 = vmul.f32 %v1427, %v1461
        %v1463 = vsub.f32 1.0, %v1462
        %v1464 = vmul.f32 %v1461, %v1463
        %v1465 = vadd.f32 %v1461, %v1464
        %vm1466 = vweird.f32 %v1427
        %vm1467 = vweird.f32 %v1461
        %vm1468 = vmor %vm1466, %vm1467
        %v1469 = vsel %vm1468, %v1461, %v1465
        %v1470 = vand.u32 2147483647, %v1427
        %vm1471 = vcmp.eq.f32.partialorder %v1470, 8.507059e+37
        %v1472 = vand.u32 %v1427, 2147483648
        %v1473 = vor.u32 1.1754944e-38, %v1472
        %v1474 = vsel %vm1471, %v1473, %v1469
        %v1475 = vmul.f32 %v1409, %v1474
        %v1476 = vrcp.pop %v1430
        %v1477 = vmul.f32 %v1430, %v1476
        %v1478 = vsub.f32 1.0, %v1477
        %v1479 = vmul.f32 %v1476, %v1478
        %v1480 = vadd.f32 %v1476, %v1479
        %vm1481 = vweird.f32 %v1430
        %vm1482 = vweird.f32 %v1476
        %vm1483 = vmor %vm1481, %vm1482
        %v1484 = vsel %vm1483, %v1476, %v1480
        %v1485 = vand.u32 2147483647, %v1430
        %vm1486 = vcmp.eq.f32.partialorder %v1485, 8.507059e+37
        %v1487 = vand.u32 %v1430, 2147483648
        %v1488 = vor.u32 1.1754944e-38, %v1487
        %v1489 = vsel %vm1486, %v1488, %v1484
        %v1490 = vmul.f32 %v1411, %v1489
        %v1491 = vrcp.pop %v1433
        %v1492 = vmul.f32 %v1433, %v1491
        %v1493 = vsub.f32 1.0, %v1492
        %v1494 = vmul.f32 %v1491, %v1493
        %v1495 = vadd.f32 %v1491, %v1494
        %vm1496 = vweird.f32 %v1433
        %vm1497 = vweird.f32 %v1491
        %vm1498 = vmor %vm1496, %vm1497
        %v1499 = vsel %vm1498, %v1491, %v1495
        %v1500 = vand.u32 2147483647, %v1433
        %vm1501 = vcmp.eq.f32.partialorder %v1500, 8.507059e+37
        %v1502 = vand.u32 %v1433, 2147483648
        %v1503 = vor.u32 1.1754944e-38, %v1502
        %v1504 = vsel %vm1501, %v1503, %v1499
        %v1505 = vmul.f32 %v1413, %v1504
        %v1506 = vrcp.pop %v1436
        %v1507 = vmul.f32 %v1436, %v1506
        %v1508 = vsub.f32 1.0, %v1507
        %v1509 = vmul.f32 %v1506, %v1508
        %v1510 = vadd.f32 %v1506, %v1509
        %vm1511 = vweird.f32 %v1436
        %vm1512 = vweird.f32 %v1506
        %vm1513 = vmor %vm1511, %vm1512
        %v1514 = vsel %vm1513, %v1506, %v1510
        %v1515 = vand.u32 2147483647, %v1436
        %vm1516 = vcmp.eq.f32.partialorder %v1515, 8.507059e+37
        %v1517 = vand.u32 %v1436, 2147483648
        %v1518 = vor.u32 1.1754944e-38, %v1517
        %v1519 = vsel %vm1516, %v1518, %v1514
        %v1520 = vmul.f32 %v1415, %v1519
        %v1521 = vrcp.pop %v1439
        %v1522 = vmul.f32 %v1439, %v1521
        %v1523 = vsub.f32 1.0, %v1522
        %v1524 = vmul.f32 %v1521, %v1523
        %v1525 = vadd.f32 %v1521, %v1524
        %vm1526 = vweird.f32 %v1439
        %vm1527 = vweird.f32 %v1521
        %vm1528 = vmor %vm1526, %vm1527
        %v1529 = vsel %vm1528, %v1521, %v1525
        %v1530 = vand.u32 2147483647, %v1439
        %vm1531 = vcmp.eq.f32.partialorder %v1530, 8.507059e+37
        %v1532 = vand.u32 %v1439, 2147483648
        %v1533 = vor.u32 1.1754944e-38, %v1532
        %v1534 = vsel %vm1531, %v1533, %v1529
        %v1535 = vmul.f32 %v1417, %v1534
        %v1536 = vrcp.pop %v1442
        %v1537 = vmul.f32 %v1442, %v1536
        %v1538 = vsub.f32 1.0, %v1537
        %v1539 = vmul.f32 %v1536, %v1538
        %v1540 = vadd.f32 %v1536, %v1539
        %vm1541 = vweird.f32 %v1442
        %vm1542 = vweird.f32 %v1536
        %vm1543 = vmor %vm1541, %vm1542
        %v1544 = vsel %vm1543, %v1536, %v1540
        %v1545 = vand.u32 2147483647, %v1442
        %vm1546 = vcmp.eq.f32.partialorder %v1545, 8.507059e+37
        %v1547 = vand.u32 %v1442, 2147483648
        %v1548 = vor.u32 1.1754944e-38, %v1547
        %v1549 = vsel %vm1546, %v1548, %v1544
        %v1550 = vmul.f32 %v1419, %v1549
        %v1551 = vrcp.pop %v1445
        %v1552 = vmul.f32 %v1445, %v1551
        %v1553 = vsub.f32 1.0, %v1552
        %v1554 = vmul.f32 %v1551, %v1553
        %v1555 = vadd.f32 %v1551, %v1554
        %vm1556 = vweird.f32 %v1445
        %vm1557 = vweird.f32 %v1551
        %vm1558 = vmor %vm1556, %vm1557
        %v1559 = vsel %vm1558, %v1551, %v1555
        %v1560 = vand.u32 2147483647, %v1445
        %vm1561 = vcmp.eq.f32.partialorder %v1560, 8.507059e+37
        %v1562 = vand.u32 %v1445, 2147483648
        %v1563 = vor.u32 1.1754944e-38, %v1562
        %v1564 = vsel %vm1561, %v1563, %v1559
        %v1565 = vmul.f32 %v1421, %v1564
        %v1566 = vpack.c.bf16 %v1460, %v1460
        %v1567 = vpack.c.bf16 %v1475, %v1475
        %v1568 = vpack.c.bf16 %v1490, %v1490
        %v1569 = vpack.c.bf16 %v1505, %v1505
        %v1570 = vpack.c.bf16 %v1520, %v1520
        %v1571 = vpack.c.bf16 %v1535, %v1535
        %v1572 = vpack.c.bf16 %v1550, %v1550
        %v1573 = vpack.c.bf16 %v1565, %v1565
        %v1576 = vunpack.c.l.b16 %v1566
        %v1577 = vunpack.c.l.b16 %v1567
        %v1578 = vpack.c.b16 %v1577, %v1576
        %v1581 = vunpack.c.l.b16 %v1244
        %v1582 = vunpack.c.l.b16 %v1245
        %v1583 = vpack.c.b16 %v1582, %v1581
        %v1586 = vsel %vm1373, %v1578, 0
        %1588 = vmatpush.bf16.msra.mxu0 0
        %1589 = vmatpush.bf16.msra.mxu0 0
        %1590 = vmatpush.bf16.msra.mxu0 0
        %1591 = vmatpush.bf16.msra.mxu0 0
        %1592 = vmatpush.bf16.msra.mxu0 0
        %1593 = vmatpush.bf16.msra.mxu0 0
        %1594 = vmatpush.bf16.msra.mxu0 0
        %1595 = vmatpush.bf16.msra.mxu0 %v1583
        %1596 = vmatmul.bf16.gmra.mxu0 %v1586
        %v1597 = vpop.f32.mrf.mxu0
        %v1598 = vadd.f32 0.0, %v1597
        %v1599 = vpop.f32.mrf.mxu0
        %v1600 = vadd.f32 0.0, %v1599
        %1601 = vdwg.mxu0
        %v1604 = vunpack.c.l.b16 %v1568
        %v1605 = vunpack.c.l.b16 %v1569
        %v1606 = vpack.c.b16 %v1605, %v1604
        %v1609 = vunpack.c.l.b16 %v1246
        %v1610 = vunpack.c.l.b16 %v1247
        %v1611 = vpack.c.b16 %v1610, %v1609
        %v1614 = vsel %vm1373, %v1606, 0
        %1616 = vmatpush.bf16.msra.mxu0 0
        %1617 = vmatpush.bf16.msra.mxu0 0
        %1618 = vmatpush.bf16.msra.mxu0 0
        %1619 = vmatpush.bf16.msra.mxu0 0
        %1620 = vmatpush.bf16.msra.mxu0 0
        %1621 = vmatpush.bf16.msra.mxu0 0
        %1622 = vmatpush.bf16.msra.mxu0 0
        %1623 = vmatpush.bf16.msra.mxu0 %v1611
        %1624 = vmatmul.bf16.gmra.mxu0 %v1614
        %v1625 = vpop.f32.mrf.mxu0
        %v1626 = vadd.f32 0.0, %v1625
        %v1627 = vpop.f32.mrf.mxu0
        %v1628 = vadd.f32 0.0, %v1627
        %1629 = vdwg.mxu0
        %v1632 = vunpack.c.l.b16 %v1570
        %v1633 = vunpack.c.l.b16 %v1571
        %v1634 = vpack.c.b16 %v1633, %v1632
        %v1637 = vunpack.c.l.b16 %v1248
        %v1638 = vunpack.c.l.b16 %v1249
        %v1639 = vpack.c.b16 %v1638, %v1637
        %v1642 = vsel %vm1373, %v1634, 0
        %1644 = vmatpush.bf16.msra.mxu0 0
        %1645 = vmatpush.bf16.msra.mxu0 0
        %1646 = vmatpush.bf16.msra.mxu0 0
        %1647 = vmatpush.bf16.msra.mxu0 0
        %1648 = vmatpush.bf16.msra.mxu0 0
        %1649 = vmatpush.bf16.msra.mxu0 0
        %1650 = vmatpush.bf16.msra.mxu0 0
        %1651 = vmatpush.bf16.msra.mxu0 %v1639
        %1652 = vmatmul.bf16.gmra.mxu0 %v1642
        %v1653 = vpop.f32.mrf.mxu0
        %v1654 = vadd.f32 0.0, %v1653
        %v1655 = vpop.f32.mrf.mxu0
        %v1656 = vadd.f32 0.0, %v1655
        %1657 = vdwg.mxu0
        %v1660 = vunpack.c.l.b16 %v1572
        %v1661 = vunpack.c.l.b16 %v1573
        %v1662 = vpack.c.b16 %v1661, %v1660
        %v1665 = vunpack.c.l.b16 %v1250
        %v1666 = vunpack.c.l.b16 %v1251
        %v1667 = vpack.c.b16 %v1666, %v1665
        %v1670 = vsel %vm1373, %v1662, 0
        %1672 = vmatpush.bf16.msra.mxu0 0
        %1673 = vmatpush.bf16.msra.mxu0 0
        %1674 = vmatpush.bf16.msra.mxu0 0
        %1675 = vmatpush.bf16.msra.mxu0 0
        %1676 = vmatpush.bf16.msra.mxu0 0
        %1677 = vmatpush.bf16.msra.mxu0 0
        %1678 = vmatpush.bf16.msra.mxu0 0
        %1679 = vmatpush.bf16.msra.mxu0 %v1667
        %1680 = vmatmul.bf16.gmra.mxu0 %v1670
        %v1681 = vpop.f32.mrf.mxu0
        %v1682 = vadd.f32 0.0, %v1681
        %v1683 = vpop.f32.mrf.mxu0
        %v1684 = vadd.f32 0.0, %v1683
        %1685 = vdwg.mxu0
        %v1686 = vrot.slane %v1654, 4
        %v1687 = vsel %vm528, %v1686, %v1598
        %v1688 = vrot.slane %v1598, 4
        %v1689 = vsel %vm528, %v1654, %v1688
        %v1691 = vunpack.c.l.s4 1983009808
        %v1692 = vunpack.c.0.s8 %v1691
        %v1693 = vperm.slane %v1687, %v1692
        %v1695 = vunpack.c.l.s4 1983009808
        %v1696 = vunpack.c.0.s8 %v1695
        %v1697 = vperm.slane %v1689, %v1696
        %v1698 = vrot.slane %v1682, 4
        %v1699 = vsel %vm528, %v1698, %v1626
        %v1700 = vrot.slane %v1626, 4
        %v1701 = vsel %vm528, %v1682, %v1700
        %v1703 = vunpack.c.l.s4 1983009808
        %v1704 = vunpack.c.0.s8 %v1703
        %v1705 = vperm.slane %v1699, %v1704
        %v1707 = vunpack.c.l.s4 1983009808
        %v1708 = vunpack.c.0.s8 %v1707
        %v1709 = vperm.slane %v1701, %v1708
        %v1710 = vrot.slane %v1705, 4
        %v1711 = vsel %vm528, %v1710, %v1693
        %v1712 = vrot.slane %v1693, 4
        %v1713 = vsel %vm528, %v1705, %v1712
        %v1715 = vunpack.c.l.s4 1934713408
        %v1716 = vunpack.c.0.s8 %v1715
        %v1717 = vperm.slane %v1711, %v1716
        %v1719 = vunpack.c.l.s4 1934713408
        %v1720 = vunpack.c.0.s8 %v1719
        %v1721 = vperm.slane %v1713, %v1720
        %v1722 = vrot.slane %v1709, 4
        %v1723 = vsel %vm528, %v1722, %v1697
        %v1724 = vrot.slane %v1697, 4
        %v1725 = vsel %vm528, %v1709, %v1724
        %v1727 = vunpack.c.l.s4 1934713408
        %v1728 = vunpack.c.0.s8 %v1727
        %v1729 = vperm.slane %v1723, %v1728
        %v1731 = vunpack.c.l.s4 1934713408
        %v1732 = vunpack.c.0.s8 %v1731
        %v1733 = vperm.slane %v1725, %v1732
        %v1734 = vrot.slane %v1717, 4
        %v1735 = vsel %vm528, 0.0, %v1734
        %v1736 = vrot.slane %v1721, 4
        %v1737 = vsel %vm528, 0.0, %v1736
        %v1738 = vrot.slane %v1729, 4
        %v1739 = vsel %vm528, 0.0, %v1738
        %v1740 = vrot.slane %v1733, 4
        %v1741 = vsel %vm528, 0.0, %v1740
        %v1742 = vrot.slane %v1656, 4
        %v1743 = vsel %vm528, %v1742, %v1600
        %v1744 = vrot.slane %v1600, 4
        %v1745 = vsel %vm528, %v1656, %v1744
        %v1747 = vunpack.c.l.s4 1983009808
        %v1748 = vunpack.c.0.s8 %v1747
        %v1749 = vperm.slane %v1743, %v1748
        %v1751 = vunpack.c.l.s4 1983009808
        %v1752 = vunpack.c.0.s8 %v1751
        %v1753 = vperm.slane %v1745, %v1752
        %v1754 = vrot.slane %v1684, 4
        %v1755 = vsel %vm528, %v1754, %v1628
        %v1756 = vrot.slane %v1628, 4
        %v1757 = vsel %vm528, %v1684, %v1756
        %v1759 = vunpack.c.l.s4 1983009808
        %v1760 = vunpack.c.0.s8 %v1759
        %v1761 = vperm.slane %v1755, %v1760
        %v1763 = vunpack.c.l.s4 1983009808
        %v1764 = vunpack.c.0.s8 %v1763
        %v1765 = vperm.slane %v1757, %v1764
        %v1766 = vrot.slane %v1761, 4
        %v1767 = vsel %vm528, %v1766, %v1749
        %v1768 = vrot.slane %v1749, 4
        %v1769 = vsel %vm528, %v1761, %v1768
        %v1771 = vunpack.c.l.s4 1934713408
        %v1772 = vunpack.c.0.s8 %v1771
        %v1773 = vperm.slane %v1767, %v1772
        %v1775 = vunpack.c.l.s4 1934713408
        %v1776 = vunpack.c.0.s8 %v1775
        %v1777 = vperm.slane %v1769, %v1776
        %v1778 = vrot.slane %v1765, 4
        %v1779 = vsel %vm528, %v1778, %v1753
        %v1780 = vrot.slane %v1753, 4
        %v1781 = vsel %vm528, %v1765, %v1780
        %v1783 = vunpack.c.l.s4 1934713408
        %v1784 = vunpack.c.0.s8 %v1783
        %v1785 = vperm.slane %v1779, %v1784
        %v1787 = vunpack.c.l.s4 1934713408
        %v1788 = vunpack.c.0.s8 %v1787
        %v1789 = vperm.slane %v1781, %v1788
        %v1790 = vrot.slane %v1773, 4
        %v1791 = vsel %vm528, 0.0, %v1790
        %v1792 = vrot.slane %v1777, 4
        %v1793 = vsel %vm528, 0.0, %v1792
        %v1794 = vrot.slane %v1785, 4
        %v1795 = vsel %vm528, 0.0, %v1794
        %v1796 = vrot.slane %v1789, 4
        %v1797 = vsel %vm528, 0.0, %v1796
        %v1798 = vsel %vm528, %v1736, %v1717
        %v1800 = vunpack.c.l.s4 1983009808
        %v1801 = vunpack.c.0.s8 %v1800
        %v1802 = vperm.slane %v1798, %v1801
        %v1803 = vrot.slane %v1737, 4
        %v1804 = vsel %vm528, %v1803, %v1735
        %v1806 = vunpack.c.l.s4 1983009808
        %v1807 = vunpack.c.0.s8 %v1806
        %v1808 = vperm.slane %v1804, %v1807
        %v1809 = vsel %vm528, %v1740, %v1729
        %v1811 = vunpack.c.l.s4 1983009808
        %v1812 = vunpack.c.0.s8 %v1811
        %v1813 = vperm.slane %v1809, %v1812
        %v1814 = vrot.slane %v1741, 4
        %v1815 = vsel %vm528, %v1814, %v1739
        %v1817 = vunpack.c.l.s4 1983009808
        %v1818 = vunpack.c.0.s8 %v1817
        %v1819 = vperm.slane %v1815, %v1818
        %v1820 = vrot.slane %v1808, 4
        %v1821 = vsel %vm528, %v1820, %v1802
        %v1822 = vrot.slane %v1802, 4
        %v1823 = vsel %vm528, %v1808, %v1822
        %v1825 = vunpack.c.l.s4 1934713408
        %v1826 = vunpack.c.0.s8 %v1825
        %v1827 = vperm.slane %v1821, %v1826
        %v1829 = vunpack.c.l.s4 1934713408
        %v1830 = vunpack.c.0.s8 %v1829
        %v1831 = vperm.slane %v1823, %v1830
        %v1832 = vrot.slane %v1819, 4
        %v1833 = vsel %vm528, %v1832, %v1813
        %v1834 = vrot.slane %v1813, 4
        %v1835 = vsel %vm528, %v1819, %v1834
        %v1837 = vunpack.c.l.s4 1934713408
        %v1838 = vunpack.c.0.s8 %v1837
        %v1839 = vperm.slane %v1833, %v1838
        %v1841 = vunpack.c.l.s4 1934713408
        %v1842 = vunpack.c.0.s8 %v1841
        %v1843 = vperm.slane %v1835, %v1842
        %v1844 = vrot.slane %v1839, 4
        %v1845 = vsel %vm528, %v1844, %v1827
        %v1846 = vrot.slane %v1827, 4
        %v1847 = vsel %vm528, %v1839, %v1846
        %v1848 = vrot.slane %v1843, 4
        %v1849 = vsel %vm528, %v1848, %v1831
        %v1850 = vrot.slane %v1831, 4
        %v1851 = vsel %vm528, %v1843, %v1850
        %v1852 = vsel %vm528, %v1792, %v1773
        %v1854 = vunpack.c.l.s4 1983009808
        %v1855 = vunpack.c.0.s8 %v1854
        %v1856 = vperm.slane %v1852, %v1855
        %v1857 = vrot.slane %v1793, 4
        %v1858 = vsel %vm528, %v1857, %v1791
        %v1860 = vunpack.c.l.s4 1983009808
        %v1861 = vunpack.c.0.s8 %v1860
        %v1862 = vperm.slane %v1858, %v1861
        %v1863 = vsel %vm528, %v1796, %v1785
        %v1865 = vunpack.c.l.s4 1983009808
        %v1866 = vunpack.c.0.s8 %v1865
        %v1867 = vperm.slane %v1863, %v1866
        %v1868 = vrot.slane %v1797, 4
        %v1869 = vsel %vm528, %v1868, %v1795
        %v1871 = vunpack.c.l.s4 1983009808
        %v1872 = vunpack.c.0.s8 %v1871
        %v1873 = vperm.slane %v1869, %v1872
        %v1874 = vrot.slane %v1862, 4
        %v1875 = vsel %vm528, %v1874, %v1856
        %v1876 = vrot.slane %v1856, 4
        %v1877 = vsel %vm528, %v1862, %v1876
        %v1879 = vunpack.c.l.s4 1934713408
        %v1880 = vunpack.c.0.s8 %v1879
        %v1881 = vperm.slane %v1875, %v1880
        %v1883 = vunpack.c.l.s4 1934713408
        %v1884 = vunpack.c.0.s8 %v1883
        %v1885 = vperm.slane %v1877, %v1884
        %v1886 = vrot.slane %v1873, 4
        %v1887 = vsel %vm528, %v1886, %v1867
        %v1888 = vrot.slane %v1867, 4
        %v1889 = vsel %vm528, %v1873, %v1888
        %v1891 = vunpack.c.l.s4 1934713408
        %v1892 = vunpack.c.0.s8 %v1891
        %v1893 = vperm.slane %v1887, %v1892
        %v1895 = vunpack.c.l.s4 1934713408
        %v1896 = vunpack.c.0.s8 %v1895
        %v1897 = vperm.slane %v1889, %v1896
        %v1898 = vrot.slane %v1893, 4
        %v1899 = vsel %vm528, %v1898, %v1881
        %v1900 = vrot.slane %v1881, 4
        %v1901 = vsel %vm528, %v1893, %v1900
        %v1902 = vrot.slane %v1897, 4
        %v1903 = vsel %vm528, %v1902, %v1885
        %v1904 = vrot.slane %v1885, 4
        %v1905 = vsel %vm528, %v1897, %v1904
        %1908 = vrot.lane.b32.xlu0 %v1847, 32
        %v1909 = vpop.permute.xlu0 %1908
        %1910 = vrot.lane.b32.xlu0 %v1901, 32
        %v1911 = vpop.permute.xlu0 %1910
        %1916 = vrot.lane.b32.xlu0 %v1849, 64
        %v1917 = vpop.permute.xlu0 %1916
        %1918 = vrot.lane.b32.xlu0 %v1903, 64
        %v1919 = vpop.permute.xlu0 %1918
        %1924 = vrot.lane.b32.xlu0 %v1851, 96
        %v1925 = vpop.permute.xlu0 %1924
        %1926 = vrot.lane.b32.xlu0 %v1905, 96
        %v1927 = vpop.permute.xlu0 %1926
        %v1930 = vsel %vm1262, %v1845, %v1909
        %v1931 = vsel %vm1262, %v1899, %v1911
        %vm1932 = vcmask 523264
        %v1933 = vsel %vm1932, %v1930, %v1917
        %v1934 = vsel %vm1932, %v1931, %v1919
        %vm1935 = vcmask 785408
        %v1936 = vsel %vm1935, %v1933, %v1925
        %v1937 = vsel %vm1935, %v1934, %v1927
        %v1938 = vpack.c.bf16 %v1937, %v1936
        %v1939 = vld [vmem:[#allocation8] sm:$0xf]
        %v1940 = vld [vmem:[#allocation8 + $0x4] sm:$0xf]
        %v1941 = vld [vmem:[#allocation8 + $0x8] sm:$0xf]
        %v1942 = vld [vmem:[#allocation8 + $0xc] sm:$0xf]
        %v1943 = vld [vmem:[#allocation8 + $0x10] sm:$0xf]
        %v1944 = vld [vmem:[#allocation8 + $0x14] sm:$0xf]
        %v1945 = vld [vmem:[#allocation8 + $0x18] sm:$0xf]
        %v1946 = vld [vmem:[#allocation8 + $0x1c] sm:$0xf]
        %v1947 = vld [vmem:[#allocation8 + $0x20] sm:$0xf]
        %v1948 = vld [vmem:[#allocation8 + $0x24] sm:$0xf]
        %v1949 = vld [vmem:[#allocation8 + $0x28] sm:$0xf]
        %v1950 = vld [vmem:[#allocation8 + $0x2c] sm:$0xf]
        %v1951 = vld [vmem:[#allocation8 + $0x30] sm:$0xf]
        %v1952 = vld [vmem:[#allocation8 + $0x34] sm:$0xf]
        %v1953 = vld [vmem:[#allocation8 + $0x38] sm:$0xf]
        %v1954 = vld [vmem:[#allocation8 + $0x3c] sm:$0xf]
        %v1955 = vld [vmem:[%s4] sm:$0x1]
        %v1957 = vperm.slane %v1955, 0
        %v1975 = vunpack.c.l.b16 %v1939
        %v1976 = vunpack.c.l.b16 %v1940
        %v1977 = vunpack.c.l.b16 %v1941
        %v1978 = vunpack.c.l.b16 %v1942
        %v1979 = vunpack.c.l.b16 %v1943
        %v1980 = vunpack.c.l.b16 %v1944
        %v1981 = vunpack.c.l.b16 %v1945
        %v1982 = vunpack.c.l.b16 %v1946
        %v1983 = vunpack.c.l.b16 %v1947
        %v1984 = vunpack.c.l.b16 %v1948
        %v1985 = vunpack.c.l.b16 %v1949
        %v1986 = vunpack.c.l.b16 %v1950
        %v1987 = vunpack.c.l.b16 %v1951
        %v1988 = vunpack.c.l.b16 %v1952
        %v1989 = vunpack.c.l.b16 %v1953
        %v1990 = vunpack.c.l.b16 %v1954
        %v1991 = vpack.c.b16 %v1976, %v1975
        %v1992 = vpack.c.b16 %v1978, %v1977
        %v1993 = vpack.c.b16 %v1980, %v1979
        %v1994 = vpack.c.b16 %v1982, %v1981
        %v1995 = vpack.c.b16 %v1984, %v1983
        %v1996 = vpack.c.b16 %v1986, %v1985
        %v1997 = vpack.c.b16 %v1988, %v1987
        %v1998 = vpack.c.b16 %v1990, %v1989
        %2007 = vmatpush.bf16.msra.mxu0 %v1998
        %2008 = vmatpush.bf16.msra.mxu0 %v1997
        %2009 = vmatpush.bf16.msra.mxu0 %v1996
        %2010 = vmatpush.bf16.msra.mxu0 %v1995
        %2011 = vmatpush.bf16.msra.mxu0 %v1994
        %2012 = vmatpush.bf16.msra.mxu0 %v1993
        %2013 = vmatpush.bf16.msra.mxu0 %v1992
        %2014 = vmatpush.bf16.msra.mxu0 %v1991
        %2015 = vmatmul.bf16.gmra.mxu0 %v1938
        %v2016 = vpop.f32.mrf.mxu0
        %v2017 = vadd.f32 %v1957, %v2016
        %v2018 = vpop.f32.mrf.mxu0
        %v2019 = vadd.f32 %v1957, %v2018
        %2020 = vdwg.mxu0
        %2021 = vst [vmem:[%s292] sm:$0xff] %v2017
        %2022 = vst [vmem:[%s292 + $0x8] sm:$0xff] %v2019
        %s2023 = sand.u32 %s142, 1
        %s2024 = scalar_lea.sflag [#allocation4], %s2023
        %s2025 = sand.u32 %s142, 1
        %s2026 = smul.addr %s2025, 16
        %s2027 = scalar_lea.vmem [#allocation10], %s2026
        // Predicated region
        $region57: #{tpu_custom_call.1} parent=39 // pred_check
          %p2028 = pneg %p152
        $region58: #{tpu_custom_call.1} parent=39 // pred_check_branch
          %2030 = sbr.rel (%p2028) target = $region60
        $region59: #{tpu_custom_call.1} parent=39 // pred_region
          %2032 = vsyncadd %s2024, 0
          %s2033 = smul.addr %s24, 2
          %s2034 = smul.addr %s2033, 8
          %s2035 = scalar_lea.hbm %s5, %s2034
          %s2036 = sshll.u32 %s2027, 4
          %s2037 = int_to_ptr.vmem [resolvable:$true] %s2036
          %s2038 = sshll.u32 %s2035, 4
          %s2039 = int_to_ptr.hbm [resolvable:$true] %s2038
          %2044 = dma.vmem_to_hbm [thread:$0]  %s2037, 256, %s2039, %s2024, 128, 128, 8
        $region60: #{tpu_custom_call.1} parent=39 // pred_fallthru
          _
      $region40: #{tpu_custom_call.1} parent=5 // pred_fallthru
        _
      %p2045 = scmp.le.s32.totalorder 2, %s19
      // Predicated region
      $region61: #{tpu_custom_call.1} parent=5 // pred_check
        %p2046 = pneg %p2045
      $region62: #{tpu_custom_call.1} parent=5 // pred_check_branch
        %2048 = sbr.rel (%p2046) target = $region64
      $region63: #{tpu_custom_call.1} parent=5 // pred_region
        %s2049 = ssub.s32 %s19, 2
        // Predicated region
        $region65: #{tpu_custom_call.1} parent=63 // pred_check
          %p2050 = pneg %p158
        $region66: #{tpu_custom_call.1} parent=63 // pred_check_branch
          %2052 = sbr.rel (%p2050) target = $region68
        $region67: #{tpu_custom_call.1} parent=63 // pred_region
          %s2053 = sand.u32 %s143, 1
          %s2054 = scalar_lea.sflag [#allocation4], %s2053
          %s2055 = sand.u32 %s143, 1
          %s2056 = smul.addr %s2055, 16
          %s2057 = scalar_lea.vmem [#allocation10], %s2056
          %2059 = dma.done %s2054, 256
        $region68: #{tpu_custom_call.1} parent=63 // pred_fallthru
          _
      $region64: #{tpu_custom_call.1} parent=5 // pred_fallthru
        _
    $region6: #{tpu_custom_call.1} parent=1 // loop_footer
      %s23 = sadd.s32 1, %s19
    $region7: #{tpu_custom_call.1} parent=1 // loop_footer_branch
      %18 = sbr.rel target = $region3
    $region8: #{tpu_custom_call.1} parent=1 // loop_exit
      _
    %2060 = vsyncpa [#allocation3], 1
    %s2061 = scalar_lea.sflag [#allocation3], 1
    %2062 = vsyncpa %s2061, 1
    %2063 = vsyncpa [#allocation6], 1
    %2064 = vsyncpa [#allocation9], 1
    %2065 = vsyncpa [#allocation4], 1
    %s2066 = scalar_lea.sflag [#allocation4], 1
    %2067 = vsyncpa %s2066, 1

// kernel: tpu_custom_call.1
$region0: #{tpu_custom_call.1}
  #allocation0 [shape = 'u32[]', space=smem, size = 0x4, offset = 0x4, fixed_abs, tag = 'smem constant byte address 0x4 - core index']
  #allocation1 [shape = 'u32[72,128]{1,0:T(1,128)}', space=vmem, size = 0x9000, scoped, tag = 'internal scratch']
  %s0 = inlined_call_operand.hbm [shape: f32[2,16,128], index: 0, kind: input, shape index: {}]
  %s1 = inlined_call_operand.hbm [shape: bf16[128,384], index: 1, kind: input, shape index: {}]
  %s2 = inlined_call_operand.hbm [shape: f32[1,384], index: 2, kind: input, shape index: {}]
  %s3 = inlined_call_operand.hbm [shape: bf16[128,128], index: 3, kind: input, shape index: {}]
  %s4 = inlined_call_operand.vmem [shape: f32[1,128], index: 4, kind: input, shape index: {}]
  %s5 = inlined_call_operand.hbm [shape: f32[2,16,128], index: 5, kind: output, shape index: {}]
  %s6 = sld [smem:[#allocation0]]
  $region69: #{tpu_custom_call.1} parent=0
    _
  %s8 = ssub.s32 1, %s6
  %s9 = scalar_select 0, %s8, %s6
  $region1: #{tpu_custom_call.1} parent=0
    #allocation2 [shape = 'u8[16384]{0}', space=vmem, size = 0x4000, scoped, tag = 'input window, operand 0']
    #allocation3 [shape = 's32[2]{0}', space=sflag, size = 0x8, scoped, tag = 'scoped memory for tpu_custom_call.1']
    #allocation4 [shape = 's32[2]{0}', space=sflag, size = 0x8, scoped, tag = 'scoped memory for tpu_custom_call.1']
    #allocation5 [shape = 'u8[98304]{0}', space=vmem, size = 0x18000, scoped, tag = 'input window, operand 1, single buffered']
    #allocation6 [shape = 's32[1]{0}', space=sflag, size = 0x4, scoped, tag = 'scoped memory for tpu_custom_call.1']
    #allocation7 [shape = 'u8[1536]{0}', space=vmem, size = 0x800, scoped, tag = 'input window, operand 2, single buffered']
    #allocation8 [shape = 'u8[32768]{0}', space=vmem, size = 0x8000, scoped, tag = 'input window, operand 3, single buffered']
    #allocation9 [shape = 's32[1]{0}', space=sflag, size = 0x4, scoped, tag = 'scoped memory for tpu_custom_call.1']
    #allocation10 [shape = 'u8[16384]{0}', space=vmem, size = 0x4000, scoped, tag = 'output window, operand 0']
    %10 = vsyncpa [#allocation3], 0
    %s11 = scalar_lea.sflag [#allocation3], 1
    %12 = vsyncpa %s11, 0
    %13 = vsyncpa [#allocation6], 0
    %14 = vsyncpa [#allocation9], 0
    %15 = vsyncpa [#allocation4], 0
    %s16 = scalar_lea.sflag [#allocation4], 1
    %17 = vsyncpa %s16, 0
    loop: start=0, step=1, limit=4
    $region2: #{tpu_custom_call.1} parent=1 // loop_pre_header
      _
    $region3: #{tpu_custom_call.1} parent=1 // loop_header
      %s19 = sphi 0, %s23
      %p20 = scmp.ge.s32.totalorder %s19, 4
      %s29 = sphi 0, %s31
      %s32 = sphi 0, %s29
      %s33 = sphi 0, %s32
      %s49 = sphi 0, %s33
      %s53 = sphi 0, %s53
      %s55 = sphi 0, %s53
      %s56 = sphi 0, %s55
      %s70 = sphi 0, %s56
      %s74 = sphi 0, %s74
      %s76 = sphi 0, %s74
      %s77 = sphi 0, %s76
      %s91 = sphi 0, %s77
      %s95 = sphi 0, %s95
      %s97 = sphi 0, %s95
      %s98 = sphi 0, %s97
      %s112 = sphi 0, %s98
      %s116 = sphi 0, %s116
      %s118 = sphi 0, %s116
      %s119 = sphi 0, %s118
      %s133 = sphi 0, %s119
      %s139 = sphi 0, %s141
      %s142 = sphi 0, %s139
      %s143 = sphi 0, %s142
      %s159 = sphi 0, %s143
    $region4: #{tpu_custom_call.1} parent=1 // loop_header_branch
      %22 = sbr.rel (%p20) target = $region8
    $region5: #{tpu_custom_call.1} parent=1 // loop_body
      %s24 = ssub.s32 %s19, 1
      %s25 = ssub.s32 %s19, 2
      %s26 = sadd.s32 %s19, 1
      %s27 = ssub.s32 %s19, %s26
      %p28 = scmp.eq.s32.totalorder %s27, 0
      %s30 = sadd.s32 %s29, 1
      %s31 = scalar_select %p28, %s29, %s30
      %p34 = pneg %p28
      %p35 = scmp.eq.s32.totalorder %s19, 1
      %p36 = por %p34, %p35
      %p37 = scmp.ne.s32.totalorder %s29, %s32
      %p38 = scmp.eq.s32.totalorder %s19, 0
      %p39 = por %p37, %p38
      %p40 = scmp.ne.s32.totalorder %s29, %s32
      %p41 = scmp.eq.s32.totalorder %s24, 1
      %p42 = por %p40, %p41
      %p43 = scmp.ne.s32.totalorder %s32, %s33
      %p44 = scmp.eq.s32.totalorder %s24, 0
      %p45 = por %p43, %p44
      %p46 = scmp.ne.s32.totalorder %s32, %s33
      %p47 = scmp.eq.s32.totalorder %s25, 1
      %p48 = por %p46, %p47
      %p50 = scmp.ne.s32.totalorder %s33, %s49
      %p51 = scmp.eq.s32.totalorder %s25, 0
      %p52 = por %p50, %p51
      %s54 = sadd.s32 %s53, 1
      %p57 = scmp.eq.s32.totalorder %s19, 1
      %p58 = scmp.ne.s32.totalorder %s53, %s55
      %p59 = scmp.eq.s32.totalorder %s19, 0
      %p60 = por %p58, %p59
      %p61 = scmp.ne.s32.totalorder %s53, %s55
      %p62 = scmp.eq.s32.totalorder %s24, 1
      %p63 = por %p61, %p62
      %p64 = scmp.ne.s32.totalorder %s55, %s56
      %p65 = scmp.eq.s32.totalorder %s24, 0
      %p66 = por %p64, %p65
      %p67 = scmp.ne.s32.totalorder %s55, %s56
      %p68 = scmp.eq.s32.totalorder %s25, 1
      %p69 = por %p67, %p68
      %p71 = scmp.ne.s32.totalorder %s56, %s70
      %p72 = scmp.eq.s32.totalorder %s25, 0
      %p73 = por %p71, %p72
      %s75 = sadd.s32 %s74, 1
      %p78 = scmp.eq.s32.totalorder %s19, 1
      %p79 = scmp.ne.s32.totalorder %s74, %s76
      %p80 = scmp.eq.s32.totalorder %s19, 0
      %p81 = por %p79, %p80
      %p82 = scmp.ne.s32.totalorder %s74, %s76
      %p83 = scmp.eq.s32.totalorder %s24, 1
      %p84 = por %p82, %p83
      %p85 = scmp.ne.s32.totalorder %s76, %s77
      %p86 = scmp.eq.s32.totalorder %s24, 0
      %p87 = por %p85, %p86
      %p88 = scmp.ne.s32.totalorder %s76, %s77
      %p89 = scmp.eq.s32.totalorder %s25, 1
      %p90 = por %p88, %p89
      %p92 = scmp.ne.s32.totalorder %s77, %s91
      %p93 = scmp.eq.s32.totalorder %s25, 0
      %p94 = por %p92, %p93
      %s96 = sadd.s32 %s95, 1
      %p99 = scmp.eq.s32.totalorder %s19, 1
      %p100 = scmp.ne.s32.totalorder %s95, %s97
      %p101 = scmp.eq.s32.totalorder %s19, 0
      %p102 = por %p100, %p101
      %p103 = scmp.ne.s32.totalorder %s95, %s97
      %p104 = scmp.eq.s32.totalorder %s24, 1
      %p105 = por %p103, %p104
      %p106 = scmp.ne.s32.totalorder %s97, %s98
      %p107 = scmp.eq.s32.totalorder %s24, 0
      %p108 = por %p106, %p107
      %p109 = scmp.ne.s32.totalorder %s97, %s98
      %p110 = scmp.eq.s32.totalorder %s25, 1
      %p111 = por %p109, %p110
      %p113 = scmp.ne.s32.totalorder %s98, %s112
      %p114 = scmp.eq.s32.totalorder %s25, 0
      %p115 = por %p113, %p114
      %s117 = sadd.s32 %s116, 1
      %p120 = scmp.eq.s32.totalorder %s19, 1
      %p121 = scmp.ne.s32.totalorder %s116, %s118
      %p122 = scmp.eq.s32.totalorder %s19, 0
      %p123 = por %p121, %p122
      %p124 = scmp.ne.s32.totalorder %s116, %s118
      %p125 = scmp.eq.s32.totalorder %s24, 1
      %p126 = por %p124, %p125
      %p127 = scmp.ne.s32.totalorder %s118, %s119
      %p128 = scmp.eq.s32.totalorder %s24, 0
      %p129 = por %p127, %p128
      %p130 = scmp.ne.s32.totalorder %s118, %s119
      %p131 = scmp.eq.s32.totalorder %s25, 1
      %p132 = por %p130, %p131
      %p134 = scmp.ne.s32.totalorder %s119, %s133
      %p135 = scmp.eq.s32.totalorder %s25, 0
      %p136 = por %p134, %p135
      %s137 = ssub.s32 %s19, %s26
      %p138 = scmp.eq.s32.totalorder %s137, 0
      %s140 = sadd.s32 %s139, 1
      %s141 = scalar_select %p138, %s139, %s140
      %p144 = pneg %p138
      %p145 = scmp.eq.s32.totalorder %s19, 1
      %p146 = por %p144, %p145
      %p147 = scmp.ne.s32.totalorder %s139, %s142
      %p148 = scmp.eq.s32.totalorder %s19, 0
      %p149 = por %p147, %p148
      %p150 = scmp.ne.s32.totalorder %s139, %s142
      %p151 = scmp.eq.s32.totalorder %s24, 1
      %p152 = por %p150, %p151
      %p153 = scmp.ne.s32.totalorder %s142, %s143
      %p154 = scmp.eq.s32.totalorder %s24, 0
      %p155 = por %p153, %p154
      %p156 = scmp.ne.s32.totalorder %s142, %s143
      %p157 = scmp.eq.s32.totalorder %s25, 1
      %p158 = por %p156, %p157
      %p160 = scmp.ne.s32.totalorder %s143, %s159
      %p161 = scmp.eq.s32.totalorder %s25, 0
      %p162 = por %p160, %p161
      %p163 = scmp.le.s32.totalorder 1, %s19
      %p164 = scmp.lt.s32.totalorder %s19, 3
      %p165 = pnand %p163, %p164
      %p166 = pneg %p165
      // Predicated region
      $region9: #{tpu_custom_call.1} parent=5 // pred_check
        _
      $region10: #{tpu_custom_call.1} parent=5 // pred_check_branch
        %168 = sbr.rel (%p165) target = $region12
      $region11: #{tpu_custom_call.1} parent=5 // pred_region
        %s169 = ssub.s32 %s19, 1
        // Predicated region
        $region13: #{tpu_custom_call.1} parent=11 // pred_check
          %p170 = pneg %p66
        $region14: #{tpu_custom_call.1} parent=11 // pred_check_branch
          %172 = sbr.rel (%p170) target = $region16
        $region15: #{tpu_custom_call.1} parent=11 // pred_region
          %174 = vsyncadd [#allocation6], 0
          %s175 = sshll.u32 %s1, 4
          %s176 = int_to_ptr.hbm [resolvable:$true] %s175
          %s177 = sshll.u32 [#allocation5], 4
          %s178 = int_to_ptr.vmem [resolvable:$true] %s177
          %183 = dma.hbm_to_vmem [thread:$0]  %s176, 3072, %s178, [#allocation6], 192, 192, 12
        $region16: #{tpu_custom_call.1} parent=11 // pred_fallthru
          _
        // Predicated region
        $region17: #{tpu_custom_call.1} parent=11 // pred_check
          %p184 = pneg %p87
        $region18: #{tpu_custom_call.1} parent=11 // pred_check_branch
          %186 = sbr.rel (%p184) target = $region20
        $region19: #{tpu_custom_call.1} parent=11 // pred_region
          %188 = vsyncadd [#allocation6], 0
          %s190 = sshll.u32 %s2, 4
          %s191 = int_to_ptr.hbm [resolvable:$true] %s190
          %s192 = sshll.u32 [#allocation7], 4
          %s193 = int_to_ptr.vmem [resolvable:$true] %s192
          %195 = dma.hbm_to_vmem [thread:$0]  %s191, 48, %s193, [#allocation6]
        $region20: #{tpu_custom_call.1} parent=11 // pred_fallthru
          _
        // Predicated region
        $region21: #{tpu_custom_call.1} parent=11 // pred_check
          %p196 = pneg %p108
        $region22: #{tpu_custom_call.1} parent=11 // pred_check_branch
          %198 = sbr.rel (%p196) target = $region24
        $region23: #{tpu_custom_call.1} parent=11 // pred_region
          %200 = vsyncadd [#allocation9], 0
          %s201 = sshll.u32 %s3, 4
          %s202 = int_to_ptr.hbm [resolvable:$true] %s201
          %s203 = sshll.u32 [#allocation8], 4
          %s204 = int_to_ptr.vmem [resolvable:$true] %s203
          %209 = dma.hbm_to_vmem [thread:$0]  %s202, 1024, %s204, [#allocation9], 64, 64, 4
        $region24: #{tpu_custom_call.1} parent=11 // pred_fallthru
          _
        // Predicated region
        $region25: #{tpu_custom_call.1} parent=11 // pred_check
          %p210 = pneg %p129
        $region26: #{tpu_custom_call.1} parent=11 // pred_check_branch
          %212 = sbr.rel (%p210) target = $region28
        $region27: #{tpu_custom_call.1} parent=11 // pred_region
          _
        $region28: #{tpu_custom_call.1} parent=11 // pred_fallthru
          _
      $region12: #{tpu_custom_call.1} parent=5 // pred_fallthru
        _
      %p213 = scmp.lt.s32.totalorder %s19, 2
      // Predicated region
      $region29: #{tpu_custom_call.1} parent=5 // pred_check
        %p214 = pneg %p213
      $region30: #{tpu_custom_call.1} parent=5 // pred_check_branch
        %216 = sbr.rel (%p214) target = $region32
      $region31: #{tpu_custom_call.1} parent=5 // pred_region
        // Predicated region
        $region33: #{tpu_custom_call.1} parent=31 // pred_check
          %p217 = pneg %p39
        $region34: #{tpu_custom_call.1} parent=31 // pred_check_branch
          %219 = sbr.rel (%p217) target = $region36
        $region35: #{tpu_custom_call.1} parent=31 // pred_region
          %s220 = sand.u32 %s29, 1
          %s221 = scalar_lea.sflag [#allocation3], %s220
          %s222 = sand.u32 %s29, 1
          %s223 = smul.addr %s222, 16
          %s224 = scalar_lea.vmem [#allocation2], %s223
          %226 = vsyncadd %s221, 0
          %s227 = smul.addr %s19, 2
          %s228 = smul.addr %s227, 8
          %s229 = scalar_lea.hbm %s0, %s228
          %s230 = sshll.u32 %s229, 4
          %s231 = int_to_ptr.hbm [resolvable:$true] %s230
          %s232 = sshll.u32 %s224, 4
          %s233 = int_to_ptr.vmem [resolvable:$true] %s232
          %238 = dma.hbm_to_vmem [thread:$0]  %s231, 256, %s233, %s221, 128, 128, 8
        $region36: #{tpu_custom_call.1} parent=31 // pred_fallthru
          _
      $region32: #{tpu_custom_call.1} parent=5 // pred_fallthru
        _
      %p239 = scmp.le.s32.totalorder 1, %s19
      %p240 = scmp.lt.s32.totalorder %s19, 3
      %p241 = pnand %p239, %p240
      %p242 = pneg %p241
      // Predicated region
      $region37: #{tpu_custom_call.1} parent=5 // pred_check
        _
      $region38: #{tpu_custom_call.1} parent=5 // pred_check_branch
        %244 = sbr.rel (%p241) target = $region40
      $region39: #{tpu_custom_call.1} parent=5 // pred_region
        %s245 = ssub.s32 %s19, 1
        %s246 = sand.u32 %s32, 1
        %s247 = scalar_lea.sflag [#allocation3], %s246
        %s248 = sand.u32 %s32, 1
        %s249 = smul.addr %s248, 16
        %s250 = scalar_lea.vmem [#allocation2], %s249
        // Predicated region
        $region41: #{tpu_custom_call.1} parent=39 // pred_check
          %p251 = pneg %p45
        $region42: #{tpu_custom_call.1} parent=39 // pred_check_branch
          %253 = sbr.rel (%p251) target = $region44
        $region43: #{tpu_custom_call.1} parent=39 // pred_region
          %255 = dma.done %s247, 256
        $region44: #{tpu_custom_call.1} parent=39 // pred_fallthru
          _
        // Predicated region
        $region45: #{tpu_custom_call.1} parent=39 // pred_check
          %p256 = pneg %p66
        $region46: #{tpu_custom_call.1} parent=39 // pred_check_branch
          %258 = sbr.rel (%p256) target = $region48
        $region47: #{tpu_custom_call.1} parent=39 // pred_region
          %260 = dma.done [#allocation6], 3072
        $region48: #{tpu_custom_call.1} parent=39 // pred_fallthru
          _
        // Predicated region
        $region49: #{tpu_custom_call.1} parent=39 // pred_check
          %p261 = pneg %p87
        $region50: #{tpu_custom_call.1} parent=39 // pred_check_branch
          %263 = sbr.rel (%p261) target = $region52
        $region51: #{tpu_custom_call.1} parent=39 // pred_region
          %265 = dma.done [#allocation6], 48
        $region52: #{tpu_custom_call.1} parent=39 // pred_fallthru
          _
        // Predicated region
        $region53: #{tpu_custom_call.1} parent=39 // pred_check
          %p266 = pneg %p108
        $region54: #{tpu_custom_call.1} parent=39 // pred_check_branch
          %268 = sbr.rel (%p266) target = $region56
        $region55: #{tpu_custom_call.1} parent=39 // pred_region
          %270 = dma.done [#allocation9], 1024
        $region56: #{tpu_custom_call.1} parent=39 // pred_fallthru
          _
        %s271 = sand.u32 %s32, 1
        %s272 = scalar_lea.sflag [#allocation3], %s271
        %s273 = sand.u32 %s32, 1
        %s274 = smul.addr %s273, 16
        %s275 = scalar_lea.vmem [#allocation2], %s274
        %p276 = pneg %p45
        %p277 = pneg %p42
        %p278 = pneg %p66
        %p279 = pneg %p63
        %p280 = pneg %p87
        %p281 = pneg %p84
        %p282 = pneg %p108
        %p283 = pneg %p105
        %p284 = pneg %p129
        %p285 = pneg %p126
        %p286 = pneg %p155
        %p287 = pneg %p152
        %s288 = sand.u32 %s142, 1
        %s289 = scalar_lea.sflag [#allocation4], %s288
        %s290 = sand.u32 %s142, 1
        %s291 = smul.addr %s290, 16
        %s292 = scalar_lea.vmem [#allocation10], %s291
        %v294 = vld [vmem:[%s250] sm:$0xff]
        %v295 = vld [vmem:[%s250 + $0x8] sm:$0xff]
        %v296 = vpack.c.bf16 %v295, %v294
        %v297 = vld [vmem:[#allocation5] sm:$0xff]
        %v298 = vld [vmem:[#allocation5 + $0x8] sm:$0xf]
        %v299 = vld [vmem:[#allocation5 + $0xc] sm:$0xff]
        %v300 = vld [vmem:[#allocation5 + $0x14] sm:$0xf]
        %v301 = vld [vmem:[#allocation5 + $0x18] sm:$0xff]
        %v302 = vld [vmem:[#allocation5 + $0x20] sm:$0xf]
        %v303 = vld [vmem:[#allocation5 + $0x24] sm:$0xff]
        %v304 = vld [vmem:[#allocation5 + $0x2c] sm:$0xf]
        %v305 = vld [vmem:[#allocation5 + $0x30] sm:$0xff]
        %v306 = vld [vmem:[#allocation5 + $0x38] sm:$0xf]
        %v307 = vld [vmem:[#allocation5 + $0x3c] sm:$0xff]
        %v308 = vld [vmem:[#allocation5 + $0x44] sm:$0xf]
        %v309 = vld [vmem:[#allocation5 + $0x48] sm:$0xff]
        %v310 = vld [vmem:[#allocation5 + $0x50] sm:$0xf]
        %v311 = vld [vmem:[#allocation5 + $0x54] sm:$0xff]
        %v312 = vld [vmem:[#allocation5 + $0x5c] sm:$0xf]
        %v313 = vld [vmem:[#allocation5 + $0x60] sm:$0xff]
        %v314 = vld [vmem:[#allocation5 + $0x68] sm:$0xf]
        %v315 = vld [vmem:[#allocation5 + $0x6c] sm:$0xff]
        %v316 = vld [vmem:[#allocation5 + $0x74] sm:$0xf]
        %v317 = vld [vmem:[#allocation5 + $0x78] sm:$0xff]
        %v318 = vld [vmem:[#allocation5 + $0x80] sm:$0xf]
        %v319 = vld [vmem:[#allocation5 + $0x84] sm:$0xff]
        %v320 = vld [vmem:[#allocation5 + $0x8c] sm:$0xf]
        %v321 = vld [vmem:[#allocation5 + $0x90] sm:$0xff]
        %v322 = vld [vmem:[#allocation5 + $0x98] sm:$0xf]
        %v323 = vld [vmem:[#allocation5 + $0x9c] sm:$0xff]
        %v324 = vld [vmem:[#allocation5 + $0xa4] sm:$0xf]
        %v325 = vld [vmem:[#allocation5 + $0xa8] sm:$0xff]
        %v326 = vld [vmem:[#allocation5 + $0xb0] sm:$0xf]
        %v327 = vld [vmem:[#allocation5 + $0xb4] sm:$0xff]
        %v328 = vld [vmem:[#allocation5 + $0xbc] sm:$0xf]
        %v329 = vld [vmem:[#allocation7] sm:$0x7]
        %v331 = vperm.slane %v329, 0
        %v332 = vperm.slane %v329, 1
        %v333 = vperm.slane %v329, 2
        %v369 = vunpack.c.l.b16 %v297
        %v370 = vunpack.c.h.b16 %v297
        %v371 = vunpack.c.l.b16 %v298
        %v372 = vunpack.c.l.b16 %v299
        %v373 = vunpack.c.h.b16 %v299
        %v374 = vunpack.c.l.b16 %v300
        %v375 = vunpack.c.l.b16 %v301
        %v376 = vunpack.c.h.b16 %v301
        %v377 = vunpack.c.l.b16 %v302
        %v378 = vunpack.c.l.b16 %v303
        %v379 = vunpack.c.h.b16 %v303
        %v380 = vunpack.c.l.b16 %v304
        %v381 = vunpack.c.l.b16 %v305
        %v382 = vunpack.c.h.b16 %v305
        %v383 = vunpack.c.l.b16 %v306
        %v384 = vunpack.c.l.b16 %v307
        %v385 = vunpack.c.h.b16 %v307
        %v386 = vunpack.c.l.b16 %v308
        %v387 = vunpack.c.l.b16 %v309
        %v388 = vunpack.c.h.b16 %v309
        %v389 = vunpack.c.l.b16 %v310
        %v390 = vunpack.c.l.b16 %v311
        %v391 = vunpack.c.h.b16 %v311
        %v392 = vunpack.c.l.b16 %v312
        %v393 = vunpack.c.l.b16 %v313
        %v394 = vunpack.c.h.b16 %v313
        %v395 = vunpack.c.l.b16 %v314
        %v396 = vunpack.c.l.b16 %v315
        %v397 = vunpack.c.h.b16 %v315
        %v398 = vunpack.c.l.b16 %v316
        %v399 = vunpack.c.l.b16 %v317
        %v400 = vunpack.c.h.b16 %v317
        %v401 = vunpack.c.l.b16 %v318
        %v402 = vunpack.c.l.b16 %v319
        %v403 = vunpack.c.h.b16 %v319
        %v404 = vunpack.c.l.b16 %v320
        %v405 = vunpack.c.l.b16 %v321
        %v406 = vunpack.c.h.b16 %v321
        %v407 = vunpack.c.l.b16 %v322
        %v408 = vunpack.c.l.b16 %v323
        %v409 = vunpack.c.h.b16 %v323
        %v410 = vunpack.c.l.b16 %v324
        %v411 = vunpack.c.l.b16 %v325
        %v412 = vunpack.c.h.b16 %v325
        %v413 = vunpack.c.l.b16 %v326
        %v414 = vunpack.c.l.b16 %v327
        %v415 = vunpack.c.h.b16 %v327
        %v416 = vunpack.c.l.b16 %v328
        %v417 = vpack.c.b16 %v372, %v369
        %v418 = vpack.c.b16 %v373, %v370
        %v419 = vpack.c.b16 %v374, %v371
        %v420 = vpack.c.b16 %v378, %v375
        %v421 = vpack.c.b16 %v379, %v376
        %v422 = vpack.c.b16 %v380, %v377
        %v423 = vpack.c.b16 %v384, %v381
        %v424 = vpack.c.b16 %v385, %v382
        %v425 = vpack.c.b16 %v386, %v383
        %v426 = vpack.c.b16 %v390, %v387
        %v427 = vpack.c.b16 %v391, %v388
        %v428 = vpack.c.b16 %v392, %v389
        %v429 = vpack.c.b16 %v396, %v393
        %v430 = vpack.c.b16 %v397, %v394
        %v431 = vpack.c.b16 %v398, %v395
        %v432 = vpack.c.b16 %v402, %v399
        %v433 = vpack.c.b16 %v403, %v400
        %v434 = vpack.c.b16 %v404, %v401
        %v435 = vpack.c.b16 %v408, %v405
        %v436 = vpack.c.b16 %v409, %v406
        %v437 = vpack.c.b16 %v410, %v407
        %v438 = vpack.c.b16 %v414, %v411
        %v439 = vpack.c.b16 %v415, %v412
        %v440 = vpack.c.b16 %v416, %v413
        %465 = vmatpush.bf16.msra.mxu0 %v438
        %466 = vmatpush.bf16.msra.mxu0 %v435
        %467 = vmatpush.bf16.msra.mxu0 %v432
        %468 = vmatpush.bf16.msra.mxu0 %v429
        %469 = vmatpush.bf16.msra.mxu0 %v426
        %470 = vmatpush.bf16.msra.mxu0 %v423
        %471 = vmatpush.bf16.msra.mxu0 %v420
        %472 = vmatpush.bf16.msra.mxu0 %v417
        %473 = vmatmul.bf16.gmra.mxu0 %v296
        %v474 = vpop.f32.mrf.mxu0
        %v475 = vadd.f32 %v331, %v474
        %v476 = vpop.f32.mrf.mxu0
        %v477 = vadd.f32 %v331, %v476
        %478 = vdwg.mxu0
        %479 = vmatpush.bf16.msra.mxu0 %v439
        %480 = vmatpush.bf16.msra.mxu0 %v436
        %481 = vmatpush.bf16.msra.mxu0 %v433
        %482 = vmatpush.bf16.msra.mxu0 %v430
        %483 = vmatpush.bf16.msra.mxu0 %v427
        %484 = vmatpush.bf16.msra.mxu0 %v424
        %485 = vmatpush.bf16.msra.mxu0 %v421
        %486 = vmatpush.bf16.msra.mxu0 %v418
        %487 = vmatmul.bf16.gmra.mxu0 %v296
        %v488 = vpop.f32.mrf.mxu0
        %v489 = vadd.f32 %v332, %v488
        %v490 = vpop.f32.mrf.mxu0
        %v491 = vadd.f32 %v332, %v490
        %492 = vdwg.mxu0
        %493 = vmatpush.bf16.msra.mxu0 %v440
        %494 = vmatpush.bf16.msra.mxu0 %v437
        %495 = vmatpush.bf16.msra.mxu0 %v434
        %496 = vmatpush.bf16.msra.mxu0 %v431
        %497 = vmatpush.bf16.msra.mxu0 %v428
        %498 = vmatpush.bf16.msra.mxu0 %v425
        %499 = vmatpush.bf16.msra.mxu0 %v422
        %500 = vmatpush.bf16.msra.mxu0 %v419
        %501 = vmatmul.bf16.gmra.mxu0 %v296
        %v502 = vpop.f32.mrf.mxu0
        %v503 = vadd.f32 %v333, %v502
        %v504 = vpop.f32.mrf.mxu0
        %v505 = vadd.f32 %v333, %v504
        %506 = vdwg.mxu0
        %509 = vrot.lane.b32.xlu0 %v475, 96
        %v510 = vpop.permute.xlu0 %509
        %511 = vrot.lane.b32.xlu0 %v477, 96
        %v512 = vpop.permute.xlu0 %511
        %515 = vrot.lane.b32.xlu0 %v475, 64
        %v516 = vpop.permute.xlu0 %515
        %517 = vrot.lane.b32.xlu0 %v477, 64
        %v518 = vpop.permute.xlu0 %517
        %521 = vrot.lane.b32.xlu0 %v475, 32
        %v522 = vpop.permute.xlu0 %521
        %523 = vrot.lane.b32.xlu0 %v477, 32
        %v524 = vpop.permute.xlu0 %523
        %v527 = vrot.slane %v516, 4
        %vm528 = vcmask 1047556
        %v529 = vsel %vm528, %v527, %v475
        %v530 = vrot.slane %v475, 4
        %v531 = vsel %vm528, %v516, %v530
        %v533 = vunpack.c.l.s4 1983009808
        %v534 = vunpack.c.0.s8 %v533
        %v535 = vperm.slane %v529, %v534
        %v537 = vunpack.c.l.s4 1983009808
        %v538 = vunpack.c.0.s8 %v537
        %v539 = vperm.slane %v531, %v538
        %v540 = vrot.slane %v522, 4
        %v541 = vsel %vm528, %v540, %v510
        %v542 = vrot.slane %v510, 4
        %v543 = vsel %vm528, %v522, %v542
        %v545 = vunpack.c.l.s4 1983009808
        %v546 = vunpack.c.0.s8 %v545
        %v547 = vperm.slane %v541, %v546
        %v549 = vunpack.c.l.s4 1983009808
        %v550 = vunpack.c.0.s8 %v549
        %v551 = vperm.slane %v543, %v550
        %v552 = vrot.slane %v547, 4
        %v553 = vsel %vm528, %v552, %v535
        %v554 = vrot.slane %v535, 4
        %v555 = vsel %vm528, %v547, %v554
        %v557 = vunpack.c.l.s4 1934713408
        %v558 = vunpack.c.0.s8 %v557
        %v559 = vperm.slane %v553, %v558
        %v561 = vunpack.c.l.s4 1934713408
        %v562 = vunpack.c.0.s8 %v561
        %v563 = vperm.slane %v555, %v562
        %v564 = vrot.slane %v551, 4
        %v565 = vsel %vm528, %v564, %v539
        %v566 = vrot.slane %v539, 4
        %v567 = vsel %vm528, %v551, %v566
        %v569 = vunpack.c.l.s4 1934713408
        %v570 = vunpack.c.0.s8 %v569
        %v571 = vperm.slane %v565, %v570
        %v573 = vunpack.c.l.s4 1934713408
        %v574 = vunpack.c.0.s8 %v573
        %v575 = vperm.slane %v567, %v574
        %v576 = vrot.slane %v559, 4
        %v577 = vsel %vm528, 0.0, %v576
        %v578 = vrot.slane %v563, 4
        %v579 = vsel %vm528, 0.0, %v578
        %v580 = vrot.slane %v571, 4
        %v581 = vsel %vm528, 0.0, %v580
        %v582 = vrot.slane %v575, 4
        %v583 = vsel %vm528, 0.0, %v582
        %v584 = vrot.slane %v518, 4
        %v585 = vsel %vm528, %v584, %v477
        %v586 = vrot.slane %v477, 4
        %v587 = vsel %vm528, %v518, %v586
        %v589 = vunpack.c.l.s4 1983009808
        %v590 = vunpack.c.0.s8 %v589
        %v591 = vperm.slane %v585, %v590
        %v593 = vunpack.c.l.s4 1983009808
        %v594 = vunpack.c.0.s8 %v593
        %v595 = vperm.slane %v587, %v594
        %v596 = vrot.slane %v524, 4
        %v597 = vsel %vm528, %v596, %v512
        %v598 = vrot.slane %v512, 4
        %v599 = vsel %vm528, %v524, %v598
        %v601 = vunpack.c.l.s4 1983009808
        %v602 = vunpack.c.0.s8 %v601
        %v603 = vperm.slane %v597, %v602
        %v605 = vunpack.c.l.s4 1983009808
        %v606 = vunpack.c.0.s8 %v605
        %v607 = vperm.slane %v599, %v606
        %v608 = vrot.slane %v603, 4
        %v609 = vsel %vm528, %v608, %v591
        %v610 = vrot.slane %v591, 4
        %v611 = vsel %vm528, %v603, %v610
        %v613 = vunpack.c.l.s4 1934713408
        %v614 = vunpack.c.0.s8 %v613
        %v615 = vperm.slane %v609, %v614
        %v617 = vunpack.c.l.s4 1934713408
        %v618 = vunpack.c.0.s8 %v617
        %v619 = vperm.slane %v611, %v618
        %v620 = vrot.slane %v607, 4
        %v621 = vsel %vm528, %v620, %v595
        %v622 = vrot.slane %v595, 4
        %v623 = vsel %vm528, %v607, %v622
        %v625 = vunpack.c.l.s4 1934713408
        %v626 = vunpack.c.0.s8 %v625
        %v627 = vperm.slane %v621, %v626
        %v629 = vunpack.c.l.s4 1934713408
        %v630 = vunpack.c.0.s8 %v629
        %v631 = vperm.slane %v623, %v630
        %v632 = vrot.slane %v615, 4
        %v633 = vsel %vm528, 0.0, %v632
        %v634 = vrot.slane %v619, 4
        %v635 = vsel %vm528, 0.0, %v634
        %v636 = vrot.slane %v627, 4
        %v637 = vsel %vm528, 0.0, %v636
        %v638 = vrot.slane %v631, 4
        %v639 = vsel %vm528, 0.0, %v638
        %v640 = vsel %vm528, %v578, %v559
        %v642 = vunpack.c.l.s4 1983009808
        %v643 = vunpack.c.0.s8 %v642
        %v644 = vperm.slane %v640, %v643
        %v645 = vrot.slane %v579, 4
        %v646 = vsel %vm528, %v645, %v577
        %v648 = vunpack.c.l.s4 1983009808
        %v649 = vunpack.c.0.s8 %v648
        %v650 = vperm.slane %v646, %v649
        %v651 = vsel %vm528, %v582, %v571
        %v653 = vunpack.c.l.s4 1983009808
        %v654 = vunpack.c.0.s8 %v653
        %v655 = vperm.slane %v651, %v654
        %v656 = vrot.slane %v583, 4
        %v657 = vsel %vm528, %v656, %v581
        %v659 = vunpack.c.l.s4 1983009808
        %v660 = vunpack.c.0.s8 %v659
        %v661 = vperm.slane %v657, %v660
        %v662 = vrot.slane %v650, 4
        %v663 = vsel %vm528, %v662, %v644
        %v664 = vrot.slane %v644, 4
        %v665 = vsel %vm528, %v650, %v664
        %v667 = vunpack.c.l.s4 1934713408
        %v668 = vunpack.c.0.s8 %v667
        %v669 = vperm.slane %v663, %v668
        %v671 = vunpack.c.l.s4 1934713408
        %v672 = vunpack.c.0.s8 %v671
        %v673 = vperm.slane %v665, %v672
        %v674 = vrot.slane %v661, 4
        %v675 = vsel %vm528, %v674, %v655
        %v676 = vrot.slane %v655, 4
        %v677 = vsel %vm528, %v661, %v676
        %v679 = vunpack.c.l.s4 1934713408
        %v680 = vunpack.c.0.s8 %v679
        %v681 = vperm.slane %v675, %v680
        %v683 = vunpack.c.l.s4 1934713408
        %v684 = vunpack.c.0.s8 %v683
        %v685 = vperm.slane %v677, %v684
        %v686 = vrot.slane %v681, 4
        %v687 = vsel %vm528, %v686, %v669
        %v688 = vrot.slane %v669, 4
        %v689 = vsel %vm528, %v681, %v688
        %v690 = vrot.slane %v685, 4
        %v691 = vsel %vm528, %v690, %v673
        %v692 = vrot.slane %v673, 4
        %v693 = vsel %vm528, %v685, %v692
        %v694 = vsel %vm528, %v634, %v615
        %v696 = vunpack.c.l.s4 1983009808
        %v697 = vunpack.c.0.s8 %v696
        %v698 = vperm.slane %v694, %v697
        %v699 = vrot.slane %v635, 4
        %v700 = vsel %vm528, %v699, %v633
        %v702 = vunpack.c.l.s4 1983009808
        %v703 = vunpack.c.0.s8 %v702
        %v704 = vperm.slane %v700, %v703
        %v705 = vsel %vm528, %v638, %v627
        %v707 = vunpack.c.l.s4 1983009808
        %v708 = vunpack.c.0.s8 %v707
        %v709 = vperm.slane %v705, %v708
        %v710 = vrot.slane %v639, 4
        %v711 = vsel %vm528, %v710, %v637
        %v713 = vunpack.c.l.s4 1983009808
        %v714 = vunpack.c.0.s8 %v713
        %v715 = vperm.slane %v711, %v714
        %v716 = vrot.slane %v704, 4
        %v717 = vsel %vm528, %v716, %v698
        %v718 = vrot.slane %v698, 4
        %v719 = vsel %vm528, %v704, %v718
        %v721 = vunpack.c.l.s4 1934713408
        %v722 = vunpack.c.0.s8 %v721
        %v723 = vperm.slane %v717, %v722
        %v725 = vunpack.c.l.s4 1934713408
        %v726 = vunpack.c.0.s8 %v725
        %v727 = vperm.slane %v719, %v726
        %v728 = vrot.slane %v715, 4
        %v729 = vsel %vm528, %v728, %v709
        %v730 = vrot.slane %v709, 4
        %v731 = vsel %vm528, %v715, %v730
        %v733 = vunpack.c.l.s4 1934713408
        %v734 = vunpack.c.0.s8 %v733
        %v735 = vperm.slane %v729, %v734
        %v737 = vunpack.c.l.s4 1934713408
        %v738 = vunpack.c.0.s8 %v737
        %v739 = vperm.slane %v731, %v738
        %v740 = vrot.slane %v735, 4
        %v741 = vsel %vm528, %v740, %v723
        %v742 = vrot.slane %v723, 4
        %v743 = vsel %vm528, %v735, %v742
        %v744 = vrot.slane %v739, 4
        %v745 = vsel %vm528, %v744, %v727
        %v746 = vrot.slane %v727, 4
        %v747 = vsel %vm528, %v739, %v746
        %v748 = vpack.c.bf16 %v687, %v687
        %v749 = vpack.c.bf16 %v741, %v741
        %v750 = vpack.c.bf16 %v689, %v689
        %v751 = vpack.c.bf16 %v743, %v743
        %v752 = vpack.c.bf16 %v691, %v691
        %v753 = vpack.c.bf16 %v745, %v745
        %v754 = vpack.c.bf16 %v693, %v693
        %v755 = vpack.c.bf16 %v747, %v747
        %758 = vrot.lane.b32.xlu0 %v489, 96
        %v759 = vpop.permute.xlu0 %758
        %760 = vrot.lane.b32.xlu0 %v491, 96
        %v761 = vpop.permute.xlu0 %760
        %764 = vrot.lane.b32.xlu0 %v489, 64
        %v765 = vpop.permute.xlu0 %764
        %766 = vrot.lane.b32.xlu0 %v491, 64
        %v767 = vpop.permute.xlu0 %766
        %770 = vrot.lane.b32.xlu0 %v489, 32
        %v771 = vpop.permute.xlu0 %770
        %772 = vrot.lane.b32.xlu0 %v491, 32
        %v773 = vpop.permute.xlu0 %772
        %v776 = vrot.slane %v765, 4
        %v777 = vsel %vm528, %v776, %v489
        %v778 = vrot.slane %v489, 4
        %v779 = vsel %vm528, %v765, %v778
        %v781 = vunpack.c.l.s4 1983009808
        %v782 = vunpack.c.0.s8 %v781
        %v783 = vperm.slane %v777, %v782
        %v785 = vunpack.c.l.s4 1983009808
        %v786 = vunpack.c.0.s8 %v785
        %v787 = vperm.slane %v779, %v786
        %v788 = vrot.slane %v771, 4
        %v789 = vsel %vm528, %v788, %v759
        %v790 = vrot.slane %v759, 4
        %v791 = vsel %vm528, %v771, %v790
        %v793 = vunpack.c.l.s4 1983009808
        %v794 = vunpack.c.0.s8 %v793
        %v795 = vperm.slane %v789, %v794
        %v797 = vunpack.c.l.s4 1983009808
        %v798 = vunpack.c.0.s8 %v797
        %v799 = vperm.slane %v791, %v798
        %v800 = vrot.slane %v795, 4
        %v801 = vsel %vm528, %v800, %v783
        %v802 = vrot.slane %v783, 4
        %v803 = vsel %vm528, %v795, %v802
        %v805 = vunpack.c.l.s4 1934713408
        %v806 = vunpack.c.0.s8 %v805
        %v807 = vperm.slane %v801, %v806
        %v809 = vunpack.c.l.s4 1934713408
        %v810 = vunpack.c.0.s8 %v809
        %v811 = vperm.slane %v803, %v810
        %v812 = vrot.slane %v799, 4
        %v813 = vsel %vm528, %v812, %v787
        %v814 = vrot.slane %v787, 4
        %v815 = vsel %vm528, %v799, %v814
        %v817 = vunpack.c.l.s4 1934713408
        %v818 = vunpack.c.0.s8 %v817
        %v819 = vperm.slane %v813, %v818
        %v821 = vunpack.c.l.s4 1934713408
        %v822 = vunpack.c.0.s8 %v821
        %v823 = vperm.slane %v815, %v822
        %v824 = vrot.slane %v807, 4
        %v825 = vsel %vm528, 0.0, %v824
        %v826 = vrot.slane %v811, 4
        %v827 = vsel %vm528, 0.0, %v826
        %v828 = vrot.slane %v819, 4
        %v829 = vsel %vm528, 0.0, %v828
        %v830 = vrot.slane %v823, 4
        %v831 = vsel %vm528, 0.0, %v830
        %v832 = vrot.slane %v767, 4
        %v833 = vsel %vm528, %v832, %v491
        %v834 = vrot.slane %v491, 4
        %v835 = vsel %vm528, %v767, %v834
        %v837 = vunpack.c.l.s4 1983009808
        %v838 = vunpack.c.0.s8 %v837
        %v839 = vperm.slane %v833, %v838
        %v841 = vunpack.c.l.s4 1983009808
        %v842 = vunpack.c.0.s8 %v841
        %v843 = vperm.slane %v835, %v842
        %v844 = vrot.slane %v773, 4
        %v845 = vsel %vm528, %v844, %v761
        %v846 = vrot.slane %v761, 4
        %v847 = vsel %vm528, %v773, %v846
        %v849 = vunpack.c.l.s4 1983009808
        %v850 = vunpack.c.0.s8 %v849
        %v851 = vperm.slane %v845, %v850
        %v853 = vunpack.c.l.s4 1983009808
        %v854 = vunpack.c.0.s8 %v853
        %v855 = vperm.slane %v847, %v854
        %v856 = vrot.slane %v851, 4
        %v857 = vsel %vm528, %v856, %v839
        %v858 = vrot.slane %v839, 4
        %v859 = vsel %vm528, %v851, %v858
        %v861 = vunpack.c.l.s4 1934713408
        %v862 = vunpack.c.0.s8 %v861
        %v863 = vperm.slane %v857, %v862
        %v865 = vunpack.c.l.s4 1934713408
        %v866 = vunpack.c.0.s8 %v865
        %v867 = vperm.slane %v859, %v866
        %v868 = vrot.slane %v855, 4
        %v869 = vsel %vm528, %v868, %v843
        %v870 = vrot.slane %v843, 4
        %v871 = vsel %vm528, %v855, %v870
        %v873 = vunpack.c.l.s4 1934713408
        %v874 = vunpack.c.0.s8 %v873
        %v875 = vperm.slane %v869, %v874
        %v877 = vunpack.c.l.s4 1934713408
        %v878 = vunpack.c.0.s8 %v877
        %v879 = vperm.slane %v871, %v878
        %v880 = vrot.slane %v863, 4
        %v881 = vsel %vm528, 0.0, %v880
        %v882 = vrot.slane %v867, 4
        %v883 = vsel %vm528, 0.0, %v882
        %v884 = vrot.slane %v875, 4
        %v885 = vsel %vm528, 0.0, %v884
        %v886 = vrot.slane %v879, 4
        %v887 = vsel %vm528, 0.0, %v886
        %v888 = vsel %vm528, %v826, %v807
        %v890 = vunpack.c.l.s4 1983009808
        %v891 = vunpack.c.0.s8 %v890
        %v892 = vperm.slane %v888, %v891
        %v893 = vrot.slane %v827, 4
        %v894 = vsel %vm528, %v893, %v825
        %v896 = vunpack.c.l.s4 1983009808
        %v897 = vunpack.c.0.s8 %v896
        %v898 = vperm.slane %v894, %v897
        %v899 = vsel %vm528, %v830, %v819
        %v901 = vunpack.c.l.s4 1983009808
        %v902 = vunpack.c.0.s8 %v901
        %v903 = vperm.slane %v899, %v902
        %v904 = vrot.slane %v831, 4
        %v905 = vsel %vm528, %v904, %v829
        %v907 = vunpack.c.l.s4 1983009808
        %v908 = vunpack.c.0.s8 %v907
        %v909 = vperm.slane %v905, %v908
        %v910 = vrot.slane %v898, 4
        %v911 = vsel %vm528, %v910, %v892
        %v912 = vrot.slane %v892, 4
        %v913 = vsel %vm528, %v898, %v912
        %v915 = vunpack.c.l.s4 1934713408
        %v916 = vunpack.c.0.s8 %v915
        %v917 = vperm.slane %v911, %v916
        %v919 = vunpack.c.l.s4 1934713408
        %v920 = vunpack.c.0.s8 %v919
        %v921 = vperm.slane %v913, %v920
        %v922 = vrot.slane %v909, 4
        %v923 = vsel %vm528, %v922, %v903
        %v924 = vrot.slane %v903, 4
        %v925 = vsel %vm528, %v909, %v924
        %v927 = vunpack.c.l.s4 1934713408
        %v928 = vunpack.c.0.s8 %v927
        %v929 = vperm.slane %v923, %v928
        %v931 = vunpack.c.l.s4 1934713408
        %v932 = vunpack.c.0.s8 %v931
        %v933 = vperm.slane %v925, %v932
        %v934 = vrot.slane %v929, 4
        %v935 = vsel %vm528, %v934, %v917
        %v936 = vrot.slane %v917, 4
        %v937 = vsel %vm528, %v929, %v936
        %v938 = vrot.slane %v933, 4
        %v939 = vsel %vm528, %v938, %v921
        %v940 = vrot.slane %v921, 4
        %v941 = vsel %vm528, %v933, %v940
        %v942 = vsel %vm528, %v882, %v863
        %v944 = vunpack.c.l.s4 1983009808
        %v945 = vunpack.c.0.s8 %v944
        %v946 = vperm.slane %v942, %v945
        %v947 = vrot.slane %v883, 4
        %v948 = vsel %vm528, %v947, %v881
        %v950 = vunpack.c.l.s4 1983009808
        %v951 = vunpack.c.0.s8 %v950
        %v952 = vperm.slane %v948, %v951
        %v953 = vsel %vm528, %v886, %v875
        %v955 = vunpack.c.l.s4 1983009808
        %v956 = vunpack.c.0.s8 %v955
        %v957 = vperm.slane %v953, %v956
        %v958 = vrot.slane %v887, 4
        %v959 = vsel %vm528, %v958, %v885
        %v961 = vunpack.c.l.s4 1983009808
        %v962 = vunpack.c.0.s8 %v961
        %v963 = vperm.slane %v959, %v962
        %v964 = vrot.slane %v952, 4
        %v965 = vsel %vm528, %v964, %v946
        %v966 = vrot.slane %v946, 4
        %v967 = vsel %vm528, %v952, %v966
        %v969 = vunpack.c.l.s4 1934713408
        %v970 = vunpack.c.0.s8 %v969
        %v971 = vperm.slane %v965, %v970
        %v973 = vunpack.c.l.s4 1934713408
        %v974 = vunpack.c.0.s8 %v973
        %v975 = vperm.slane %v967, %v974
        %v976 = vrot.slane %v963, 4
        %v977 = vsel %vm528, %v976, %v957
        %v978 = vrot.slane %v957, 4
        %v979 = vsel %vm528, %v963, %v978
        %v981 = vunpack.c.l.s4 1934713408
        %v982 = vunpack.c.0.s8 %v981
        %v983 = vperm.slane %v977, %v982
        %v985 = vunpack.c.l.s4 1934713408
        %v986 = vunpack.c.0.s8 %v985
        %v987 = vperm.slane %v979, %v986
        %v988 = vrot.slane %v983, 4
        %v989 = vsel %vm528, %v988, %v971
        %v990 = vrot.slane %v971, 4
        %v991 = vsel %vm528, %v983, %v990
        %v992 = vrot.slane %v987, 4
        %v993 = vsel %vm528, %v992, %v975
        %v994 = vrot.slane %v975, 4
        %v995 = vsel %vm528, %v987, %v994
        %v996 = vpack.c.bf16 %v935, %v935
        %v997 = vpack.c.bf16 %v989, %v989
        %v998 = vpack.c.bf16 %v937, %v937
        %v999 = vpack.c.bf16 %v991, %v991
        %v1000 = vpack.c.bf16 %v939, %v939
        %v1001 = vpack.c.bf16 %v993, %v993
        %v1002 = vpack.c.bf16 %v941, %v941
        %v1003 = vpack.c.bf16 %v995, %v995
        %1006 = vrot.lane.b32.xlu0 %v503, 96
        %v1007 = vpop.permute.xlu0 %1006
        %1008 = vrot.lane.b32.xlu0 %v505, 96
        %v1009 = vpop.permute.xlu0 %1008
        %1012 = vrot.lane.b32.xlu0 %v503, 64
        %v1013 = vpop.permute.xlu0 %1012
        %1014 = vrot.lane.b32.xlu0 %v505, 64
        %v1015 = vpop.permute.xlu0 %1014
        %1018 = vrot.lane.b32.xlu0 %v503, 32
        %v1019 = vpop.permute.xlu0 %1018
        %1020 = vrot.lane.b32.xlu0 %v505, 32
        %v1021 = vpop.permute.xlu0 %1020
        %v1024 = vrot.slane %v1013, 4
        %v1025 = vsel %vm528, %v1024, %v503
        %v1026 = vrot.slane %v503, 4
        %v1027 = vsel %vm528, %v1013, %v1026
        %v1029 = vunpack.c.l.s4 1983009808
        %v1030 = vunpack.c.0.s8 %v1029
        %v1031 = vperm.slane %v1025, %v1030
        %v1033 = vunpack.c.l.s4 1983009808
        %v1034 = vunpack.c.0.s8 %v1033
        %v1035 = vperm.slane %v1027, %v1034
        %v1036 = vrot.slane %v1019, 4
        %v1037 = vsel %vm528, %v1036, %v1007
        %v1038 = vrot.slane %v1007, 4
        %v1039 = vsel %vm528, %v1019, %v1038
        %v1041 = vunpack.c.l.s4 1983009808
        %v1042 = vunpack.c.0.s8 %v1041
        %v1043 = vperm.slane %v1037, %v1042
        %v1045 = vunpack.c.l.s4 1983009808
        %v1046 = vunpack.c.0.s8 %v1045
        %v1047 = vperm.slane %v1039, %v1046
        %v1048 = vrot.slane %v1043, 4
        %v1049 = vsel %vm528, %v1048, %v1031
        %v1050 = vrot.slane %v1031, 4
        %v1051 = vsel %vm528, %v1043, %v1050
        %v1053 = vunpack.c.l.s4 1934713408
        %v1054 = vunpack.c.0.s8 %v1053
        %v1055 = vperm.slane %v1049, %v1054
        %v1057 = vunpack.c.l.s4 1934713408
        %v1058 = vunpack.c.0.s8 %v1057
        %v1059 = vperm.slane %v1051, %v1058
        %v1060 = vrot.slane %v1047, 4
        %v1061 = vsel %vm528, %v1060, %v1035
        %v1062 = vrot.slane %v1035, 4
        %v1063 = vsel %vm528, %v1047, %v1062
        %v1065 = vunpack.c.l.s4 1934713408
        %v1066 = vunpack.c.0.s8 %v1065
        %v1067 = vperm.slane %v1061, %v1066
        %v1069 = vunpack.c.l.s4 1934713408
        %v1070 = vunpack.c.0.s8 %v1069
        %v1071 = vperm.slane %v1063, %v1070
        %v1072 = vrot.slane %v1055, 4
        %v1073 = vsel %vm528, 0.0, %v1072
        %v1074 = vrot.slane %v1059, 4
        %v1075 = vsel %vm528, 0.0, %v1074
        %v1076 = vrot.slane %v1067, 4
        %v1077 = vsel %vm528, 0.0, %v1076
        %v1078 = vrot.slane %v1071, 4
        %v1079 = vsel %vm528, 0.0, %v1078
        %v1080 = vrot.slane %v1015, 4
        %v1081 = vsel %vm528, %v1080, %v505
        %v1082 = vrot.slane %v505, 4
        %v1083 = vsel %vm528, %v1015, %v1082
        %v1085 = vunpack.c.l.s4 1983009808
        %v1086 = vunpack.c.0.s8 %v1085
        %v1087 = vperm.slane %v1081, %v1086
        %v1089 = vunpack.c.l.s4 1983009808
        %v1090 = vunpack.c.0.s8 %v1089
        %v1091 = vperm.slane %v1083, %v1090
        %v1092 = vrot.slane %v1021, 4
        %v1093 = vsel %vm528, %v1092, %v1009
        %v1094 = vrot.slane %v1009, 4
        %v1095 = vsel %vm528, %v1021, %v1094
        %v1097 = vunpack.c.l.s4 1983009808
        %v1098 = vunpack.c.0.s8 %v1097
        %v1099 = vperm.slane %v1093, %v1098
        %v1101 = vunpack.c.l.s4 1983009808
        %v1102 = vunpack.c.0.s8 %v1101
        %v1103 = vperm.slane %v1095, %v1102
        %v1104 = vrot.slane %v1099, 4
        %v1105 = vsel %vm528, %v1104, %v1087
        %v1106 = vrot.slane %v1087, 4
        %v1107 = vsel %vm528, %v1099, %v1106
        %v1109 = vunpack.c.l.s4 1934713408
        %v1110 = vunpack.c.0.s8 %v1109
        %v1111 = vperm.slane %v1105, %v1110
        %v1113 = vunpack.c.l.s4 1934713408
        %v1114 = vunpack.c.0.s8 %v1113
        %v1115 = vperm.slane %v1107, %v1114
        %v1116 = vrot.slane %v1103, 4
        %v1117 = vsel %vm528, %v1116, %v1091
        %v1118 = vrot.slane %v1091, 4
        %v1119 = vsel %vm528, %v1103, %v1118
        %v1121 = vunpack.c.l.s4 1934713408
        %v1122 = vunpack.c.0.s8 %v1121
        %v1123 = vperm.slane %v1117, %v1122
        %v1125 = vunpack.c.l.s4 1934713408
        %v1126 = vunpack.c.0.s8 %v1125
        %v1127 = vperm.slane %v1119, %v1126
        %v1128 = vrot.slane %v1111, 4
        %v1129 = vsel %vm528, 0.0, %v1128
        %v1130 = vrot.slane %v1115, 4
        %v1131 = vsel %vm528, 0.0, %v1130
        %v1132 = vrot.slane %v1123, 4
        %v1133 = vsel %vm528, 0.0, %v1132
        %v1134 = vrot.slane %v1127, 4
        %v1135 = vsel %vm528, 0.0, %v1134
        %v1136 = vsel %vm528, %v1074, %v1055
        %v1138 = vunpack.c.l.s4 1983009808
        %v1139 = vunpack.c.0.s8 %v1138
        %v1140 = vperm.slane %v1136, %v1139
        %v1141 = vrot.slane %v1075, 4
        %v1142 = vsel %vm528, %v1141, %v1073
        %v1144 = vunpack.c.l.s4 1983009808
        %v1145 = vunpack.c.0.s8 %v1144
        %v1146 = vperm.slane %v1142, %v1145
        %v1147 = vsel %vm528, %v1078, %v1067
        %v1149 = vunpack.c.l.s4 1983009808
        %v1150 = vunpack.c.0.s8 %v1149
        %v1151 = vperm.slane %v1147, %v1150
        %v1152 = vrot.slane %v1079, 4
        %v1153 = vsel %vm528, %v1152, %v1077
        %v1155 = vunpack.c.l.s4 1983009808
        %v1156 = vunpack.c.0.s8 %v1155
        %v1157 = vperm.slane %v1153, %v1156
        %v1158 = vrot.slane %v1146, 4
        %v1159 = vsel %vm528, %v1158, %v1140
        %v1160 = vrot.slane %v1140, 4
        %v1161 = vsel %vm528, %v1146, %v1160
        %v1163 = vunpack.c.l.s4 1934713408
        %v1164 = vunpack.c.0.s8 %v1163
        %v1165 = vperm.slane %v1159, %v1164
        %v1167 = vunpack.c.l.s4 1934713408
        %v1168 = vunpack.c.0.s8 %v1167
        %v1169 = vperm.slane %v1161, %v1168
        %v1170 = vrot.slane %v1157, 4
        %v1171 = vsel %vm528, %v1170, %v1151
        %v1172 = vrot.slane %v1151, 4
        %v1173 = vsel %vm528, %v1157, %v1172
        %v1175 = vunpack.c.l.s4 1934713408
        %v1176 = vunpack.c.0.s8 %v1175
        %v1177 = vperm.slane %v1171, %v1176
        %v1179 = vunpack.c.l.s4 1934713408
        %v1180 = vunpack.c.0.s8 %v1179
        %v1181 = vperm.slane %v1173, %v1180
        %v1182 = vrot.slane %v1177, 4
        %v1183 = vsel %vm528, %v1182, %v1165
        %v1184 = vrot.slane %v1165, 4
        %v1185 = vsel %vm528, %v1177, %v1184
        %v1186 = vrot.slane %v1181, 4
        %v1187 = vsel %vm528, %v1186, %v1169
        %v1188 = vrot.slane %v1169, 4
        %v1189 = vsel %vm528, %v1181, %v1188
        %v1190 = vsel %vm528, %v1130, %v1111
        %v1192 = vunpack.c.l.s4 1983009808
        %v1193 = vunpack.c.0.s8 %v1192
        %v1194 = vperm.slane %v1190, %v1193
        %v1195 = vrot.slane %v1131, 4
        %v1196 = vsel %vm528, %v1195, %v1129
        %v1198 = vunpack.c.l.s4 1983009808
        %v1199 = vunpack.c.0.s8 %v1198
        %v1200 = vperm.slane %v1196, %v1199
        %v1201 = vsel %vm528, %v1134, %v1123
        %v1203 = vunpack.c.l.s4 1983009808
        %v1204 = vunpack.c.0.s8 %v1203
        %v1205 = vperm.slane %v1201, %v1204
        %v1206 = vrot.slane %v1135, 4
        %v1207 = vsel %vm528, %v1206, %v1133
        %v1209 = vunpack.c.l.s4 1983009808
        %v1210 = vunpack.c.0.s8 %v1209
        %v1211 = vperm.slane %v1207, %v1210
        %v1212 = vrot.slane %v1200, 4
        %v1213 = vsel %vm528, %v1212, %v1194
        %v1214 = vrot.slane %v1194, 4
        %v1215 = vsel %vm528, %v1200, %v1214
        %v1217 = vunpack.c.l.s4 1934713408
        %v1218 = vunpack.c.0.s8 %v1217
        %v1219 = vperm.slane %v1213, %v1218
        %v1221 = vunpack.c.l.s4 1934713408
        %v1222 = vunpack.c.0.s8 %v1221
        %v1223 = vperm.slane %v1215, %v1222
        %v1224 = vrot.slane %v1211, 4
        %v1225 = vsel %vm528, %v1224, %v1205
        %v1226 = vrot.slane %v1205, 4
        %v1227 = vsel %vm528, %v1211, %v1226
        %v1229 = vunpack.c.l.s4 1934713408
        %v1230 = vunpack.c.0.s8 %v1229
        %v1231 = vperm.slane %v1225, %v1230
        %v1233 = vunpack.c.l.s4 1934713408
        %v1234 = vunpack.c.0.s8 %v1233
        %v1235 = vperm.slane %v1227, %v1234
        %v1236 = vrot.slane %v1231, 4
        %v1237 = vsel %vm528, %v1236, %v1219
        %v1238 = vrot.slane %v1219, 4
        %v1239 = vsel %vm528, %v1231, %v1238
        %v1240 = vrot.slane %v1235, 4
        %v1241 = vsel %vm528, %v1240, %v1223
        %v1242 = vrot.slane %v1223, 4
        %v1243 = vsel %vm528, %v1235, %v1242
        %v1244 = vpack.c.bf16 %v1183, %v1183
        %v1245 = vpack.c.bf16 %v1237, %v1237
        %v1246 = vpack.c.bf16 %v1185, %v1185
        %v1247 = vpack.c.bf16 %v1239, %v1239
        %v1248 = vpack.c.bf16 %v1187, %v1187
        %v1249 = vpack.c.bf16 %v1241, %v1241
        %v1250 = vpack.c.bf16 %v1189, %v1189
        %v1251 = vpack.c.bf16 %v1243, %v1243
        %v1254 = vunpack.c.l.b16 %v748
        %v1255 = vunpack.c.l.b16 %v749
        %v1256 = vpack.c.b16 %v1255, %v1254
        %v1259 = vunpack.c.l.b16 %v996
        %v1260 = vunpack.c.l.b16 %v997
        %v1261 = vpack.c.b16 %v1260, %v1259
        %vm1262 = vcmask 261120
        %v1264 = vsel %vm1262, %v1256, 0
        %v1267 = vsel %vm1262, %v1261, 0
        %1269 = vmatpush.bf16.xpose.msra.mxu0 0
        %1270 = vmatpush.bf16.xpose.msra.mxu0 0
        %1271 = vmatpush.bf16.xpose.msra.mxu0 0
        %1272 = vmatpush.bf16.xpose.msra.mxu0 0
        %1273 = vmatpush.bf16.xpose.msra.mxu0 0
        %1274 = vmatpush.bf16.xpose.msra.mxu0 0
        %1275 = vmatpush.bf16.xpose.msra.mxu0 0
        %1276 = vmatpush.bf16.xpose.msra.mxu0 %v1267
        %1277 = vmatmul.bf16.gmra.mxu0 %v1264
        %v1278 = vpop.f32.mrf.mxu0
        %v1279 = vadd.f32 0.0, %v1278
        %v1280 = vpop.f32.mrf.mxu0
        %v1281 = vadd.f32 0.0, %v1280
        %1282 = vdwg.mxu0
        %v1285 = vunpack.c.l.b16 %v750
        %v1286 = vunpack.c.l.b16 %v751
        %v1287 = vpack.c.b16 %v1286, %v1285
        %v1290 = vunpack.c.l.b16 %v998
        %v1291 = vunpack.c.l.b16 %v999
        %v1292 = vpack.c.b16 %v1291, %v1290
        %v1294 = vsel %vm1262, %v1287, 0
        %v1297 = vsel %vm1262, %v1292, 0
        %1299 = vmatpush.bf16.xpose.msra.mxu0 0
        %1300 = vmatpush.bf16.xpose.msra.mxu0 0
        %1301 = vmatpush.bf16.xpose.msra.mxu0 0
        %1302 = vmatpush.bf16.xpose.msra.mxu0 0
        %1303 = vmatpush.bf16.xpose.msra.mxu0 0
        %1304 = vmatpush.bf16.xpose.msra.mxu0 0
        %1305 = vmatpush.bf16.xpose.msra.mxu0 0
        %1306 = vmatpush.bf16.xpose.msra.mxu0 %v1297
        %1307 = vmatmul.bf16.gmra.mxu0 %v1294
        %v1308 = vpop.f32.mrf.mxu0
        %v1309 = vadd.f32 0.0, %v1308
        %v1310 = vpop.f32.mrf.mxu0
        %v1311 = vadd.f32 0.0, %v1310
        %1312 = vdwg.mxu0
        %v1315 = vunpack.c.l.b16 %v752
        %v1316 = vunpack.c.l.b16 %v753
        %v1317 = vpack.c.b16 %v1316, %v1315
        %v1320 = vunpack.c.l.b16 %v1000
        %v1321 = vunpack.c.l.b16 %v1001
        %v1322 = vpack.c.b16 %v1321, %v1320
        %v1324 = vsel %vm1262, %v1317, 0
        %v1327 = vsel %vm1262, %v1322, 0
        %1329 = vmatpush.bf16.xpose.msra.mxu0 0
        %1330 = vmatpush.bf16.xpose.msra.mxu0 0
        %1331 = vmatpush.bf16.xpose.msra.mxu0 0
        %1332 = vmatpush.bf16.xpose.msra.mxu0 0
        %1333 = vmatpush.bf16.xpose.msra.mxu0 0
        %1334 = vmatpush.bf16.xpose.msra.mxu0 0
        %1335 = vmatpush.bf16.xpose.msra.mxu0 0
        %1336 = vmatpush.bf16.xpose.msra.mxu0 %v1327
        %1337 = vmatmul.bf16.gmra.mxu0 %v1324
        %v1338 = vpop.f32.mrf.mxu0
        %v1339 = vadd.f32 0.0, %v1338
        %v1340 = vpop.f32.mrf.mxu0
        %v1341 = vadd.f32 0.0, %v1340
        %1342 = vdwg.mxu0
        %v1345 = vunpack.c.l.b16 %v754
        %v1346 = vunpack.c.l.b16 %v755
        %v1347 = vpack.c.b16 %v1346, %v1345
        %v1350 = vunpack.c.l.b16 %v1002
        %v1351 = vunpack.c.l.b16 %v1003
        %v1352 = vpack.c.b16 %v1351, %v1350
        %v1354 = vsel %vm1262, %v1347, 0
        %v1357 = vsel %vm1262, %v1352, 0
        %1359 = vmatpush.bf16.xpose.msra.mxu0 0
        %1360 = vmatpush.bf16.xpose.msra.mxu0 0
        %1361 = vmatpush.bf16.xpose.msra.mxu0 0
        %1362 = vmatpush.bf16.xpose.msra.mxu0 0
        %1363 = vmatpush.bf16.xpose.msra.mxu0 0
        %1364 = vmatpush.bf16.xpose.msra.mxu0 0
        %1365 = vmatpush.bf16.xpose.msra.mxu0 0
        %1366 = vmatpush.bf16.xpose.msra.mxu0 %v1357
        %1367 = vmatmul.bf16.gmra.mxu0 %v1354
        %v1368 = vpop.f32.mrf.mxu0
        %v1369 = vadd.f32 0.0, %v1368
        %v1370 = vpop.f32.mrf.mxu0
        %v1371 = vadd.f32 0.0, %v1370
        %1372 = vdwg.mxu0
        %vm1373 = vcmask 130048
        %v1374 = vsel %vm1373, %v1279, -inf
        %1375 = vmax.xlane.f32.xlu0 %v1374
        %v1376 = vpop.xlane.xlu0 %1375
        %v1377 = vsel %vm1373, %v1281, -inf
        %1378 = vmax.xlane.f32.xlu0 %v1377
        %v1379 = vpop.xlane.xlu0 %1378
        %v1380 = vsel %vm1373, %v1309, -inf
        %1381 = vmax.xlane.f32.xlu0 %v1380
        %v1382 = vpop.xlane.xlu0 %1381
        %v1383 = vsel %vm1373, %v1311, -inf
        %1384 = vmax.xlane.f32.xlu0 %v1383
        %v1385 = vpop.xlane.xlu0 %1384
        %v1386 = vsel %vm1373, %v1339, -inf
        %1387 = vmax.xlane.f32.xlu0 %v1386
        %v1388 = vpop.xlane.xlu0 %1387
        %v1389 = vsel %vm1373, %v1341, -inf
        %1390 = vmax.xlane.f32.xlu0 %v1389
        %v1391 = vpop.xlane.xlu0 %1390
        %v1392 = vsel %vm1373, %v1369, -inf
        %1393 = vmax.xlane.f32.xlu0 %v1392
        %v1394 = vpop.xlane.xlu0 %1393
        %v1395 = vsel %vm1373, %v1371, -inf
        %1396 = vmax.xlane.f32.xlu0 %v1395
        %v1397 = vpop.xlane.xlu0 %1396
        %v1398 = vsub.f32 %v1279, %v1376
        %v1399 = vsub.f32 %v1281, %v1379
        %v1400 = vsub.f32 %v1309, %v1382
        %v1401 = vsub.f32 %v1311, %v1385
        %v1402 = vsub.f32 %v1339, %v1388
        %v1403 = vsub.f32 %v1341, %v1391
        %v1404 = vsub.f32 %v1369, %v1394
        %v1405 = vsub.f32 %v1371, %v1397
        %v1406 = vmul.f32 %v1398, 1.442695
        %v1407 = vpow.pop %v1406
        %v1408 = vmul.f32 %v1399, 1.442695
        %v1409 = vpow.pop %v1408
        %v1410 = vmul.f32 %v1400, 1.442695
        %v1411 = vpow.pop %v1410
        %v1412 = vmul.f32 %v1401, 1.442695
        %v1413 = vpow.pop %v1412
        %v1414 = vmul.f32 %v1402, 1.442695
        %v1415 = vpow.pop %v1414
        %v1416 = vmul.f32 %v1403, 1.442695
        %v1417 = vpow.pop %v1416
        %v1418 = vmul.f32 %v1404, 1.442695
        %v1419 = vpow.pop %v1418
        %v1420 = vmul.f32 %v1405, 1.442695
        %v1421 = vpow.pop %v1420
        %v1422 = vsel %vm1373, %v1407, 0.0
        %1423 = vadd.xlane.f32.xlu0 %v1422
        %v1424 = vpop.xlane.xlu0 %1423
        %v1425 = vsel %vm1373, %v1409, 0.0
        %1426 = vadd.xlane.f32.xlu0 %v1425
        %v1427 = vpop.xlane.xlu0 %1426
        %v1428 = vsel %vm1373, %v1411, 0.0
        %1429 = vadd.xlane.f32.xlu0 %v1428
        %v1430 = vpop.xlane.xlu0 %1429
        %v1431 = vsel %vm1373, %v1413, 0.0
        %1432 = vadd.xlane.f32.xlu0 %v1431
        %v1433 = vpop.xlane.xlu0 %1432
        %v1434 = vsel %vm1373, %v1415, 0.0
        %1435 = vadd.xlane.f32.xlu0 %v1434
        %v1436 = vpop.xlane.xlu0 %1435
        %v1437 = vsel %vm1373, %v1417, 0.0
        %1438 = vadd.xlane.f32.xlu0 %v1437
        %v1439 = vpop.xlane.xlu0 %1438
        %v1440 = vsel %vm1373, %v1419, 0.0
        %1441 = vadd.xlane.f32.xlu0 %v1440
        %v1442 = vpop.xlane.xlu0 %1441
        %v1443 = vsel %vm1373, %v1421, 0.0
        %1444 = vadd.xlane.f32.xlu0 %v1443
        %v1445 = vpop.xlane.xlu0 %1444
        %v1446 = vrcp.pop %v1424
        %v1447 = vmul.f32 %v1424, %v1446
        %v1448 = vsub.f32 1.0, %v1447
        %v1449 = vmul.f32 %v1446, %v1448
        %v1450 = vadd.f32 %v1446, %v1449
        %vm1451 = vweird.f32 %v1424
        %vm1452 = vweird.f32 %v1446
        %vm1453 = vmor %vm1451, %vm1452
        %v1454 = vsel %vm1453, %v1446, %v1450
        %v1455 = vand.u32 2147483647, %v1424
        %vm1456 = vcmp.eq.f32.partialorder %v1455, 8.507059e+37
        %v1457 = vand.u32 %v1424, 2147483648
        %v1458 = vor.u32 1.1754944e-38, %v1457
        %v1459 = vsel %vm1456, %v1458, %v1454
        %v1460 = vmul.f32 %v1407, %v1459
        %v1461 = vrcp.pop %v1427
        %v1462 = vmul.f32 %v1427, %v1461
        %v1463 = vsub.f32 1.0, %v1462
        %v1464 = vmul.f32 %v1461, %v1463
        %v1465 = vadd.f32 %v1461, %v1464
        %vm1466 = vweird.f32 %v1427
        %vm1467 = vweird.f32 %v1461
        %vm1468 = vmor %vm1466, %vm1467
        %v1469 = vsel %vm1468, %v1461, %v1465
        %v1470 = vand.u32 2147483647, %v1427
        %vm1471 = vcmp.eq.f32.partialorder %v1470, 8.507059e+37
        %v1472 = vand.u32 %v1427, 2147483648
        %v1473 = vor.u32 1.1754944e-38, %v1472
        %v1474 = vsel %vm1471, %v1473, %v1469
        %v1475 = vmul.f32 %v1409, %v1474
        %v1476 = vrcp.pop %v1430
        %v1477 = vmul.f32 %v1430, %v1476
        %v1478 = vsub.f32 1.0, %v1477
        %v1479 = vmul.f32 %v1476, %v1478
        %v1480 = vadd.f32 %v1476, %v1479
        %vm1481 = vweird.f32 %v1430
        %vm1482 = vweird.f32 %v1476
        %vm1483 = vmor %vm1481, %vm1482
        %v1484 = vsel %vm1483, %v1476, %v1480
        %v1485 = vand.u32 2147483647, %v1430
        %vm1486 = vcmp.eq.f32.partialorder %v1485, 8.507059e+37
        %v1487 = vand.u32 %v1430, 2147483648
        %v1488 = vor.u32 1.1754944e-38, %v1487
        %v1489 = vsel %vm1486, %v1488, %v1484
        %v1490 = vmul.f32 %v1411, %v1489
        %v1491 = vrcp.pop %v1433
        %v1492 = vmul.f32 %v1433, %v1491
        %v1493 = vsub.f32 1.0, %v1492
        %v1494 = vmul.f32 %v1491, %v1493
        %v1495 = vadd.f32 %v1491, %v1494
        %vm1496 = vweird.f32 %v1433
        %vm1497 = vweird.f32 %v1491
        %vm1498 = vmor %vm1496, %vm1497
        %v1499 = vsel %vm1498, %v1491, %v1495
        %v1500 = vand.u32 2147483647, %v1433
        %vm1501 = vcmp.eq.f32.partialorder %v1500, 8.507059e+37
        %v1502 = vand.u32 %v1433, 2147483648
        %v1503 = vor.u32 1.1754944e-38, %v1502
        %v1504 = vsel %vm1501, %v1503, %v1499
        %v1505 = vmul.f32 %v1413, %v1504
        %v1506 = vrcp.pop %v1436
        %v1507 = vmul.f32 %v1436, %v1506
        %v1508 = vsub.f32 1.0, %v1507
        %v1509 = vmul.f32 %v1506, %v1508
        %v1510 = vadd.f32 %v1506, %v1509
        %vm1511 = vweird.f32 %v1436
        %vm1512 = vweird.f32 %v1506
        %vm1513 = vmor %vm1511, %vm1512
        %v1514 = vsel %vm1513, %v1506, %v1510
        %v1515 = vand.u32 2147483647, %v1436
        %vm1516 = vcmp.eq.f32.partialorder %v1515, 8.507059e+37
        %v1517 = vand.u32 %v1436, 2147483648
        %v1518 = vor.u32 1.1754944e-38, %v1517
        %v1519 = vsel %vm1516, %v1518, %v1514
        %v1520 = vmul.f32 %v1415, %v1519
        %v1521 = vrcp.pop %v1439
        %v1522 = vmul.f32 %v1439, %v1521
        %v1523 = vsub.f32 1.0, %v1522
        %v1524 = vmul.f32 %v1521, %v1523
        %v1525 = vadd.f32 %v1521, %v1524
        %vm1526 = vweird.f32 %v1439
        %vm1527 = vweird.f32 %v1521
        %vm1528 = vmor %vm1526, %vm1527
        %v1529 = vsel %vm1528, %v1521, %v1525
        %v1530 = vand.u32 2147483647, %v1439
        %vm1531 = vcmp.eq.f32.partialorder %v1530, 8.507059e+37
        %v1532 = vand.u32 %v1439, 2147483648
        %v1533 = vor.u32 1.1754944e-38, %v1532
        %v1534 = vsel %vm1531, %v1533, %v1529
        %v1535 = vmul.f32 %v1417, %v1534
        %v1536 = vrcp.pop %v1442
        %v1537 = vmul.f32 %v1442, %v1536
        %v1538 = vsub.f32 1.0, %v1537
        %v1539 = vmul.f32 %v1536, %v1538
        %v1540 = vadd.f32 %v1536, %v1539
        %vm1541 = vweird.f32 %v1442
        %vm1542 = vweird.f32 %v1536
        %vm1543 = vmor %vm1541, %vm1542
        %v1544 = vsel %vm1543, %v1536, %v1540
        %v1545 = vand.u32 2147483647, %v1442
        %vm1546 = vcmp.eq.f32.partialorder %v1545, 8.507059e+37
        %v1547 = vand.u32 %v1442, 2147483648
        %v1548 = vor.u32 1.1754944e-38, %v1547
        %v1549 = vsel %vm1546, %v1548, %v1544
        %v1550 = vmul.f32 %v1419, %v1549
        %v1551 = vrcp.pop %v1445
        %v1552 = vmul.f32 %v1445, %v1551
        %v1553 = vsub.f32 1.0, %v1552
        %v1554 = vmul.f32 %v1551, %v1553
        %v1555 = vadd.f32 %v1551, %v1554
        %vm1556 = vweird.f32 %v1445
        %vm1557 = vweird.f32 %v1551
        %vm1558 = vmor %vm1556, %vm1557
        %v1559 = vsel %vm1558, %v1551, %v1555
        %v1560 = vand.u32 2147483647, %v1445
        %vm1561 = vcmp.eq.f32.partialorder %v1560, 8.507059e+37
        %v1562 = vand.u32 %v1445, 2147483648
        %v1563 = vor.u32 1.1754944e-38, %v1562
        %v1564 = vsel %vm1561, %v1563, %v1559
        %v1565 = vmul.f32 %v1421, %v1564
        %v1566 = vpack.c.bf16 %v1460, %v1460
        %v1567 = vpack.c.bf16 %v1475, %v1475
        %v1568 = vpack.c.bf16 %v1490, %v1490
        %v1569 = vpack.c.bf16 %v1505, %v1505
        %v1570 = vpack.c.bf16 %v1520, %v1520
        %v1571 = vpack.c.bf16 %v1535, %v1535
        %v1572 = vpack.c.bf16 %v1550, %v1550
        %v1573 = vpack.c.bf16 %v1565, %v1565
        %v1576 = vunpack.c.l.b16 %v1566
        %v1577 = vunpack.c.l.b16 %v1567
        %v1578 = vpack.c.b16 %v1577, %v1576
        %v1581 = vunpack.c.l.b16 %v1244
        %v1582 = vunpack.c.l.b16 %v1245
        %v1583 = vpack.c.b16 %v1582, %v1581
        %v1586 = vsel %vm1373, %v1578, 0
        %1588 = vmatpush.bf16.msra.mxu0 0
        %1589 = vmatpush.bf16.msra.mxu0 0
        %1590 = vmatpush.bf16.msra.mxu0 0
        %1591 = vmatpush.bf16.msra.mxu0 0
        %1592 = vmatpush.bf16.msra.mxu0 0
        %1593 = vmatpush.bf16.msra.mxu0 0
        %1594 = vmatpush.bf16.msra.mxu0 0
        %1595 = vmatpush.bf16.msra.mxu0 %v1583
        %1596 = vmatmul.bf16.gmra.mxu0 %v1586
        %v1597 = vpop.f32.mrf.mxu0
        %v1598 = vadd.f32 0.0, %v1597
        %v1599 = vpop.f32.mrf.mxu0
        %v1600 = vadd.f32 0.0, %v1599
        %1601 = vdwg.mxu0
        %v1604 = vunpack.c.l.b16 %v1568
        %v1605 = vunpack.c.l.b16 %v1569
        %v1606 = vpack.c.b16 %v1605, %v1604
        %v1609 = vunpack.c.l.b16 %v1246
        %v1610 = vunpack.c.l.b16 %v1247
        %v1611 = vpack.c.b16 %v1610, %v1609
        %v1614 = vsel %vm1373, %v1606, 0
        %1616 = vmatpush.bf16.msra.mxu0 0
        %1617 = vmatpush.bf16.msra.mxu0 0
        %1618 = vmatpush.bf16.msra.mxu0 0
        %1619 = vmatpush.bf16.msra.mxu0 0
        %1620 = vmatpush.bf16.msra.mxu0 0
        %1621 = vmatpush.bf16.msra.mxu0 0
        %1622 = vmatpush.bf16.msra.mxu0 0
        %1623 = vmatpush.bf16.msra.mxu0 %v1611
        %1624 = vmatmul.bf16.gmra.mxu0 %v1614
        %v1625 = vpop.f32.mrf.mxu0
        %v1626 = vadd.f32 0.0, %v1625
        %v1627 = vpop.f32.mrf.mxu0
        %v1628 = vadd.f32 0.0, %v1627
        %1629 = vdwg.mxu0
        %v1632 = vunpack.c.l.b16 %v1570
        %v1633 = vunpack.c.l.b16 %v1571
        %v1634 = vpack.c.b16 %v1633, %v1632
        %v1637 = vunpack.c.l.b16 %v1248
        %v1638 = vunpack.c.l.b16 %v1249
        %v1639 = vpack.c.b16 %v1638, %v1637
        %v1642 = vsel %vm1373, %v1634, 0
        %1644 = vmatpush.bf16.msra.mxu0 0
        %1645 = vmatpush.bf16.msra.mxu0 0
        %1646 = vmatpush.bf16.msra.mxu0 0
        %1647 = vmatpush.bf16.msra.mxu0 0
        %1648 = vmatpush.bf16.msra.mxu0 0
        %1649 = vmatpush.bf16.msra.mxu0 0
        %1650 = vmatpush.bf16.msra.mxu0 0
        %1651 = vmatpush.bf16.msra.mxu0 %v1639
        %1652 = vmatmul.bf16.gmra.mxu0 %v1642
        %v1653 = vpop.f32.mrf.mxu0
        %v1654 = vadd.f32 0.0, %v1653
        %v1655 = vpop.f32.mrf.mxu0
        %v1656 = vadd.f32 0.0, %v1655
        %1657 = vdwg.mxu0
        %v1660 = vunpack.c.l.b16 %v1572
        %v1661 = vunpack.c.l.b16 %v1573
        %v1662 = vpack.c.b16 %v1661, %v1660
        %v1665 = vunpack.c.l.b16 %v1250
        %v1666 = vunpack.c.l.b16 %v1251
        %v1667 = vpack.c.b16 %v1666, %v1665
        %v1670 = vsel %vm1373, %v1662, 0
        %1672 = vmatpush.bf16.msra.mxu0 0
        %1673 = vmatpush.bf16.msra.mxu0 0
        %1674 = vmatpush.bf16.msra.mxu0 0
        %1675 = vmatpush.bf16.msra.mxu0 0
        %1676 = vmatpush.bf16.msra.mxu0 0
        %1677 = vmatpush.bf16.msra.mxu0 0
        %1678 = vmatpush.bf16.msra.mxu0 0
        %1679 = vmatpush.bf16.msra.mxu0 %v1667
        %1680 = vmatmul.bf16.gmra.mxu0 %v1670
        %v1681 = vpop.f32.mrf.mxu0
        %v1682 = vadd.f32 0.0, %v1681
        %v1683 = vpop.f32.mrf.mxu0
        %v1684 = vadd.f32 0.0, %v1683
        %1685 = vdwg.mxu0
        %v1686 = vrot.slane %v1654, 4
        %v1687 = vsel %vm528, %v1686, %v1598
        %v1688 = vrot.slane %v1598, 4
        %v1689 = vsel %vm528, %v1654, %v1688
        %v1691 = vunpack.c.l.s4 1983009808
        %v1692 = vunpack.c.0.s8 %v1691
        %v1693 = vperm.slane %v1687, %v1692
        %v1695 = vunpack.c.l.s4 1983009808
        %v1696 = vunpack.c.0.s8 %v1695
        %v1697 = vperm.slane %v1689, %v1696
        %v1698 = vrot.slane %v1682, 4
        %v1699 = vsel %vm528, %v1698, %v1626
        %v1700 = vrot.slane %v1626, 4
        %v1701 = vsel %vm528, %v1682, %v1700
        %v1703 = vunpack.c.l.s4 1983009808
        %v1704 = vunpack.c.0.s8 %v1703
        %v1705 = vperm.slane %v1699, %v1704
        %v1707 = vunpack.c.l.s4 1983009808
        %v1708 = vunpack.c.0.s8 %v1707
        %v1709 = vperm.slane %v1701, %v1708
        %v1710 = vrot.slane %v1705, 4
        %v1711 = vsel %vm528, %v1710, %v1693
        %v1712 = vrot.slane %v1693, 4
        %v1713 = vsel %vm528, %v1705, %v1712
        %v1715 = vunpack.c.l.s4 1934713408
        %v1716 = vunpack.c.0.s8 %v1715
        %v1717 = vperm.slane %v1711, %v1716
        %v1719 = vunpack.c.l.s4 1934713408
        %v1720 = vunpack.c.0.s8 %v1719
        %v1721 = vperm.slane %v1713, %v1720
        %v1722 = vrot.slane %v1709, 4
        %v1723 = vsel %vm528, %v1722, %v1697
        %v1724 = vrot.slane %v1697, 4
        %v1725 = vsel %vm528, %v1709, %v1724
        %v1727 = vunpack.c.l.s4 1934713408
        %v1728 = vunpack.c.0.s8 %v1727
        %v1729 = vperm.slane %v1723, %v1728
        %v1731 = vunpack.c.l.s4 1934713408
        %v1732 = vunpack.c.0.s8 %v1731
        %v1733 = vperm.slane %v1725, %v1732
        %v1734 = vrot.slane %v1717, 4
        %v1735 = vsel %vm528, 0.0, %v1734
        %v1736 = vrot.slane %v1721, 4
        %v1737 = vsel %vm528, 0.0, %v1736
        %v1738 = vrot.slane %v1729, 4
        %v1739 = vsel %vm528, 0.0, %v1738
        %v1740 = vrot.slane %v1733, 4
        %v1741 = vsel %vm528, 0.0, %v1740
        %v1742 = vrot.slane %v1656, 4
        %v1743 = vsel %vm528, %v1742, %v1600
        %v1744 = vrot.slane %v1600, 4
        %v1745 = vsel %vm528, %v1656, %v1744
        %v1747 = vunpack.c.l.s4 1983009808
        %v1748 = vunpack.c.0.s8 %v1747
        %v1749 = vperm.slane %v1743, %v1748
        %v1751 = vunpack.c.l.s4 1983009808
        %v1752 = vunpack.c.0.s8 %v1751
        %v1753 = vperm.slane %v1745, %v1752
        %v1754 = vrot.slane %v1684, 4
        %v1755 = vsel %vm528, %v1754, %v1628
        %v1756 = vrot.slane %v1628, 4
        %v1757 = vsel %vm528, %v1684, %v1756
        %v1759 = vunpack.c.l.s4 1983009808
        %v1760 = vunpack.c.0.s8 %v1759
        %v1761 = vperm.slane %v1755, %v1760
        %v1763 = vunpack.c.l.s4 1983009808
        %v1764 = vunpack.c.0.s8 %v1763
        %v1765 = vperm.slane %v1757, %v1764
        %v1766 = vrot.slane %v1761, 4
        %v1767 = vsel %vm528, %v1766, %v1749
        %v1768 = vrot.slane %v1749, 4
        %v1769 = vsel %vm528, %v1761, %v1768
        %v1771 = vunpack.c.l.s4 1934713408
        %v1772 = vunpack.c.0.s8 %v1771
        %v1773 = vperm.slane %v1767, %v1772
        %v1775 = vunpack.c.l.s4 1934713408
        %v1776 = vunpack.c.0.s8 %v1775
        %v1777 = vperm.slane %v1769, %v1776
        %v1778 = vrot.slane %v1765, 4
        %v1779 = vsel %vm528, %v1778, %v1753
        %v1780 = vrot.slane %v1753, 4
        %v1781 = vsel %vm528, %v1765, %v1780
        %v1783 = vunpack.c.l.s4 1934713408
        %v1784 = vunpack.c.0.s8 %v1783
        %v1785 = vperm.slane %v1779, %v1784
        %v1787 = vunpack.c.l.s4 1934713408
        %v1788 = vunpack.c.0.s8 %v1787
        %v1789 = vperm.slane %v1781, %v1788
        %v1790 = vrot.slane %v1773, 4
        %v1791 = vsel %vm528, 0.0, %v1790
        %v1792 = vrot.slane %v1777, 4
        %v1793 = vsel %vm528, 0.0, %v1792
        %v1794 = vrot.slane %v1785, 4
        %v1795 = vsel %vm528, 0.0, %v1794
        %v1796 = vrot.slane %v1789, 4
        %v1797 = vsel %vm528, 0.0, %v1796
        %v1798 = vsel %vm528, %v1736, %v1717
        %v1800 = vunpack.c.l.s4 1983009808
        %v1801 = vunpack.c.0.s8 %v1800
        %v1802 = vperm.slane %v1798, %v1801
        %v1803 = vrot.slane %v1737, 4
        %v1804 = vsel %vm528, %v1803, %v1735
        %v1806 = vunpack.c.l.s4 1983009808
        %v1807 = vunpack.c.0.s8 %v1806
        %v1808 = vperm.slane %v1804, %v1807
        %v1809 = vsel %vm528, %v1740, %v1729
        %v1811 = vunpack.c.l.s4 1983009808
        %v1812 = vunpack.c.0.s8 %v1811
        %v1813 = vperm.slane %v1809, %v1812
        %v1814 = vrot.slane %v1741, 4
        %v1815 = vsel %vm528, %v1814, %v1739
        %v1817 = vunpack.c.l.s4 1983009808
        %v1818 = vunpack.c.0.s8 %v1817
        %v1819 = vperm.slane %v1815, %v1818
        %v1820 = vrot.slane %v1808, 4
        %v1821 = vsel %vm528, %v1820, %v1802
        %v1822 = vrot.slane %v1802, 4
        %v1823 = vsel %vm528, %v1808, %v1822
        %v1825 = vunpack.c.l.s4 1934713408
        %v1826 = vunpack.c.0.s8 %v1825
        %v1827 = vperm.slane %v1821, %v1826
        %v1829 = vunpack.c.l.s4 1934713408
        %v1830 = vunpack.c.0.s8 %v1829
        %v1831 = vperm.slane %v1823, %v1830
        %v1832 = vrot.slane %v1819, 4
        %v1833 = vsel %vm528, %v1832, %v1813
        %v1834 = vrot.slane %v1813, 4
        %v1835 = vsel %vm528, %v1819, %v1834
        %v1837 = vunpack.c.l.s4 1934713408
        %v1838 = vunpack.c.0.s8 %v1837
        %v1839 = vperm.slane %v1833, %v1838
        %v1841 = vunpack.c.l.s4 1934713408
        %v1842 = vunpack.c.0.s8 %v1841
        %v1843 = vperm.slane %v1835, %v1842
        %v1844 = vrot.slane %v1839, 4
        %v1845 = vsel %vm528, %v1844, %v1827
        %v1846 = vrot.slane %v1827, 4
        %v1847 = vsel %vm528, %v1839, %v1846
        %v1848 = vrot.slane %v1843, 4
        %v1849 = vsel %vm528, %v1848, %v1831
        %v1850 = vrot.slane %v1831, 4
        %v1851 = vsel %vm528, %v1843, %v1850
        %v1852 = vsel %vm528, %v1792, %v1773
        %v1854 = vunpack.c.l.s4 1983009808
        %v1855 = vunpack.c.0.s8 %v1854
        %v1856 = vperm.slane %v1852, %v1855
        %v1857 = vrot.slane %v1793, 4
        %v1858 = vsel %vm528, %v1857, %v1791
        %v1860 = vunpack.c.l.s4 1983009808
        %v1861 = vunpack.c.0.s8 %v1860
        %v1862 = vperm.slane %v1858, %v1861
        %v1863 = vsel %vm528, %v1796, %v1785
        %v1865 = vunpack.c.l.s4 1983009808
        %v1866 = vunpack.c.0.s8 %v1865
        %v1867 = vperm.slane %v1863, %v1866
        %v1868 = vrot.slane %v1797, 4
        %v1869 = vsel %vm528, %v1868, %v1795
        %v1871 = vunpack.c.l.s4 1983009808
        %v1872 = vunpack.c.0.s8 %v1871
        %v1873 = vperm.slane %v1869, %v1872
        %v1874 = vrot.slane %v1862, 4
        %v1875 = vsel %vm528, %v1874, %v1856
        %v1876 = vrot.slane %v1856, 4
        %v1877 = vsel %vm528, %v1862, %v1876
        %v1879 = vunpack.c.l.s4 1934713408
        %v1880 = vunpack.c.0.s8 %v1879
        %v1881 = vperm.slane %v1875, %v1880
        %v1883 = vunpack.c.l.s4 1934713408
        %v1884 = vunpack.c.0.s8 %v1883
        %v1885 = vperm.slane %v1877, %v1884
        %v1886 = vrot.slane %v1873, 4
        %v1887 = vsel %vm528, %v1886, %v1867
        %v1888 = vrot.slane %v1867, 4
        %v1889 = vsel %vm528, %v1873, %v1888
        %v1891 = vunpack.c.l.s4 1934713408
        %v1892 = vunpack.c.0.s8 %v1891
        %v1893 = vperm.slane %v1887, %v1892
        %v1895 = vunpack.c.l.s4 1934713408
        %v1896 = vunpack.c.0.s8 %v1895
        %v1897 = vperm.slane %v1889, %v1896
        %v1898 = vrot.slane %v1893, 4
        %v1899 = vsel %vm528, %v1898, %v1881
        %v1900 = vrot.slane %v1881, 4
        %v1901 = vsel %vm528, %v1893, %v1900
        %v1902 = vrot.slane %v1897, 4
        %v1903 = vsel %vm528, %v1902, %v1885
        %v1904 = vrot.slane %v1885, 4
        %v1905 = vsel %vm528, %v1897, %v1904
        %1908 = vrot.lane.b32.xlu0 %v1847, 32
        %v1909 = vpop.permute.xlu0 %1908
        %1910 = vrot.lane.b32.xlu0 %v1901, 32
        %v1911 = vpop.permute.xlu0 %1910
        %1916 = vrot.lane.b32.xlu0 %v1849, 64
        %v1917 = vpop.permute.xlu0 %1916
        %1918 = vrot.lane.b32.xlu0 %v1903, 64
        %v1919 = vpop.permute.xlu0 %1918
        %1924 = vrot.lane.b32.xlu0 %v1851, 96
        %v1925 = vpop.permute.xlu0 %1924
        %1926 = vrot.lane.b32.xlu0 %v1905, 96
        %v1927 = vpop.permute.xlu0 %1926
        %v1930 = vsel %vm1262, %v1845, %v1909
        %v1931 = vsel %vm1262, %v1899, %v1911
        %vm1932 = vcmask 523264
        %v1933 = vsel %vm1932, %v1930, %v1917
        %v1934 = vsel %vm1932, %v1931, %v1919
        %vm1935 = vcmask 785408
        %v1936 = vsel %vm1935, %v1933, %v1925
        %v1937 = vsel %vm1935, %v1934, %v1927
        %v1938 = vpack.c.bf16 %v1937, %v1936
        %v1939 = vld [vmem:[#allocation8] sm:$0xf]
        %v1940 = vld [vmem:[#allocation8 + $0x4] sm:$0xf]
        %v1941 = vld [vmem:[#allocation8 + $0x8] sm:$0xf]
        %v1942 = vld [vmem:[#allocation8 + $0xc] sm:$0xf]
        %v1943 = vld [vmem:[#allocation8 + $0x10] sm:$0xf]
        %v1944 = vld [vmem:[#allocation8 + $0x14] sm:$0xf]
        %v1945 = vld [vmem:[#allocation8 + $0x18] sm:$0xf]
        %v1946 = vld [vmem:[#allocation8 + $0x1c] sm:$0xf]
        %v1947 = vld [vmem:[#allocation8 + $0x20] sm:$0xf]
        %v1948 = vld [vmem:[#allocation8 + $0x24] sm:$0xf]
        %v1949 = vld [vmem:[#allocation8 + $0x28] sm:$0xf]
        %v1950 = vld [vmem:[#allocation8 + $0x2c] sm:$0xf]
        %v1951 = vld [vmem:[#allocation8 + $0x30] sm:$0xf]
        %v1952 = vld [vmem:[#allocation8 + $0x34] sm:$0xf]
        %v1953 = vld [vmem:[#allocation8 + $0x38] sm:$0xf]
        %v1954 = vld [vmem:[#allocation8 + $0x3c] sm:$0xf]
        %v1955 = vld [vmem:[%s4] sm:$0x1]
        %v1957 = vperm.slane %v1955, 0
        %v1975 = vunpack.c.l.b16 %v1939
        %v1976 = vunpack.c.l.b16 %v1940
        %v1977 = vunpack.c.l.b16 %v1941
        %v1978 = vunpack.c.l.b16 %v1942
        %v1979 = vunpack.c.l.b16 %v1943
        %v1980 = vunpack.c.l.b16 %v1944
        %v1981 = vunpack.c.l.b16 %v1945
        %v1982 = vunpack.c.l.b16 %v1946
        %v1983 = vunpack.c.l.b16 %v1947
        %v1984 = vunpack.c.l.b16 %v1948
        %v1985 = vunpack.c.l.b16 %v1949
        %v1986 = vunpack.c.l.b16 %v1950
        %v1987 = vunpack.c.l.b16 %v1951
        %v1988 = vunpack.c.l.b16 %v1952
        %v1989 = vunpack.c.l.b16 %v1953
        %v1990 = vunpack.c.l.b16 %v1954
        %v1991 = vpack.c.b16 %v1976, %v1975
        %v1992 = vpack.c.b16 %v1978, %v1977
        %v1993 = vpack.c.b16 %v1980, %v1979
        %v1994 = vpack.c.b16 %v1982, %v1981
        %v1995 = vpack.c.b16 %v1984, %v1983
        %v1996 = vpack.c.b16 %v1986, %v1985
        %v1997 = vpack.c.b16 %v1988, %v1987
        %v1998 = vpack.c.b16 %v1990, %v1989
        %2007 = vmatpush.bf16.msra.mxu0 %v1998
        %2008 = vmatpush.bf16.msra.mxu0 %v1997
        %2009 = vmatpush.bf16.msra.mxu0 %v1996
        %2010 = vmatpush.bf16.msra.mxu0 %v1995
        %2011 = vmatpush.bf16.msra.mxu0 %v1994
        %2012 = vmatpush.bf16.msra.mxu0 %v1993
        %2013 = vmatpush.bf16.msra.mxu0 %v1992
        %2014 = vmatpush.bf16.msra.mxu0 %v1991
        %2015 = vmatmul.bf16.gmra.mxu0 %v1938
        %v2016 = vpop.f32.mrf.mxu0
        %v2017 = vadd.f32 %v1957, %v2016
        %v2018 = vpop.f32.mrf.mxu0
        %v2019 = vadd.f32 %v1957, %v2018
        %2020 = vdwg.mxu0
        %2021 = vst [vmem:[%s292] sm:$0xff] %v2017
        %2022 = vst [vmem:[%s292 + $0x8] sm:$0xff] %v2019
        %s2023 = sand.u32 %s142, 1
        %s2024 = scalar_lea.sflag [#allocation4], %s2023
        %s2025 = sand.u32 %s142, 1
        %s2026 = smul.addr %s2025, 16
        %s2027 = scalar_lea.vmem [#allocation10], %s2026
        // Predicated region
        $region57: #{tpu_custom_call.1} parent=39 // pred_check
          %p2028 = pneg %p152
        $region58: #{tpu_custom_call.1} parent=39 // pred_check_branch
          %2030 = sbr.rel (%p2028) target = $region60
        $region59: #{tpu_custom_call.1} parent=39 // pred_region
          %2032 = vsyncadd %s2024, 0
          %s2033 = smul.addr %s24, 2
          %s2034 = smul.addr %s2033, 8
          %s2035 = scalar_lea.hbm %s5, %s2034
          %s2036 = sshll.u32 %s2027, 4
          %s2037 = int_to_ptr.vmem [resolvable:$true] %s2036
          %s2038 = sshll.u32 %s2035, 4
          %s2039 = int_to_ptr.hbm [resolvable:$true] %s2038
          %2044 = dma.vmem_to_hbm [thread:$0]  %s2037, 256, %s2039, %s2024, 128, 128, 8
        $region60: #{tpu_custom_call.1} parent=39 // pred_fallthru
          _
      $region40: #{tpu_custom_call.1} parent=5 // pred_fallthru
        _
      %p2045 = scmp.le.s32.totalorder 2, %s19
      // Predicated region
      $region61: #{tpu_custom_call.1} parent=5 // pred_check
        %p2046 = pneg %p2045
      $region62: #{tpu_custom_call.1} parent=5 // pred_check_branch
        %2048 = sbr.rel (%p2046) target = $region64
      $region63: #{tpu_custom_call.1} parent=5 // pred_region
        %s2049 = ssub.s32 %s19, 2
        // Predicated region
        $region65: #{tpu_custom_call.1} parent=63 // pred_check
          %p2050 = pneg %p158
        $region66: #{tpu_custom_call.1} parent=63 // pred_check_branch
          %2052 = sbr.rel (%p2050) target = $region68
        $region67: #{tpu_custom_call.1} parent=63 // pred_region
          %s2053 = sand.u32 %s143, 1
          %s2054 = scalar_lea.sflag [#allocation4], %s2053
          %s2055 = sand.u32 %s143, 1
          %s2056 = smul.addr %s2055, 16
          %s2057 = scalar_lea.vmem [#allocation10], %s2056
          %2059 = dma.done %s2054, 256
        $region68: #{tpu_custom_call.1} parent=63 // pred_fallthru
          _
      $region64: #{tpu_custom_call.1} parent=5 // pred_fallthru
        _
    $region6: #{tpu_custom_call.1} parent=1 // loop_footer
      %s23 = sadd.s32 1, %s19
    $region7: #{tpu_custom_call.1} parent=1 // loop_footer_branch
      %18 = sbr.rel target = $region3
    $region8: #{tpu_custom_call.1} parent=1 // loop_exit
      _
    %2060 = vsyncpa [#allocation3], 1
    %s2061 = scalar_lea.sflag [#allocation3], 1
    %2062 = vsyncpa %s2061, 1
    %2063 = vsyncpa [#allocation6], 1
    %2064 = vsyncpa [#allocation9], 1
    %2065 = vsyncpa [#allocation4], 1
    %s2066 = scalar_lea.sflag [#allocation4], 1
    %2067 = vsyncpa %s2066, 1

</llo_original>
